<compile_context>
chip_gen: v6e
topology: v6e:2x2x1
jax: 0.10.0
libtpu: 0.0.40
codegen_flags: <defaults>
</compile_context>

<pallas_src>
import functools
import numpy as np

import jax
import jax.numpy as jnp
from jax.experimental import pallas as pl
from jax.experimental.pallas import tpu as pltpu

EPS = 1e-5  # RmsNorm eps (partial(RmsNorm, eps=1e-05) in the module)


# ----------------------------------------------------------------------------
# helpers
# ----------------------------------------------------------------------------
def _rms(x, g):
    # RmsNorm: x * rsqrt(mean(x^2) + eps) * weight       (f32 statistics)
    ms = jnp.mean(x * x, axis=-1, keepdims=True)
    return x * jax.lax.rsqrt(ms + EPS) * g


def _round_up(x, m):
    return ((x + m - 1) // m) * m


def _vmem_limit(block_bytes, inter_bytes=0):
    # double-buffered blocks + live intermediates, 50% headroom, clamp to a
    # budget that is legal on every chip (v7x physical VMEM = 64 MiB / TC).
    est = 2 * block_bytes + inter_bytes
    est = int(est * 1.5) + (4 << 20)
    return max(32 << 20, min(est, 64 << 20))


# ----------------------------------------------------------------------------
# Kernel 1: plain linear  y = x @ W + b      (patch_projection)
#   rows tiled over the grid ('parallel'), bf16 operands, f32 accumulate.
# ----------------------------------------------------------------------------
def linear_kernel(x_ref, w_ref, b_ref, o_ref):
    acc = jnp.dot(x_ref[...], w_ref[...], preferred_element_type=jnp.float32)
    o_ref[...] = (acc + b_ref[...]).astype(o_ref.dtype)


def linear(x, w, b, *, tm=256, out_dtype=None):
    R, Din = x.shape
    Dout = w.shape[1]
    out_dtype = out_dtype or x.dtype
    tm = min(tm, _round_up(R, 8))
    Rp = _round_up(R, tm)
    xp = x if Rp == R else jnp.pad(x, ((0, Rp - R), (0, 0)))
    b2 = b.astype(jnp.float32).reshape(1, Dout)

    blk_bytes = (tm * Din * xp.dtype.itemsize
                 + Din * Dout * w.dtype.itemsize
                 + Dout * 4
                 + tm * Dout * jnp.dtype(out_dtype).itemsize)

    out = pl.pallas_call(
        linear_kernel,
        out_shape=jax.ShapeDtypeStruct((Rp, Dout), out_dtype),
        grid=(Rp // tm,),
        in_specs=[
            pl.BlockSpec((tm, Din), lambda i: (i, 0)),
            pl.BlockSpec((Din, Dout), lambda i: (0, 0)),
            pl.BlockSpec((1, Dout), lambda i: (0, 0)),
        ],
        out_specs=pl.BlockSpec((tm, Dout), lambda i: (i, 0)),
        compiler_params=pltpu.CompilerParams(
            dimension_semantics=("parallel",),
            vmem_limit_bytes=_vmem_limit(blk_bytes)),
    )(xp, w, b2)
    return out[:R] if Rp != R else out


# ----------------------------------------------------------------------------
# Kernel 2: fused RmsNorm + linear   (final norm + output_projection)
# ----------------------------------------------------------------------------
def norm_linear_kernel(x_ref, g_ref, w_ref, b_ref, o_ref):
    x = x_ref[...].astype(jnp.float32)
    h = _rms(x, g_ref[...]).astype(w_ref.dtype)
    y = jnp.dot(h, w_ref[...], preferred_element_type=jnp.float32) + b_ref[...]
    o_ref[...] = y.astype(o_ref.dtype)


def norm_linear(x, g, w, b, *, tm=256, out_dtype=jnp.float32):
    R, Din = x.shape
    Dout = w.shape[1]
    tm = min(tm, _round_up(R, 8))
    Rp = _round_up(R, tm)
    xp = x if Rp == R else jnp.pad(x, ((0, Rp - R), (0, 0)))
    g2 = g.astype(jnp.float32).reshape(1, Din)
    b2 = b.astype(jnp.float32).reshape(1, Dout)

    blk_bytes = (tm * Din * xp.dtype.itemsize
                 + Din * 4 + Dout * 4
                 + Din * Dout * w.dtype.itemsize
                 + tm * Dout * jnp.dtype(out_dtype).itemsize)

    out = pl.pallas_call(
        norm_linear_kernel,
        out_shape=jax.ShapeDtypeStruct((Rp, Dout), out_dtype),
        grid=(Rp // tm,),
        in_specs=[
            pl.BlockSpec((tm, Din), lambda i: (i, 0)),
            pl.BlockSpec((1, Din), lambda i: (0, 0)),
            pl.BlockSpec((Din, Dout), lambda i: (0, 0)),
            pl.BlockSpec((1, Dout), lambda i: (0, 0)),
        ],
        out_specs=pl.BlockSpec((tm, Dout), lambda i: (i, 0)),
        compiler_params=pltpu.CompilerParams(
            dimension_semantics=("parallel",),
            vmem_limit_bytes=_vmem_limit(blk_bytes)),
    )(xp, g2, w, b2)
    return out[:R] if Rp != R else out


# ----------------------------------------------------------------------------
# Kernel 3: fused pre-norm transformer block (optionally fusing +pos_embed)
#   x = (x [+ pos]) ; x = x + proj(MHA(rms1(x))) ; x = x + SwiGLU(rms2(x))
# One grid step per batch element ('parallel' -> dual-TC on v7x); the whole
# (N, D) sequence lives in VMEM.  All matmul operands bf16, accumulate f32.
# ----------------------------------------------------------------------------
def block_kernel(*refs, num_heads, head_dim, add_pos):
    if add_pos:
        (x_ref, pos_ref, n1_ref, wq_ref, wk_ref, wv_ref,
         bq_ref, bk_ref, bv_ref, wo_ref, bo_ref,
         n2_ref, wg_ref, bg_ref, wu_ref, bu_ref, wd_ref, bd_ref, o_ref) = refs
    else:
        (x_ref, n1_ref, wq_ref, wk_ref, wv_ref,
         bq_ref, bk_ref, bv_ref, wo_ref, bo_ref,
         n2_ref, wg_ref, bg_ref, wu_ref, bu_ref, wd_ref, bd_ref, o_ref) = refs
        pos_ref = None

    N = x_ref.shape[1]
    D = num_heads * head_dim

    x = x_ref[0].astype(jnp.float32)                        # (N, D) residual, f32
    if add_pos:
        x = x + pos_ref[...].astype(jnp.float32)

    # ---- multi-head self-attention (batched over heads, no concat) ----
    h = _rms(x, n1_ref[...]).astype(jnp.bfloat16)
    q = jnp.dot(h, wq_ref[...], preferred_element_type=jnp.float32) + bq_ref[...]
    k = jnp.dot(h, wk_ref[...], preferred_element_type=jnp.float32) + bk_ref[...]
    v = jnp.dot(h, wv_ref[...], preferred_element_type=jnp.float32) + bv_ref[...]

    q = jnp.transpose(q.reshape(N, num_heads, head_dim), (1, 0, 2)).astype(jnp.bfloat16)
    k = jnp.transpose(k.reshape(N, num_heads, head_dim), (1, 0, 2)).astype(jnp.bfloat16)
    v = jnp.transpose(v.reshape(N, num_heads, head_dim), (1, 0, 2)).astype(jnp.bfloat16)

    scale = 1.0 / (head_dim ** 0.5)
    s = jnp.einsum('hqd,hkd->hqk', q, k,
                   preferred_element_type=jnp.float32) * scale        # (H, N, N)
    s = s - jnp.max(s, axis=-1, keepdims=True)
    p = jnp.exp(s)
    p = p * pl.reciprocal(jnp.sum(p, axis=-1, keepdims=True), approx=True)
    o = jnp.einsum('hqk,hkd->hqd', p.astype(jnp.bfloat16), v,
                   preferred_element_type=jnp.float32)                 # (H, N, hd)
    attn = jnp.transpose(o, (1, 0, 2)).reshape(N, D).astype(jnp.bfloat16)
    attn = jnp.dot(attn, wo_ref[...], preferred_element_type=jnp.float32) + bo_ref[...]
    x = x + attn                                            # drop_path = identity (eval)

    # ---- SwiGLU MLP ----
    h2 = _rms(x, n2_ref[...]).astype(jnp.bfloat16)
    gate = jnp.dot(h2, wg_ref[...], preferred_element_type=jnp.float32) + bg_ref[...]
    up = jnp.dot(h2, wu_ref[...], preferred_element_type=jnp.float32) + bu_ref[...]
    act = (gate * jax.nn.sigmoid(gate)) * up                # SiLU(gate) * up, f32
    mlp = jnp.dot(act.astype(jnp.bfloat16), wd_ref[...],
                  preferred_element_type=jnp.float32) + bd_ref[...]
    x = x + mlp

    o_ref[0] = x.astype(o_ref.dtype)


def transformer_block(x, p, *, num_heads, pos_embed=None):
    B, N, D = x.shape
    H = int(p["wd"].shape[0])                   # SwiGLU hidden dim
    head_dim = D // num_heads
    add_pos = pos_embed is not None

    bf = lambda a: a.astype(jnp.bfloat16)
    f32 = lambda a: a.astype(jnp.float32)
    full = lambda shape: pl.BlockSpec(shape, lambda b: (0, 0))

    wqkv = bf(p["wqkv"])
    bqkv = f32(p["bqkv"])

    args = [bf(x)]
    specs = [pl.BlockSpec((1, N, D), lambda b: (b, 0, 0))]
    if add_pos:
        args.append(f32(pos_embed))
        specs.append(full((N, D)))

    args += [
        f32(p["n1"]).reshape(1, D),
        wqkv[:, 0:D], wqkv[:, D:2 * D], wqkv[:, 2 * D:3 * D],
        bqkv[0:D].reshape(1, D), bqkv[D:2 * D].reshape(1, D), bqkv[2 * D:].reshape(1, D),
        bf(p["wo"]), f32(p["bo"]).reshape(1, D),
        f32(p["n2"]).reshape(1, D),
        bf(p["wg"]), f32(p["bg"]).reshape(1, H),
        bf(p["wu"]), f32(p["bu"]).reshape(1, H),
        bf(p["wd"]), f32(p["bd"]).reshape(1, D),
    ]
    specs += [
        full((1, D)),
        full((D, D)), full((D, D)), full((D, D)),
        full((1, D)), full((1, D)), full((1, D)),
        full((D, D)), full((1, D)),
        full((1, D)),
        full((D, H)), full((1, H)),
        full((D, H)), full((1, H)),
        full((H, D)), full((1, D)),
    ]

    # VMEM budget: weight/bias blocks + x/pos/out blocks (double-buffered)
    # + f32 intermediates (qkv, scores, probs, gate/up, attn).
    blk_bytes = sum(int(np.prod(a.shape)) * a.dtype.itemsize for a in args[1:])
    blk_bytes += 2 * N * D * 2 + (N * D * 4 if add_pos else 0)
    inter_bytes = 4 * (3 * N * D + 2 * num_heads * N * N + 2 * N * H + 4 * N * D)

    kern = functools.partial(block_kernel, num_heads=num_heads,
                             head_dim=head_dim, add_pos=add_pos)
    return pl.pallas_call(
        kern,
        out_shape=jax.ShapeDtypeStruct((B, N, D), jnp.bfloat16),
        grid=(B,),
        in_specs=specs,
        out_specs=pl.BlockSpec((1, N, D), lambda b: (b, 0, 0)),
        compiler_params=pltpu.CompilerParams(
            dimension_semantics=("parallel",),
            vmem_limit_bytes=_vmem_limit(blk_bytes, inter_bytes)),
    )(*args)


# ----------------------------------------------------------------------------
# Parameter construction (deterministic, synthetic weights)
# ----------------------------------------------------------------------------
def sincos_pos_embed(num_patches, dim):
    # TODO(synk): original PosEmbedding impl not provided; using deterministic
    # 1-D sin/cos table over patch index (same shape contract: (N, D)).
    pos = np.arange(num_patches, dtype=np.float64)[:, None]
    omega = np.arange(dim // 2, dtype=np.float64) / (dim / 2.0)
    omega = 1.0 / (10000.0 ** omega)
    out = pos * omega[None, :]
    emb = np.concatenate([np.sin(out), np.cos(out)], axis=1)
    return jnp.asarray(emb, dtype=jnp.float32)


def init_params(key, *, input_embed_dim, embed_dim, output_embed_dim,
                depth, num_heads, mlp_ratio, num_patches, init_std=0.02):
    D = embed_dim
    H = int(D * mlp_ratio)
    keys = jax.random.split(key, 2 + 7 * depth)
    ki = iter(keys)
    nrm = lambda k, s: (init_std * jax.random.normal(k, s)).astype(jnp.float32)

    params = {
        "token_param": jnp.zeros((1, 1, D), jnp.float32),          # nn.Parameter(zeros)
        "patch_w": nrm(next(ki), (input_embed_dim, D)),
        "patch_b": jnp.zeros((D,), jnp.float32),
        "out_w": nrm(next(ki), (D, output_embed_dim)),
        "out_b": jnp.zeros((output_embed_dim,), jnp.float32),
        "norm_g": jnp.ones((D,), jnp.float32),
        "pos_embed": sincos_pos_embed(num_patches, D),
        "blocks": [],
    }
    for _ in range(depth):
        params["blocks"].append({
            "n1": jnp.ones((D,), jnp.float32),
            "wqkv": nrm(next(ki), (D, 3 * D)),
            "bqkv": jnp.zeros((3 * D,), jnp.float32),
            "wo": nrm(next(ki), (D, D)),
            "bo": jnp.zeros((D,), jnp.float32),
            "n2": jnp.ones((D,), jnp.float32),
            "wg": nrm(next(ki), (D, H)),
            "bg": jnp.zeros((H,), jnp.float32),
            "wu": nrm(next(ki), (D, H)),
            "bu": jnp.zeros((H,), jnp.float32),
            "wd": nrm(next(ki), (H, D)),
            "bd": jnp.zeros((D,), jnp.float32),
        })
    return params


# ----------------------------------------------------------------------------
# Forward pass (mirrors MaskedPredictor.forward)
# ----------------------------------------------------------------------------
def masked_predictor_forward(params, inputs, original_patch_indices, target_masks,
                             *, num_heads):
    B, Nv, Din = inputs.shape
    Nm = target_masks.shape[1]
    D = params["token_param"].shape[-1]

    # tokens = patch_projection(inputs)            -- Pallas tiled matmul (bf16)
    tokens = linear(inputs.reshape(B * Nv, Din).astype(jnp.bfloat16),
                    params["patch_w"].astype(jnp.bfloat16),
                    params["patch_b"],
                    out_dtype=jnp.bfloat16).reshape(B, Nv, D)

    # mask_tokens = token_param.repeat(B, Nm, 1); cat; gather   -- glue
    mask_tokens = jnp.broadcast_to(params["token_param"].astype(jnp.bfloat16), (B, Nm, D))
    patches = jnp.concatenate([tokens, mask_tokens], axis=1)           # (B, N, D)
    patches = jnp.take_along_axis(patches, original_patch_indices[..., None], axis=1)

    # x = patches + pos_embedding(patches)   -- pos add fused into first block
    N = patches.shape[1]
    pos = params["pos_embed"][:N, :]

    x = patches
    if len(params["blocks"]) == 0:
        x = x + pos[None, :, :].astype(x.dtype)
    for li, blk in enumerate(params["blocks"]):
        x = transformer_block(x, blk, num_heads=num_heads,
                              pos_embed=pos if li == 0 else None)

    # x = norm(x); x = output_projection(x)        -- Pallas fused norm+matmul
    Dout = params["out_w"].shape[1]
    out = norm_linear(x.reshape(B * N, D), params["norm_g"],
                      params["out_w"].astype(jnp.bfloat16), params["out_b"],
                      out_dtype=jnp.float32)
    return out.reshape(B, N, Dout)


# ----------------------------------------------------------------------------
# Demo
# ----------------------------------------------------------------------------
if __name__ == "__main__":
    # small config consistent with the module's explicit-arg path
    B = 2
    N_VIS, N_MASK = 8, 8
    N = N_VIS + N_MASK                 # == num_patches of the pos embedding
    INPUT_EMBED_DIM = 32
    EMBED_DIM = 64
    OUTPUT_EMBED_DIM = 32
    DEPTH = 2
    NUM_HEADS = 2
    MLP_RATIO = 4.0

    root = jax.random.PRNGKey(0)
    k_param, k_in, k_perm = jax.random.split(root, 3)

    params = init_params(k_param,
                         input_embed_dim=INPUT_EMBED_DIM,
                         embed_dim=EMBED_DIM,
                         output_embed_dim=OUTPUT_EMBED_DIM,
                         depth=DEPTH,
                         num_heads=NUM_HEADS,
                         mlp_ratio=MLP_RATIO,
                         num_patches=N)

    inputs = jax.random.normal(k_in, (B, N_VIS, INPUT_EMBED_DIM), jnp.float32)
    # per-batch permutation over the N concatenated tokens
    original_patch_indices = jnp.stack(
        [jax.random.permutation(jax.random.fold_in(k_perm, b), N) for b in range(B)]
    ).astype(jnp.int32)
    target_masks = jnp.zeros((B, N_MASK), jnp.float32)   # only shape[1] is used

    fwd = jax.jit(functools.partial(masked_predictor_forward, num_heads=NUM_HEADS))
    out = fwd(params, inputs, original_patch_indices, target_masks)
    out = jax.block_until_ready(out)
    assert out.shape == (B, N, OUTPUT_EMBED_DIM)
    assert bool(jnp.all(jnp.isfinite(out)))
    print("KERNEL_OK")
</pallas_src>

<mosaic_0001>
module attributes {stable_mosaic.version = 11 : i64} {
  func.func @linear_kernel(%arg0: i32, %arg1: memref<16x32xbf16, #tpu.memory_space<vmem>>, %arg2: memref<32x64xbf16, #tpu.memory_space<vmem>>, %arg3: memref<1x64xf32, #tpu.memory_space<vmem>>, %arg4: memref<16x64xbf16, #tpu.memory_space<vmem>>) attributes {dimension_semantics = [#tpu.dimension_semantics<parallel>], iteration_bounds = array<i64: 1>, scalar_prefetch = 0 : i64, scratch_operands = 0 : i64, tpu.core_type = #tpu.core_type<tc>, window_params = [{transform_indices = @transform_0, window_bounds = array<i64: 16, 32>}, {pipeline_mode = #tpu.pipeline_mode<synchronous>, transform_indices = @transform_1, window_bounds = array<i64: 32, 64>}, {pipeline_mode = #tpu.pipeline_mode<synchronous>, transform_indices = @transform_2, window_bounds = array<i64: 1, 64>}, {transform_indices = @transform_3, window_bounds = array<i64: 16, 64>}]} {
    %c0 = arith.constant 0 : index
    %c0_0 = arith.constant 0 : index
    %0 = vector.load %arg1[%c0, %c0_0] : memref<16x32xbf16, #tpu.memory_space<vmem>>, vector<16x32xbf16>
    %c0_1 = arith.constant 0 : index
    %c0_2 = arith.constant 0 : index
    %1 = vector.load %arg2[%c0_1, %c0_2] : memref<32x64xbf16, #tpu.memory_space<vmem>>, vector<32x64xbf16>
    %cst = arith.constant dense<0.000000e+00> : vector<16x64xf32>
    %2 = tpu.matmul %0, %1, %cst {dimension_numbers = #tpu.dot_dimension_numbers<[1], [0], [0], [1], [0, 0, 1, 1], [], []>} : vector<16x32xbf16>, vector<32x64xbf16>, vector<16x64xf32> -> vector<16x64xf32>
    %c0_3 = arith.constant 0 : index
    %c0_4 = arith.constant 0 : index
    %3 = vector.load %arg3[%c0_3, %c0_4] : memref<1x64xf32, #tpu.memory_space<vmem>>, vector<1x64xf32>
    %4 = vector.broadcast %3 : vector<1x64xf32> to vector<16x64xf32>
    %5 = arith.addf %2, %4 : vector<16x64xf32>
    %6 = arith.truncf %5 : vector<16x64xf32> to vector<16x64xbf16>
    %c0_5 = arith.constant 0 : index
    %c0_6 = arith.constant 0 : index
    %7 = vector.load %arg4[%c0_5, %c0_6] : memref<16x64xbf16, #tpu.memory_space<vmem>>, vector<16x64xbf16>
    tpu.vector_store %arg4[%c0_5, %c0_6], %6 {strides = array<i32>} : memref<16x64xbf16, #tpu.memory_space<vmem>>, vector<16x64xbf16>,
    return
  }
  func.func @transform_0(%arg0: i32) -> (i32, i32) {
    %c0_i32 = arith.constant 0 : i32
    %c0_i32_0 = arith.constant 0 : i32
    return %arg0, %c0_i32 : i32, i32
  }
  func.func @transform_1(%arg0: i32) -> (i32, i32) {
    %c0_i32 = arith.constant 0 : i32
    %c0_i32_0 = arith.constant 0 : i32
    %c0_i32_1 = arith.constant 0 : i32
    return %c0_i32, %c0_i32_0 : i32, i32
  }
  func.func @transform_2(%arg0: i32) -> (i32, i32) {
    %c0_i32 = arith.constant 0 : i32
    %c0_i32_0 = arith.constant 0 : i32
    %c0_i32_1 = arith.constant 0 : i32
    return %c0_i32, %c0_i32_0 : i32, i32
  }
  func.func @transform_3(%arg0: i32) -> (i32, i32) {
    %c0_i32 = arith.constant 0 : i32
    %c0_i32_0 = arith.constant 0 : i32
    return %arg0, %c0_i32 : i32, i32
  }
}

module attributes {stable_mosaic.version = 11 : i64} {
  func.func @block_kernel(%arg0: i32, %arg1: memref<1x16x64xbf16, #tpu.memory_space<vmem>>, %arg2: memref<16x64xf32, #tpu.memory_space<vmem>>, %arg3: memref<1x64xf32, #tpu.memory_space<vmem>>, %arg4: memref<64x64xbf16, #tpu.memory_space<vmem>>, %arg5: memref<64x64xbf16, #tpu.memory_space<vmem>>, %arg6: memref<64x64xbf16, #tpu.memory_space<vmem>>, %arg7: memref<1x64xf32, #tpu.memory_space<vmem>>, %arg8: memref<1x64xf32, #tpu.memory_space<vmem>>, %arg9: memref<1x64xf32, #tpu.memory_space<vmem>>, %arg10: memref<64x64xbf16, #tpu.memory_space<vmem>>, %arg11: memref<1x64xf32, #tpu.memory_space<vmem>>, %arg12: memref<1x64xf32, #tpu.memory_space<vmem>>, %arg13: memref<64x256xbf16, #tpu.memory_space<vmem>>, %arg14: memref<1x256xf32, #tpu.memory_space<vmem>>, %arg15: memref<64x256xbf16, #tpu.memory_space<vmem>>, %arg16: memref<1x256xf32, #tpu.memory_space<vmem>>, %arg17: memref<256x64xbf16, #tpu.memory_space<vmem>>, %arg18: memref<1x64xf32, #tpu.memory_space<vmem>>, %arg19: memref<1x16x64xbf16, #tpu.memory_space<vmem>>) attributes {dimension_semantics = [#tpu.dimension_semantics<parallel>], iteration_bounds = array<i64: 2>, scalar_prefetch = 0 : i64, scratch_operands = 0 : i64, tpu.core_type = #tpu.core_type<tc>, window_params = [{transform_indices = @transform_0, window_bounds = array<i64: 1, 16, 64>}, {pipeline_mode = #tpu.pipeline_mode<synchronous>, transform_indices = @transform_1, window_bounds = array<i64: 16, 64>}, {pipeline_mode = #tpu.pipeline_mode<synchronous>, transform_indices = @transform_2, window_bounds = array<i64: 1, 64>}, {pipeline_mode = #tpu.pipeline_mode<synchronous>, transform_indices = @transform_3, window_bounds = array<i64: 64, 64>}, {pipeline_mode = #tpu.pipeline_mode<synchronous>, transform_indices = @transform_4, window_bounds = array<i64: 64, 64>}, {pipeline_mode = #tpu.pipeline_mode<synchronous>, transform_indices = @transform_5, window_bounds = array<i64: 64, 64>}, {pipeline_mode = #tpu.pipeline_mode<synchronous>, transform_indices = @transform_6, window_bounds = array<i64: 1, 64>}, {pipeline_mode = #tpu.pipeline_mode<synchronous>, transform_indices = @transform_7, window_bounds = array<i64: 1, 64>}, {pipeline_mode = #tpu.pipeline_mode<synchronous>, transform_indices = @transform_8, window_bounds = array<i64: 1, 64>}, {pipeline_mode = #tpu.pipeline_mode<synchronous>, transform_indices = @transform_9, window_bounds = array<i64: 64, 64>}, {pipeline_mode = #tpu.pipeline_mode<synchronous>, transform_indices = @transform_10, window_bounds = array<i64: 1, 64>}, {pipeline_mode = #tpu.pipeline_mode<synchronous>, transform_indices = @transform_11, window_bounds = array<i64: 1, 64>}, {pipeline_mode = #tpu.pipeline_mode<synchronous>, transform_indices = @transform_12, window_bounds = array<i64: 64, 256>}, {pipeline_mode = #tpu.pipeline_mode<synchronous>, transform_indices = @transform_13, window_bounds = array<i64: 1, 256>}, {pipeline_mode = #tpu.pipeline_mode<synchronous>, transform_indices = @transform_14, window_bounds = array<i64: 64, 256>}, {pipeline_mode = #tpu.pipeline_mode<synchronous>, transform_indices = @transform_15, window_bounds = array<i64: 1, 256>}, {pipeline_mode = #tpu.pipeline_mode<synchronous>, transform_indices = @transform_16, window_bounds = array<i64: 256, 64>}, {pipeline_mode = #tpu.pipeline_mode<synchronous>, transform_indices = @transform_17, window_bounds = array<i64: 1, 64>}, {transform_indices = @transform_18, window_bounds = array<i64: 1, 16, 64>}]} {
    %c0 = arith.constant 0 : index
    %c0_0 = arith.constant 0 : index
    %c0_1 = arith.constant 0 : index
    %0 = vector.load %arg1[%c0, %c0_0, %c0_1] : memref<1x16x64xbf16, #tpu.memory_space<vmem>>, vector<1x16x64xbf16>
    %1 = vector.shape_cast %0 : vector<1x16x64xbf16> to vector<16x64xbf16>
    %2 = arith.extf %1 : vector<16x64xbf16> to vector<16x64xf32>
    %c0_2 = arith.constant 0 : index
    %c0_3 = arith.constant 0 : index
    %3 = vector.load %arg2[%c0_2, %c0_3] : memref<16x64xf32, #tpu.memory_space<vmem>>, vector<16x64xf32>
    %4 = arith.addf %2, %3 : vector<16x64xf32>
    %c0_4 = arith.constant 0 : index
    %c0_5 = arith.constant 0 : index
    %5 = vector.load %arg3[%c0_4, %c0_5] : memref<1x64xf32, #tpu.memory_space<vmem>>, vector<1x64xf32>
    %6 = arith.mulf %4, %4 : vector<16x64xf32>
    %cst = arith.constant dense<0.000000e+00> : vector<16xf32>
    %7 = vector.multi_reduction <add>, %6, %cst [1] : vector<16x64xf32> to vector<16xf32>
    %8 = vector.shape_cast %7 : vector<16xf32> to vector<16x1xf32>
    %cst_6 = arith.constant 6.400000e+01 : f32
    %9 = vector.broadcast %cst_6 : f32 to vector<16x1xf32>
    %10 = arith.divf %8, %9 : vector<16x1xf32>
    %cst_7 = arith.constant 9.99999974E-6 : f32
    %11 = vector.broadcast %cst_7 : f32 to vector<16x1xf32>
    %12 = arith.addf %10, %11 : vector<16x1xf32>
    %13 = math.rsqrt %12 : vector<16x1xf32>
    %14 = vector.broadcast %13 : vector<16x1xf32> to vector<16x64xf32>
    %15 = arith.mulf %4, %14 : vector<16x64xf32>
    %16 = vector.broadcast %5 : vector<1x64xf32> to vector<16x64xf32>
    %17 = arith.mulf %15, %16 : vector<16x64xf32>
    %18 = arith.truncf %17 : vector<16x64xf32> to vector<16x64xbf16>
    %c0_8 = arith.constant 0 : index
    %c0_9 = arith.constant 0 : index
    %19 = vector.load %arg4[%c0_8, %c0_9] : memref<64x64xbf16, #tpu.memory_space<vmem>>, vector<64x64xbf16>
    %cst_10 = arith.constant dense<0.000000e+00> : vector<16x64xf32>
    %20 = tpu.matmul %18, %19, %cst_10 {dimension_numbers = #tpu.dot_dimension_numbers<[1], [0], [0], [1], [0, 0, 1, 1], [], []>} : vector<16x64xbf16>, vector<64x64xbf16>, vector<16x64xf32> -> vector<16x64xf32>
    %c0_11 = arith.constant 0 : index
    %c0_12 = arith.constant 0 : index
    %21 = vector.load %arg7[%c0_11, %c0_12] : memref<1x64xf32, #tpu.memory_space<vmem>>, vector<1x64xf32>
    %22 = vector.broadcast %21 : vector<1x64xf32> to vector<16x64xf32>
    %23 = arith.addf %20, %22 : vector<16x64xf32>
    %c0_13 = arith.constant 0 : index
    %c0_14 = arith.constant 0 : index
    %24 = vector.load %arg5[%c0_13, %c0_14] : memref<64x64xbf16, #tpu.memory_space<vmem>>, vector<64x64xbf16>
    %cst_15 = arith.constant dense<0.000000e+00> : vector<16x64xf32>
    %25 = tpu.matmul %18, %24, %cst_15 {dimension_numbers = #tpu.dot_dimension_numbers<[1], [0], [0], [1], [0, 0, 1, 1], [], []>} : vector<16x64xbf16>, vector<64x64xbf16>, vector<16x64xf32> -> vector<16x64xf32>
    %c0_16 = arith.constant 0 : index
    %c0_17 = arith.constant 0 : index
    %26 = vector.load %arg8[%c0_16, %c0_17] : memref<1x64xf32, #tpu.memory_space<vmem>>, vector<1x64xf32>
    %27 = vector.broadcast %26 : vector<1x64xf32> to vector<16x64xf32>
    %28 = arith.addf %25, %27 : vector<16x64xf32>
    %c0_18 = arith.constant 0 : index
    %c0_19 = arith.constant 0 : index
    %29 = vector.load %arg6[%c0_18, %c0_19] : memref<64x64xbf16, #tpu.memory_space<vmem>>, vector<64x64xbf16>
    %cst_20 = arith.constant dense<0.000000e+00> : vector<16x64xf32>
    %30 = tpu.matmul %18, %29, %cst_20 {dimension_numbers = #tpu.dot_dimension_numbers<[1], [0], [0], [1], [0, 0, 1, 1], [], []>} : vector<16x64xbf16>, vector<64x64xbf16>, vector<16x64xf32> -> vector<16x64xf32>
    %c0_21 = arith.constant 0 : index
    %c0_22 = arith.constant 0 : index
    %31 = vector.load %arg9[%c0_21, %c0_22] : memref<1x64xf32, #tpu.memory_space<vmem>>, vector<1x64xf32>
    %32 = vector.broadcast %31 : vector<1x64xf32> to vector<16x64xf32>
    %33 = arith.addf %30, %32 : vector<16x64xf32>
    %34 = vector.shape_cast %23 : vector<16x64xf32> to vector<16x2x32xf32>
    %35 = tpu.transpose %34, [1, 0, 2] : vector<16x2x32xf32> -> vector<2x16x32xf32>
    %36 = arith.truncf %35 : vector<2x16x32xf32> to vector<2x16x32xbf16>
    %37 = vector.shape_cast %28 : vector<16x64xf32> to vector<16x2x32xf32>
    %38 = tpu.transpose %37, [1, 0, 2] : vector<16x2x32xf32> -> vector<2x16x32xf32>
    %39 = arith.truncf %38 : vector<2x16x32xf32> to vector<2x16x32xbf16>
    %40 = vector.shape_cast %33 : vector<16x64xf32> to vector<16x2x32xf32>
    %41 = tpu.transpose %40, [1, 0, 2] : vector<16x2x32xf32> -> vector<2x16x32xf32>
    %42 = arith.truncf %41 : vector<2x16x32xf32> to vector<2x16x32xbf16>
    "tpu.trace_start"() <{level = 10 : i32, message = "hqd,hkd->hqk"}> : () -> ()
    %cst_23 = arith.constant dense<0.000000e+00> : vector<2x16x16xf32>
    %43 = tpu.matmul %36, %39, %cst_23 {dimension_numbers = #tpu.dot_dimension_numbers<[2], [2], [1], [1], [0, 0, 0, 1, 1, 1], [0], [0]>} : vector<2x16x32xbf16>, vector<2x16x32xbf16>, vector<2x16x16xf32> -> vector<2x16x16xf32>
    "tpu.trace_stop"() : () -> ()
    %cst_24 = arith.constant 0.176776692 : f32
    %44 = vector.broadcast %cst_24 : f32 to vector<2x16x16xf32>
    %45 = arith.mulf %43, %44 : vector<2x16x16xf32>
    %cst_25 = arith.constant dense<0xFF800000> : vector<2x16xf32>
    %46 = vector.multi_reduction <maximumf>, %45, %cst_25 [2] : vector<2x16x16xf32> to vector<2x16xf32>
    %47 = vector.shape_cast %46 : vector<2x16xf32> to vector<2x16x1xf32>
    %48 = vector.broadcast %47 : vector<2x16x1xf32> to vector<2x16x16xf32>
    %49 = arith.subf %45, %48 : vector<2x16x16xf32>
    %50 = math.exp %49 : vector<2x16x16xf32>
    %cst_26 = arith.constant dense<0.000000e+00> : vector<2x16xf32>
    %51 = vector.multi_reduction <add>, %50, %cst_26 [2] : vector<2x16x16xf32> to vector<2x16xf32>
    %52 = vector.shape_cast %51 : vector<2x16xf32> to vector<2x16x1xf32>
    %53 = tpu.reciprocal %52 {approx = true} : vector<2x16x1xf32> -> vector<2x16x1xf32>
    %54 = vector.broadcast %53 : vector<2x16x1xf32> to vector<2x16x16xf32>
    %55 = arith.mulf %50, %54 : vector<2x16x16xf32>
    %56 = arith.truncf %55 : vector<2x16x16xf32> to vector<2x16x16xbf16>
    "tpu.trace_start"() <{level = 10 : i32, message = "hqk,hkd->hqd"}> : () -> ()
    %cst_27 = arith.constant dense<0.000000e+00> : vector<2x16x32xf32>
    %57 = tpu.matmul %56, %42, %cst_27 {dimension_numbers = #tpu.dot_dimension_numbers<[2], [1], [1], [2], [0, 0, 0, 1, 1, 2], [0], [0]>} : vector<2x16x16xbf16>, vector<2x16x32xbf16>, vector<2x16x32xf32> -> vector<2x16x32xf32>
    "tpu.trace_stop"() : () -> ()
    %58 = tpu.transpose %57, [1, 0, 2] : vector<2x16x32xf32> -> vector<16x2x32xf32>
    %59 = vector.shape_cast %58 : vector<16x2x32xf32> to vector<16x64xf32>
    %60 = arith.truncf %59 : vector<16x64xf32> to vector<16x64xbf16>
    %c0_28 = arith.constant 0 : index
    %c0_29 = arith.constant 0 : index
    %61 = vector.load %arg10[%c0_28, %c0_29] : memref<64x64xbf16, #tpu.memory_space<vmem>>, vector<64x64xbf16>
    %cst_30 = arith.constant dense<0.000000e+00> : vector<16x64xf32>
    %62 = tpu.matmul %60, %61, %cst_30 {dimension_numbers = #tpu.dot_dimension_numbers<[1], [0], [0], [1], [0, 0, 1, 1], [], []>} : vector<16x64xbf16>, vector<64x64xbf16>, vector<16x64xf32> -> vector<16x64xf32>
    %c0_31 = arith.constant 0 : index
    %c0_32 = arith.constant 0 : index
    %63 = vector.load %arg11[%c0_31, %c0_32] : memref<1x64xf32, #tpu.memory_space<vmem>>, vector<1x64xf32>
    %64 = vector.broadcast %63 : vector<1x64xf32> to vector<16x64xf32>
    %65 = arith.addf %62, %64 : vector<16x64xf32>
    %66 = arith.addf %4, %65 : vector<16x64xf32>
    %c0_33 = arith.constant 0 : index
    %c0_34 = arith.constant 0 : index
    %67 = vector.load %arg12[%c0_33, %c0_34] : memref<1x64xf32, #tpu.memory_space<vmem>>, vector<1x64xf32>
    %68 = arith.mulf %66, %66 : vector<16x64xf32>
    %cst_35 = arith.constant dense<0.000000e+00> : vector<16xf32>
    %69 = vector.multi_reduction <add>, %68, %cst_35 [1] : vector<16x64xf32> to vector<16xf32>
    %70 = vector.shape_cast %69 : vector<16xf32> to vector<16x1xf32>
    %cst_36 = arith.constant 6.400000e+01 : f32
    %71 = vector.broadcast %cst_36 : f32 to vector<16x1xf32>
    %72 = arith.divf %70, %71 : vector<16x1xf32>
    %cst_37 = arith.constant 9.99999974E-6 : f32
    %73 = vector.broadcast %cst_37 : f32 to vector<16x1xf32>
    %74 = arith.addf %72, %73 : vector<16x1xf32>
    %75 = math.rsqrt %74 : vector<16x1xf32>
    %76 = vector.broadcast %75 : vector<16x1xf32> to vector<16x64xf32>
    %77 = arith.mulf %66, %76 : vector<16x64xf32>
    %78 = vector.broadcast %67 : vector<1x64xf32> to vector<16x64xf32>
    %79 = arith.mulf %77, %78 : vector<16x64xf32>
    %80 = arith.truncf %79 : vector<16x64xf32> to vector<16x64xbf16>
    %c0_38 = arith.constant 0 : index
    %c0_39 = arith.constant 0 : index
    %81 = vector.load %arg13[%c0_38, %c0_39] : memref<64x256xbf16, #tpu.memory_space<vmem>>, vector<64x256xbf16>
    %cst_40 = arith.constant dense<0.000000e+00> : vector<16x256xf32>
    %82 = tpu.matmul %80, %81, %cst_40 {dimension_numbers = #tpu.dot_dimension_numbers<[1], [0], [0], [1], [0, 0, 1, 1], [], []>} : vector<16x64xbf16>, vector<64x256xbf16>, vector<16x256xf32> -> vector<16x256xf32>
    %c0_41 = arith.constant 0 : index
    %c0_42 = arith.constant 0 : index
    %83 = vector.load %arg14[%c0_41, %c0_42] : memref<1x256xf32, #tpu.memory_space<vmem>>, vector<1x256xf32>
    %84 = vector.broadcast %83 : vector<1x256xf32> to vector<16x256xf32>
    %85 = arith.addf %82, %84 : vector<16x256xf32>
    %c0_43 = arith.constant 0 : index
    %c0_44 = arith.constant 0 : index
    %86 = vector.load %arg15[%c0_43, %c0_44] : memref<64x256xbf16, #tpu.memory_space<vmem>>, vector<64x256xbf16>
    %cst_45 = arith.constant dense<0.000000e+00> : vector<16x256xf32>
    %87 = tpu.matmul %80, %86, %cst_45 {dimension_numbers = #tpu.dot_dimension_numbers<[1], [0], [0], [1], [0, 0, 1, 1], [], []>} : vector<16x64xbf16>, vector<64x256xbf16>, vector<16x256xf32> -> vector<16x256xf32>
    %c0_46 = arith.constant 0 : index
    %c0_47 = arith.constant 0 : index
    %88 = vector.load %arg16[%c0_46, %c0_47] : memref<1x256xf32, #tpu.memory_space<vmem>>, vector<1x256xf32>
    %89 = vector.broadcast %88 : vector<1x256xf32> to vector<16x256xf32>
    %90 = arith.addf %87, %89 : vector<16x256xf32>
    %91 = arith.negf %85 : vector<16x256xf32>
    %92 = math.exp %91 : vector<16x256xf32>
    %cst_48 = arith.constant 1.000000e+00 : f32
    %93 = vector.broadcast %cst_48 : f32 to vector<16x256xf32>
    %94 = arith.addf %93, %92 : vector<16x256xf32>
    %95 = arith.divf %93, %94 : vector<16x256xf32>
    %96 = arith.mulf %85, %95 : vector<16x256xf32>
    %97 = arith.mulf %96, %90 : vector<16x256xf32>
    %98 = arith.truncf %97 : vector<16x256xf32> to vector<16x256xbf16>
    %c0_49 = arith.constant 0 : index
    %c0_50 = arith.constant 0 : index
    %99 = vector.load %arg17[%c0_49, %c0_50] : memref<256x64xbf16, #tpu.memory_space<vmem>>, vector<256x64xbf16>
    %cst_51 = arith.constant dense<0.000000e+00> : vector<16x64xf32>
    %100 = tpu.matmul %98, %99, %cst_51 {dimension_numbers = #tpu.dot_dimension_numbers<[1], [0], [0], [1], [0, 0, 1, 1], [], []>} : vector<16x256xbf16>, vector<256x64xbf16>, vector<16x64xf32> -> vector<16x64xf32>
    %c0_52 = arith.constant 0 : index
    %c0_53 = arith.constant 0 : index
    %101 = vector.load %arg18[%c0_52, %c0_53] : memref<1x64xf32, #tpu.memory_space<vmem>>, vector<1x64xf32>
    %102 = vector.broadcast %101 : vector<1x64xf32> to vector<16x64xf32>
    %103 = arith.addf %100, %102 : vector<16x64xf32>
    %104 = arith.addf %66, %103 : vector<16x64xf32>
    %105 = arith.truncf %104 : vector<16x64xf32> to vector<16x64xbf16>
    %c0_54 = arith.constant 0 : index
    %c0_55 = arith.constant 0 : index
    %c0_56 = arith.constant 0 : index
    %106 = vector.load %arg19[%c0_54, %c0_55, %c0_56] : memref<1x16x64xbf16, #tpu.memory_space<vmem>>, vector<1x16x64xbf16>
    %107 = vector.shape_cast %106 : vector<1x16x64xbf16> to vector<16x64xbf16>
    %108 = vector.shape_cast %105 : vector<16x64xbf16> to vector<1x16x64xbf16>
    tpu.vector_store %arg19[%c0_54, %c0_55, %c0_56], %108 {strides = array<i32>} : memref<1x16x64xbf16, #tpu.memory_space<vmem>>, vector<1x16x64xbf16>,
    return
  }
  func.func @transform_0(%arg0: i32) -> (i32, i32, i32) {
    %c0_i32 = arith.constant 0 : i32
    %c0_i32_0 = arith.constant 0 : i32
    %c0_i32_1 = arith.constant 0 : i32
    return %arg0, %c0_i32, %c0_i32_0 : i32, i32, i32
  }
  func.func @transform_1(%arg0: i32) -> (i32, i32) {
    %c0_i32 = arith.constant 0 : i32
    %c0_i32_0 = arith.constant 0 : i32
    %c0_i32_1 = arith.constant 0 : i32
    return %c0_i32, %c0_i32_0 : i32, i32
  }
  func.func @transform_2(%arg0: i32) -> (i32, i32) {
    %c0_i32 = arith.constant 0 : i32
    %c0_i32_0 = arith.constant 0 : i32
    %c0_i32_1 = arith.constant 0 : i32
    return %c0_i32, %c0_i32_0 : i32, i32
  }
  func.func @transform_3(%arg0: i32) -> (i32, i32) {
    %c0_i32 = arith.constant 0 : i32
    %c0_i32_0 = arith.constant 0 : i32
    %c0_i32_1 = arith.constant 0 : i32
    return %c0_i32, %c0_i32_0 : i32, i32
  }
  func.func @transform_4(%arg0: i32) -> (i32, i32) {
    %c0_i32 = arith.constant 0 : i32
    %c0_i32_0 = arith.constant 0 : i32
    %c0_i32_1 = arith.constant 0 : i32
    return %c0_i32, %c0_i32_0 : i32, i32
  }
  func.func @transform_5(%arg0: i32) -> (i32, i32) {
    %c0_i32 = arith.constant 0 : i32
    %c0_i32_0 = arith.constant 0 : i32
    %c0_i32_1 = arith.constant 0 : i32
    return %c0_i32, %c0_i32_0 : i32, i32
  }
  func.func @transform_6(%arg0: i32) -> (i32, i32) {
    %c0_i32 = arith.constant 0 : i32
    %c0_i32_0 = arith.constant 0 : i32
    %c0_i32_1 = arith.constant 0 : i32
    return %c0_i32, %c0_i32_0 : i32, i32
  }
  func.func @transform_7(%arg0: i32) -> (i32, i32) {
    %c0_i32 = arith.constant 0 : i32
    %c0_i32_0 = arith.constant 0 : i32
    %c0_i32_1 = arith.constant 0 : i32
    return %c0_i32, %c0_i32_0 : i32, i32
  }
  func.func @transform_8(%arg0: i32) -> (i32, i32) {
    %c0_i32 = arith.constant 0 : i32
    %c0_i32_0 = arith.constant 0 : i32
    %c0_i32_1 = arith.constant 0 : i32
    return %c0_i32, %c0_i32_0 : i32, i32
  }
  func.func @transform_9(%arg0: i32) -> (i32, i32) {
    %c0_i32 = arith.constant 0 : i32
    %c0_i32_0 = arith.constant 0 : i32
    %c0_i32_1 = arith.constant 0 : i32
    return %c0_i32, %c0_i32_0 : i32, i32
  }
  func.func @transform_10(%arg0: i32) -> (i32, i32) {
    %c0_i32 = arith.constant 0 : i32
    %c0_i32_0 = arith.constant 0 : i32
    %c0_i32_1 = arith.constant 0 : i32
    return %c0_i32, %c0_i32_0 : i32, i32
  }
  func.func @transform_11(%arg0: i32) -> (i32, i32) {
    %c0_i32 = arith.constant 0 : i32
    %c0_i32_0 = arith.constant 0 : i32
    %c0_i32_1 = arith.constant 0 : i32
    return %c0_i32, %c0_i32_0 : i32, i32
  }
  func.func @transform_12(%arg0: i32) -> (i32, i32) {
    %c0_i32 = arith.constant 0 : i32
    %c0_i32_0 = arith.constant 0 : i32
    %c0_i32_1 = arith.constant 0 : i32
    return %c0_i32, %c0_i32_0 : i32, i32
  }
  func.func @transform_13(%arg0: i32) -> (i32, i32) {
    %c0_i32 = arith.constant 0 : i32
    %c0_i32_0 = arith.constant 0 : i32
    %c0_i32_1 = arith.constant 0 : i32
    return %c0_i32, %c0_i32_0 : i32, i32
  }
  func.func @transform_14(%arg0: i32) -> (i32, i32) {
    %c0_i32 = arith.constant 0 : i32
    %c0_i32_0 = arith.constant 0 : i32
    %c0_i32_1 = arith.constant 0 : i32
    return %c0_i32, %c0_i32_0 : i32, i32
  }
  func.func @transform_15(%arg0: i32) -> (i32, i32) {
    %c0_i32 = arith.constant 0 : i32
    %c0_i32_0 = arith.constant 0 : i32
    %c0_i32_1 = arith.constant 0 : i32
    return %c0_i32, %c0_i32_0 : i32, i32
  }
  func.func @transform_16(%arg0: i32) -> (i32, i32) {
    %c0_i32 = arith.constant 0 : i32
    %c0_i32_0 = arith.constant 0 : i32
    %c0_i32_1 = arith.constant 0 : i32
    return %c0_i32, %c0_i32_0 : i32, i32
  }
  func.func @transform_17(%arg0: i32) -> (i32, i32) {
    %c0_i32 = arith.constant 0 : i32
    %c0_i32_0 = arith.constant 0 : i32
    %c0_i32_1 = arith.constant 0 : i32
    return %c0_i32, %c0_i32_0 : i32, i32
  }
  func.func @transform_18(%arg0: i32) -> (i32, i32, i32) {
    %c0_i32 = arith.constant 0 : i32
    %c0_i32_0 = arith.constant 0 : i32
    %c0_i32_1 = arith.constant 0 : i32
    return %arg0, %c0_i32, %c0_i32_0 : i32, i32, i32
  }
}

module attributes {stable_mosaic.version = 11 : i64} {
  func.func @block_kernel(%arg0: i32, %arg1: memref<1x16x64xbf16, #tpu.memory_space<vmem>>, %arg2: memref<1x64xf32, #tpu.memory_space<vmem>>, %arg3: memref<64x64xbf16, #tpu.memory_space<vmem>>, %arg4: memref<64x64xbf16, #tpu.memory_space<vmem>>, %arg5: memref<64x64xbf16, #tpu.memory_space<vmem>>, %arg6: memref<1x64xf32, #tpu.memory_space<vmem>>, %arg7: memref<1x64xf32, #tpu.memory_space<vmem>>, %arg8: memref<1x64xf32, #tpu.memory_space<vmem>>, %arg9: memref<64x64xbf16, #tpu.memory_space<vmem>>, %arg10: memref<1x64xf32, #tpu.memory_space<vmem>>, %arg11: memref<1x64xf32, #tpu.memory_space<vmem>>, %arg12: memref<64x256xbf16, #tpu.memory_space<vmem>>, %arg13: memref<1x256xf32, #tpu.memory_space<vmem>>, %arg14: memref<64x256xbf16, #tpu.memory_space<vmem>>, %arg15: memref<1x256xf32, #tpu.memory_space<vmem>>, %arg16: memref<256x64xbf16, #tpu.memory_space<vmem>>, %arg17: memref<1x64xf32, #tpu.memory_space<vmem>>, %arg18: memref<1x16x64xbf16, #tpu.memory_space<vmem>>) attributes {dimension_semantics = [#tpu.dimension_semantics<parallel>], iteration_bounds = array<i64: 2>, scalar_prefetch = 0 : i64, scratch_operands = 0 : i64, tpu.core_type = #tpu.core_type<tc>, window_params = [{transform_indices = @transform_0, window_bounds = array<i64: 1, 16, 64>}, {pipeline_mode = #tpu.pipeline_mode<synchronous>, transform_indices = @transform_1, window_bounds = array<i64: 1, 64>}, {pipeline_mode = #tpu.pipeline_mode<synchronous>, transform_indices = @transform_2, window_bounds = array<i64: 64, 64>}, {pipeline_mode = #tpu.pipeline_mode<synchronous>, transform_indices = @transform_3, window_bounds = array<i64: 64, 64>}, {pipeline_mode = #tpu.pipeline_mode<synchronous>, transform_indices = @transform_4, window_bounds = array<i64: 64, 64>}, {pipeline_mode = #tpu.pipeline_mode<synchronous>, transform_indices = @transform_5, window_bounds = array<i64: 1, 64>}, {pipeline_mode = #tpu.pipeline_mode<synchronous>, transform_indices = @transform_6, window_bounds = array<i64: 1, 64>}, {pipeline_mode = #tpu.pipeline_mode<synchronous>, transform_indices = @transform_7, window_bounds = array<i64: 1, 64>}, {pipeline_mode = #tpu.pipeline_mode<synchronous>, transform_indices = @transform_8, window_bounds = array<i64: 64, 64>}, {pipeline_mode = #tpu.pipeline_mode<synchronous>, transform_indices = @transform_9, window_bounds = array<i64: 1, 64>}, {pipeline_mode = #tpu.pipeline_mode<synchronous>, transform_indices = @transform_10, window_bounds = array<i64: 1, 64>}, {pipeline_mode = #tpu.pipeline_mode<synchronous>, transform_indices = @transform_11, window_bounds = array<i64: 64, 256>}, {pipeline_mode = #tpu.pipeline_mode<synchronous>, transform_indices = @transform_12, window_bounds = array<i64: 1, 256>}, {pipeline_mode = #tpu.pipeline_mode<synchronous>, transform_indices = @transform_13, window_bounds = array<i64: 64, 256>}, {pipeline_mode = #tpu.pipeline_mode<synchronous>, transform_indices = @transform_14, window_bounds = array<i64: 1, 256>}, {pipeline_mode = #tpu.pipeline_mode<synchronous>, transform_indices = @transform_15, window_bounds = array<i64: 256, 64>}, {pipeline_mode = #tpu.pipeline_mode<synchronous>, transform_indices = @transform_16, window_bounds = array<i64: 1, 64>}, {transform_indices = @transform_17, window_bounds = array<i64: 1, 16, 64>}]} {
    %c0 = arith.constant 0 : index
    %c0_0 = arith.constant 0 : index
    %c0_1 = arith.constant 0 : index
    %0 = vector.load %arg1[%c0, %c0_0, %c0_1] : memref<1x16x64xbf16, #tpu.memory_space<vmem>>, vector<1x16x64xbf16>
    %1 = vector.shape_cast %0 : vector<1x16x64xbf16> to vector<16x64xbf16>
    %2 = arith.extf %1 : vector<16x64xbf16> to vector<16x64xf32>
    %c0_2 = arith.constant 0 : index
    %c0_3 = arith.constant 0 : index
    %3 = vector.load %arg2[%c0_2, %c0_3] : memref<1x64xf32, #tpu.memory_space<vmem>>, vector<1x64xf32>
    %4 = arith.mulf %2, %2 : vector<16x64xf32>
    %cst = arith.constant dense<0.000000e+00> : vector<16xf32>
    %5 = vector.multi_reduction <add>, %4, %cst [1] : vector<16x64xf32> to vector<16xf32>
    %6 = vector.shape_cast %5 : vector<16xf32> to vector<16x1xf32>
    %cst_4 = arith.constant 6.400000e+01 : f32
    %7 = vector.broadcast %cst_4 : f32 to vector<16x1xf32>
    %8 = arith.divf %6, %7 : vector<16x1xf32>
    %cst_5 = arith.constant 9.99999974E-6 : f32
    %9 = vector.broadcast %cst_5 : f32 to vector<16x1xf32>
    %10 = arith.addf %8, %9 : vector<16x1xf32>
    %11 = math.rsqrt %10 : vector<16x1xf32>
    %12 = vector.broadcast %11 : vector<16x1xf32> to vector<16x64xf32>
    %13 = arith.mulf %2, %12 : vector<16x64xf32>
    %14 = vector.broadcast %3 : vector<1x64xf32> to vector<16x64xf32>
    %15 = arith.mulf %13, %14 : vector<16x64xf32>
    %16 = arith.truncf %15 : vector<16x64xf32> to vector<16x64xbf16>
    %c0_6 = arith.constant 0 : index
    %c0_7 = arith.constant 0 : index
    %17 = vector.load %arg3[%c0_6, %c0_7] : memref<64x64xbf16, #tpu.memory_space<vmem>>, vector<64x64xbf16>
    %cst_8 = arith.constant dense<0.000000e+00> : vector<16x64xf32>
    %18 = tpu.matmul %16, %17, %cst_8 {dimension_numbers = #tpu.dot_dimension_numbers<[1], [0], [0], [1], [0, 0, 1, 1], [], []>} : vector<16x64xbf16>, vector<64x64xbf16>, vector<16x64xf32> -> vector<16x64xf32>
    %c0_9 = arith.constant 0 : index
    %c0_10 = arith.constant 0 : index
    %19 = vector.load %arg6[%c0_9, %c0_10] : memref<1x64xf32, #tpu.memory_space<vmem>>, vector<1x64xf32>
    %20 = vector.broadcast %19 : vector<1x64xf32> to vector<16x64xf32>
    %21 = arith.addf %18, %20 : vector<16x64xf32>
    %c0_11 = arith.constant 0 : index
    %c0_12 = arith.constant 0 : index
    %22 = vector.load %arg4[%c0_11, %c0_12] : memref<64x64xbf16, #tpu.memory_space<vmem>>, vector<64x64xbf16>
    %cst_13 = arith.constant dense<0.000000e+00> : vector<16x64xf32>
    %23 = tpu.matmul %16, %22, %cst_13 {dimension_numbers = #tpu.dot_dimension_numbers<[1], [0], [0], [1], [0, 0, 1, 1], [], []>} : vector<16x64xbf16>, vector<64x64xbf16>, vector<16x64xf32> -> vector<16x64xf32>
    %c0_14 = arith.constant 0 : index
    %c0_15 = arith.constant 0 : index
    %24 = vector.load %arg7[%c0_14, %c0_15] : memref<1x64xf32, #tpu.memory_space<vmem>>, vector<1x64xf32>
    %25 = vector.broadcast %24 : vector<1x64xf32> to vector<16x64xf32>
    %26 = arith.addf %23, %25 : vector<16x64xf32>
    %c0_16 = arith.constant 0 : index
    %c0_17 = arith.constant 0 : index
    %27 = vector.load %arg5[%c0_16, %c0_17] : memref<64x64xbf16, #tpu.memory_space<vmem>>, vector<64x64xbf16>
    %cst_18 = arith.constant dense<0.000000e+00> : vector<16x64xf32>
    %28 = tpu.matmul %16, %27, %cst_18 {dimension_numbers = #tpu.dot_dimension_numbers<[1], [0], [0], [1], [0, 0, 1, 1], [], []>} : vector<16x64xbf16>, vector<64x64xbf16>, vector<16x64xf32> -> vector<16x64xf32>
    %c0_19 = arith.constant 0 : index
    %c0_20 = arith.constant 0 : index
    %29 = vector.load %arg8[%c0_19, %c0_20] : memref<1x64xf32, #tpu.memory_space<vmem>>, vector<1x64xf32>
    %30 = vector.broadcast %29 : vector<1x64xf32> to vector<16x64xf32>
    %31 = arith.addf %28, %30 : vector<16x64xf32>
    %32 = vector.shape_cast %21 : vector<16x64xf32> to vector<16x2x32xf32>
    %33 = tpu.transpose %32, [1, 0, 2] : vector<16x2x32xf32> -> vector<2x16x32xf32>
    %34 = arith.truncf %33 : vector<2x16x32xf32> to vector<2x16x32xbf16>
    %35 = vector.shape_cast %26 : vector<16x64xf32> to vector<16x2x32xf32>
    %36 = tpu.transpose %35, [1, 0, 2] : vector<16x2x32xf32> -> vector<2x16x32xf32>
    %37 = arith.truncf %36 : vector<2x16x32xf32> to vector<2x16x32xbf16>
    %38 = vector.shape_cast %31 : vector<16x64xf32> to vector<16x2x32xf32>
    %39 = tpu.transpose %38, [1, 0, 2] : vector<16x2x32xf32> -> vector<2x16x32xf32>
    %40 = arith.truncf %39 : vector<2x16x32xf32> to vector<2x16x32xbf16>
    "tpu.trace_start"() <{level = 10 : i32, message = "hqd,hkd->hqk"}> : () -> ()
    %cst_21 = arith.constant dense<0.000000e+00> : vector<2x16x16xf32>
    %41 = tpu.matmul %34, %37, %cst_21 {dimension_numbers = #tpu.dot_dimension_numbers<[2], [2], [1], [1], [0, 0, 0, 1, 1, 1], [0], [0]>} : vector<2x16x32xbf16>, vector<2x16x32xbf16>, vector<2x16x16xf32> -> vector<2x16x16xf32>
    "tpu.trace_stop"() : () -> ()
    %cst_22 = arith.constant 0.176776692 : f32
    %42 = vector.broadcast %cst_22 : f32 to vector<2x16x16xf32>
    %43 = arith.mulf %41, %42 : vector<2x16x16xf32>
    %cst_23 = arith.constant dense<0xFF800000> : vector<2x16xf32>
    %44 = vector.multi_reduction <maximumf>, %43, %cst_23 [2] : vector<2x16x16xf32> to vector<2x16xf32>
    %45 = vector.shape_cast %44 : vector<2x16xf32> to vector<2x16x1xf32>
    %46 = vector.broadcast %45 : vector<2x16x1xf32> to vector<2x16x16xf32>
    %47 = arith.subf %43, %46 : vector<2x16x16xf32>
    %48 = math.exp %47 : vector<2x16x16xf32>
    %cst_24 = arith.constant dense<0.000000e+00> : vector<2x16xf32>
    %49 = vector.multi_reduction <add>, %48, %cst_24 [2] : vector<2x16x16xf32> to vector<2x16xf32>
    %50 = vector.shape_cast %49 : vector<2x16xf32> to vector<2x16x1xf32>
    %51 = tpu.reciprocal %50 {approx = true} : vector<2x16x1xf32> -> vector<2x16x1xf32>
    %52 = vector.broadcast %51 : vector<2x16x1xf32> to vector<2x16x16xf32>
    %53 = arith.mulf %48, %52 : vector<2x16x16xf32>
    %54 = arith.truncf %53 : vector<2x16x16xf32> to vector<2x16x16xbf16>
    "tpu.trace_start"() <{level = 10 : i32, message = "hqk,hkd->hqd"}> : () -> ()
    %cst_25 = arith.constant dense<0.000000e+00> : vector<2x16x32xf32>
    %55 = tpu.matmul %54, %40, %cst_25 {dimension_numbers = #tpu.dot_dimension_numbers<[2], [1], [1], [2], [0, 0, 0, 1, 1, 2], [0], [0]>} : vector<2x16x16xbf16>, vector<2x16x32xbf16>, vector<2x16x32xf32> -> vector<2x16x32xf32>
    "tpu.trace_stop"() : () -> ()
    %56 = tpu.transpose %55, [1, 0, 2] : vector<2x16x32xf32> -> vector<16x2x32xf32>
    %57 = vector.shape_cast %56 : vector<16x2x32xf32> to vector<16x64xf32>
    %58 = arith.truncf %57 : vector<16x64xf32> to vector<16x64xbf16>
    %c0_26 = arith.constant 0 : index
    %c0_27 = arith.constant 0 : index
    %59 = vector.load %arg9[%c0_26, %c0_27] : memref<64x64xbf16, #tpu.memory_space<vmem>>, vector<64x64xbf16>
    %cst_28 = arith.constant dense<0.000000e+00> : vector<16x64xf32>
    %60 = tpu.matmul %58, %59, %cst_28 {dimension_numbers = #tpu.dot_dimension_numbers<[1], [0], [0], [1], [0, 0, 1, 1], [], []>} : vector<16x64xbf16>, vector<64x64xbf16>, vector<16x64xf32> -> vector<16x64xf32>
    %c0_29 = arith.constant 0 : index
    %c0_30 = arith.constant 0 : index
    %61 = vector.load %arg10[%c0_29, %c0_30] : memref<1x64xf32, #tpu.memory_space<vmem>>, vector<1x64xf32>
    %62 = vector.broadcast %61 : vector<1x64xf32> to vector<16x64xf32>
    %63 = arith.addf %60, %62 : vector<16x64xf32>
    %64 = arith.addf %2, %63 : vector<16x64xf32>
    %c0_31 = arith.constant 0 : index
    %c0_32 = arith.constant 0 : index
    %65 = vector.load %arg11[%c0_31, %c0_32] : memref<1x64xf32, #tpu.memory_space<vmem>>, vector<1x64xf32>
    %66 = arith.mulf %64, %64 : vector<16x64xf32>
    %cst_33 = arith.constant dense<0.000000e+00> : vector<16xf32>
    %67 = vector.multi_reduction <add>, %66, %cst_33 [1] : vector<16x64xf32> to vector<16xf32>
    %68 = vector.shape_cast %67 : vector<16xf32> to vector<16x1xf32>
    %cst_34 = arith.constant 6.400000e+01 : f32
    %69 = vector.broadcast %cst_34 : f32 to vector<16x1xf32>
    %70 = arith.divf %68, %69 : vector<16x1xf32>
    %cst_35 = arith.constant 9.99999974E-6 : f32
    %71 = vector.broadcast %cst_35 : f32 to vector<16x1xf32>
    %72 = arith.addf %70, %71 : vector<16x1xf32>
    %73 = math.rsqrt %72 : vector<16x1xf32>
    %74 = vector.broadcast %73 : vector<16x1xf32> to vector<16x64xf32>
    %75 = arith.mulf %64, %74 : vector<16x64xf32>
    %76 = vector.broadcast %65 : vector<1x64xf32> to vector<16x64xf32>
    %77 = arith.mulf %75, %76 : vector<16x64xf32>
    %78 = arith.truncf %77 : vector<16x64xf32> to vector<16x64xbf16>
    %c0_36 = arith.constant 0 : index
    %c0_37 = arith.constant 0 : index
    %79 = vector.load %arg12[%c0_36, %c0_37] : memref<64x256xbf16, #tpu.memory_space<vmem>>, vector<64x256xbf16>
    %cst_38 = arith.constant dense<0.000000e+00> : vector<16x256xf32>
    %80 = tpu.matmul %78, %79, %cst_38 {dimension_numbers = #tpu.dot_dimension_numbers<[1], [0], [0], [1], [0, 0, 1, 1], [], []>} : vector<16x64xbf16>, vector<64x256xbf16>, vector<16x256xf32> -> vector<16x256xf32>
    %c0_39 = arith.constant 0 : index
    %c0_40 = arith.constant 0 : index
    %81 = vector.load %arg13[%c0_39, %c0_40] : memref<1x256xf32, #tpu.memory_space<vmem>>, vector<1x256xf32>
    %82 = vector.broadcast %81 : vector<1x256xf32> to vector<16x256xf32>
    %83 = arith.addf %80, %82 : vector<16x256xf32>
    %c0_41 = arith.constant 0 : index
    %c0_42 = arith.constant 0 : index
    %84 = vector.load %arg14[%c0_41, %c0_42] : memref<64x256xbf16, #tpu.memory_space<vmem>>, vector<64x256xbf16>
    %cst_43 = arith.constant dense<0.000000e+00> : vector<16x256xf32>
    %85 = tpu.matmul %78, %84, %cst_43 {dimension_numbers = #tpu.dot_dimension_numbers<[1], [0], [0], [1], [0, 0, 1, 1], [], []>} : vector<16x64xbf16>, vector<64x256xbf16>, vector<16x256xf32> -> vector<16x256xf32>
    %c0_44 = arith.constant 0 : index
    %c0_45 = arith.constant 0 : index
    %86 = vector.load %arg15[%c0_44, %c0_45] : memref<1x256xf32, #tpu.memory_space<vmem>>, vector<1x256xf32>
    %87 = vector.broadcast %86 : vector<1x256xf32> to vector<16x256xf32>
    %88 = arith.addf %85, %87 : vector<16x256xf32>
    %89 = arith.negf %83 : vector<16x256xf32>
    %90 = math.exp %89 : vector<16x256xf32>
    %cst_46 = arith.constant 1.000000e+00 : f32
    %91 = vector.broadcast %cst_46 : f32 to vector<16x256xf32>
    %92 = arith.addf %91, %90 : vector<16x256xf32>
    %93 = arith.divf %91, %92 : vector<16x256xf32>
    %94 = arith.mulf %83, %93 : vector<16x256xf32>
    %95 = arith.mulf %94, %88 : vector<16x256xf32>
    %96 = arith.truncf %95 : vector<16x256xf32> to vector<16x256xbf16>
    %c0_47 = arith.constant 0 : index
    %c0_48 = arith.constant 0 : index
    %97 = vector.load %arg16[%c0_47, %c0_48] : memref<256x64xbf16, #tpu.memory_space<vmem>>, vector<256x64xbf16>
    %cst_49 = arith.constant dense<0.000000e+00> : vector<16x64xf32>
    %98 = tpu.matmul %96, %97, %cst_49 {dimension_numbers = #tpu.dot_dimension_numbers<[1], [0], [0], [1], [0, 0, 1, 1], [], []>} : vector<16x256xbf16>, vector<256x64xbf16>, vector<16x64xf32> -> vector<16x64xf32>
    %c0_50 = arith.constant 0 : index
    %c0_51 = arith.constant 0 : index
    %99 = vector.load %arg17[%c0_50, %c0_51] : memref<1x64xf32, #tpu.memory_space<vmem>>, vector<1x64xf32>
    %100 = vector.broadcast %99 : vector<1x64xf32> to vector<16x64xf32>
    %101 = arith.addf %98, %100 : vector<16x64xf32>
    %102 = arith.addf %64, %101 : vector<16x64xf32>
    %103 = arith.truncf %102 : vector<16x64xf32> to vector<16x64xbf16>
    %c0_52 = arith.constant 0 : index
    %c0_53 = arith.constant 0 : index
    %c0_54 = arith.constant 0 : index
    %104 = vector.load %arg18[%c0_52, %c0_53, %c0_54] : memref<1x16x64xbf16, #tpu.memory_space<vmem>>, vector<1x16x64xbf16>
    %105 = vector.shape_cast %104 : vector<1x16x64xbf16> to vector<16x64xbf16>
    %106 = vector.shape_cast %103 : vector<16x64xbf16> to vector<1x16x64xbf16>
    tpu.vector_store %arg18[%c0_52, %c0_53, %c0_54], %106 {strides = array<i32>} : memref<1x16x64xbf16, #tpu.memory_space<vmem>>, vector<1x16x64xbf16>,
    return
  }
  func.func @transform_0(%arg0: i32) -> (i32, i32, i32) {
    %c0_i32 = arith.constant 0 : i32
    %c0_i32_0 = arith.constant 0 : i32
    %c0_i32_1 = arith.constant 0 : i32
    return %arg0, %c0_i32, %c0_i32_0 : i32, i32, i32
  }
  func.func @transform_1(%arg0: i32) -> (i32, i32) {
    %c0_i32 = arith.constant 0 : i32
    %c0_i32_0 = arith.constant 0 : i32
    %c0_i32_1 = arith.constant 0 : i32
    return %c0_i32, %c0_i32_0 : i32, i32
  }
  func.func @transform_2(%arg0: i32) -> (i32, i32) {
    %c0_i32 = arith.constant 0 : i32
    %c0_i32_0 = arith.constant 0 : i32
    %c0_i32_1 = arith.constant 0 : i32
    return %c0_i32, %c0_i32_0 : i32, i32
  }
  func.func @transform_3(%arg0: i32) -> (i32, i32) {
    %c0_i32 = arith.constant 0 : i32
    %c0_i32_0 = arith.constant 0 : i32
    %c0_i32_1 = arith.constant 0 : i32
    return %c0_i32, %c0_i32_0 : i32, i32
  }
  func.func @transform_4(%arg0: i32) -> (i32, i32) {
    %c0_i32 = arith.constant 0 : i32
    %c0_i32_0 = arith.constant 0 : i32
    %c0_i32_1 = arith.constant 0 : i32
    return %c0_i32, %c0_i32_0 : i32, i32
  }
  func.func @transform_5(%arg0: i32) -> (i32, i32) {
    %c0_i32 = arith.constant 0 : i32
    %c0_i32_0 = arith.constant 0 : i32
    %c0_i32_1 = arith.constant 0 : i32
    return %c0_i32, %c0_i32_0 : i32, i32
  }
  func.func @transform_6(%arg0: i32) -> (i32, i32) {
    %c0_i32 = arith.constant 0 : i32
    %c0_i32_0 = arith.constant 0 : i32
    %c0_i32_1 = arith.constant 0 : i32
    return %c0_i32, %c0_i32_0 : i32, i32
  }
  func.func @transform_7(%arg0: i32) -> (i32, i32) {
    %c0_i32 = arith.constant 0 : i32
    %c0_i32_0 = arith.constant 0 : i32
    %c0_i32_1 = arith.constant 0 : i32
    return %c0_i32, %c0_i32_0 : i32, i32
  }
  func.func @transform_8(%arg0: i32) -> (i32, i32) {
    %c0_i32 = arith.constant 0 : i32
    %c0_i32_0 = arith.constant 0 : i32
    %c0_i32_1 = arith.constant 0 : i32
    return %c0_i32, %c0_i32_0 : i32, i32
  }
  func.func @transform_9(%arg0: i32) -> (i32, i32) {
    %c0_i32 = arith.constant 0 : i32
    %c0_i32_0 = arith.constant 0 : i32
    %c0_i32_1 = arith.constant 0 : i32
    return %c0_i32, %c0_i32_0 : i32, i32
  }
  func.func @transform_10(%arg0: i32) -> (i32, i32) {
    %c0_i32 = arith.constant 0 : i32
    %c0_i32_0 = arith.constant 0 : i32
    %c0_i32_1 = arith.constant 0 : i32
    return %c0_i32, %c0_i32_0 : i32, i32
  }
  func.func @transform_11(%arg0: i32) -> (i32, i32) {
    %c0_i32 = arith.constant 0 : i32
    %c0_i32_0 = arith.constant 0 : i32
    %c0_i32_1 = arith.constant 0 : i32
    return %c0_i32, %c0_i32_0 : i32, i32
  }
  func.func @transform_12(%arg0: i32) -> (i32, i32) {
    %c0_i32 = arith.constant 0 : i32
    %c0_i32_0 = arith.constant 0 : i32
    %c0_i32_1 = arith.constant 0 : i32
    return %c0_i32, %c0_i32_0 : i32, i32
  }
  func.func @transform_13(%arg0: i32) -> (i32, i32) {
    %c0_i32 = arith.constant 0 : i32
    %c0_i32_0 = arith.constant 0 : i32
    %c0_i32_1 = arith.constant 0 : i32
    return %c0_i32, %c0_i32_0 : i32, i32
  }
  func.func @transform_14(%arg0: i32) -> (i32, i32) {
    %c0_i32 = arith.constant 0 : i32
    %c0_i32_0 = arith.constant 0 : i32
    %c0_i32_1 = arith.constant 0 : i32
    return %c0_i32, %c0_i32_0 : i32, i32
  }
  func.func @transform_15(%arg0: i32) -> (i32, i32) {
    %c0_i32 = arith.constant 0 : i32
    %c0_i32_0 = arith.constant 0 : i32
    %c0_i32_1 = arith.constant 0 : i32
    return %c0_i32, %c0_i32_0 : i32, i32
  }
  func.func @transform_16(%arg0: i32) -> (i32, i32) {
    %c0_i32 = arith.constant 0 : i32
    %c0_i32_0 = arith.constant 0 : i32
    %c0_i32_1 = arith.constant 0 : i32
    return %c0_i32, %c0_i32_0 : i32, i32
  }
  func.func @transform_17(%arg0: i32) -> (i32, i32, i32) {
    %c0_i32 = arith.constant 0 : i32
    %c0_i32_0 = arith.constant 0 : i32
    %c0_i32_1 = arith.constant 0 : i32
    return %arg0, %c0_i32, %c0_i32_0 : i32, i32, i32
  }
}

module attributes {stable_mosaic.version = 11 : i64} {
  func.func @norm_linear_kernel(%arg0: i32, %arg1: memref<32x64xbf16, #tpu.memory_space<vmem>>, %arg2: memref<1x64xf32, #tpu.memory_space<vmem>>, %arg3: memref<64x32xbf16, #tpu.memory_space<vmem>>, %arg4: memref<1x32xf32, #tpu.memory_space<vmem>>, %arg5: memref<32x32xf32, #tpu.memory_space<vmem>>) attributes {dimension_semantics = [#tpu.dimension_semantics<parallel>], iteration_bounds = array<i64: 1>, scalar_prefetch = 0 : i64, scratch_operands = 0 : i64, tpu.core_type = #tpu.core_type<tc>, window_params = [{transform_indices = @transform_0, window_bounds = array<i64: 32, 64>}, {pipeline_mode = #tpu.pipeline_mode<synchronous>, transform_indices = @transform_1, window_bounds = array<i64: 1, 64>}, {pipeline_mode = #tpu.pipeline_mode<synchronous>, transform_indices = @transform_2, window_bounds = array<i64: 64, 32>}, {pipeline_mode = #tpu.pipeline_mode<synchronous>, transform_indices = @transform_3, window_bounds = array<i64: 1, 32>}, {transform_indices = @transform_4, window_bounds = array<i64: 32, 32>}]} {
    %c0 = arith.constant 0 : index
    %c0_0 = arith.constant 0 : index
    %0 = vector.load %arg1[%c0, %c0_0] : memref<32x64xbf16, #tpu.memory_space<vmem>>, vector<32x64xbf16>
    %1 = arith.extf %0 : vector<32x64xbf16> to vector<32x64xf32>
    %c0_1 = arith.constant 0 : index
    %c0_2 = arith.constant 0 : index
    %2 = vector.load %arg2[%c0_1, %c0_2] : memref<1x64xf32, #tpu.memory_space<vmem>>, vector<1x64xf32>
    %3 = arith.mulf %1, %1 : vector<32x64xf32>
    %cst = arith.constant dense<0.000000e+00> : vector<32xf32>
    %4 = vector.multi_reduction <add>, %3, %cst [1] : vector<32x64xf32> to vector<32xf32>
    %5 = vector.shape_cast %4 : vector<32xf32> to vector<32x1xf32>
    %cst_3 = arith.constant 6.400000e+01 : f32
    %6 = vector.broadcast %cst_3 : f32 to vector<32x1xf32>
    %7 = arith.divf %5, %6 : vector<32x1xf32>
    %cst_4 = arith.constant 9.99999974E-6 : f32
    %8 = vector.broadcast %cst_4 : f32 to vector<32x1xf32>
    %9 = arith.addf %7, %8 : vector<32x1xf32>
    %10 = math.rsqrt %9 : vector<32x1xf32>
    %11 = vector.broadcast %10 : vector<32x1xf32> to vector<32x64xf32>
    %12 = arith.mulf %1, %11 : vector<32x64xf32>
    %13 = vector.broadcast %2 : vector<1x64xf32> to vector<32x64xf32>
    %14 = arith.mulf %12, %13 : vector<32x64xf32>
    %15 = arith.truncf %14 : vector<32x64xf32> to vector<32x64xbf16>
    %c0_5 = arith.constant 0 : index
    %c0_6 = arith.constant 0 : index
    %16 = vector.load %arg3[%c0_5, %c0_6] : memref<64x32xbf16, #tpu.memory_space<vmem>>, vector<64x32xbf16>
    %cst_7 = arith.constant dense<0.000000e+00> : vector<32x32xf32>
    %17 = tpu.matmul %15, %16, %cst_7 {dimension_numbers = #tpu.dot_dimension_numbers<[1], [0], [0], [1], [0, 0, 1, 1], [], []>} : vector<32x64xbf16>, vector<64x32xbf16>, vector<32x32xf32> -> vector<32x32xf32>
    %c0_8 = arith.constant 0 : index
    %c0_9 = arith.constant 0 : index
    %18 = vector.load %arg4[%c0_8, %c0_9] : memref<1x32xf32, #tpu.memory_space<vmem>>, vector<1x32xf32>
    %19 = vector.broadcast %18 : vector<1x32xf32> to vector<32x32xf32>
    %20 = arith.addf %17, %19 : vector<32x32xf32>
    %c0_10 = arith.constant 0 : index
    %c0_11 = arith.constant 0 : index
    %21 = vector.load %arg5[%c0_10, %c0_11] : memref<32x32xf32, #tpu.memory_space<vmem>>, vector<32x32xf32>
    tpu.vector_store %arg5[%c0_10, %c0_11], %20 {strides = array<i32>} : memref<32x32xf32, #tpu.memory_space<vmem>>, vector<32x32xf32>,
    return
  }
  func.func @transform_0(%arg0: i32) -> (i32, i32) {
    %c0_i32 = arith.constant 0 : i32
    %c0_i32_0 = arith.constant 0 : i32
    return %arg0, %c0_i32 : i32, i32
  }
  func.func @transform_1(%arg0: i32) -> (i32, i32) {
    %c0_i32 = arith.constant 0 : i32
    %c0_i32_0 = arith.constant 0 : i32
    %c0_i32_1 = arith.constant 0 : i32
    return %c0_i32, %c0_i32_0 : i32, i32
  }
  func.func @transform_2(%arg0: i32) -> (i32, i32) {
    %c0_i32 = arith.constant 0 : i32
    %c0_i32_0 = arith.constant 0 : i32
    %c0_i32_1 = arith.constant 0 : i32
    return %c0_i32, %c0_i32_0 : i32, i32
  }
  func.func @transform_3(%arg0: i32) -> (i32, i32) {
    %c0_i32 = arith.constant 0 : i32
    %c0_i32_0 = arith.constant 0 : i32
    %c0_i32_1 = arith.constant 0 : i32
    return %c0_i32, %c0_i32_0 : i32, i32
  }
  func.func @transform_4(%arg0: i32) -> (i32, i32) {
    %c0_i32 = arith.constant 0 : i32
    %c0_i32_0 = arith.constant 0 : i32
    return %arg0, %c0_i32 : i32, i32
  }
}

</mosaic_0001>

<llo_original>
// kernel: masked_predictor_forward.4
$region0: #{masked_predictor_forward.4}
  #allocation0 [shape = 'u32[]', space=smem, size = 0x4, offset = 0x4, fixed_abs, tag = 'smem constant byte address 0x4 - core index']
  #allocation1 [shape = 'u32[144,128]{1,0:T(1,128)}', space=vmem, size = 0x12000, scoped, tag = 'internal scratch']
  %s0 = inlined_call_operand.vmem [shape: bf16[16,32], index: 0, kind: input, shape index: {}]
  %s1 = inlined_call_operand.vmem [shape: bf16[32,64], index: 1, kind: input, shape index: {}]
  %s2 = inlined_call_operand.vmem [shape: f32[1,64], index: 2, kind: input, shape index: {}]
  %s3 = inlined_call_operand.vmem [shape: bf16[16,64], index: 3, kind: output, shape index: {}]
  %s4 = sld [smem:[#allocation0]]
  $region22: #{masked_predictor_forward.4} parent=0
    _
  %s6 = ssub.s32 1, %s4
  %s7 = scalar_select 0, %s6, %s4
  // Predicated region
  $region2: #{masked_predictor_forward.4} parent=0 // pred_check
    _
  $region3: #{masked_predictor_forward.4} parent=0 // pred_check_branch
    %9 = sbr.rel (0) target = $region5
  $region4: #{masked_predictor_forward.4} parent=0 // pred_region
    _
  $region5: #{masked_predictor_forward.4} parent=0 // pred_fallthru
    _
  // Predicated region
  $region6: #{masked_predictor_forward.4} parent=0 // pred_check
    _
  $region7: #{masked_predictor_forward.4} parent=0 // pred_check_branch
    %11 = sbr.rel (0) target = $region9
  $region8: #{masked_predictor_forward.4} parent=0 // pred_region
    _
  $region9: #{masked_predictor_forward.4} parent=0 // pred_fallthru
    _
  // Predicated region
  $region10: #{masked_predictor_forward.4} parent=0 // pred_check
    _
  $region11: #{masked_predictor_forward.4} parent=0 // pred_check_branch
    %13 = sbr.rel (0) target = $region13
  $region12: #{masked_predictor_forward.4} parent=0 // pred_region
    _
  $region13: #{masked_predictor_forward.4} parent=0 // pred_fallthru
    _
  %v15 = vld [vmem:[%s0] sm:$0xf]
  %v16 = vld [vmem:[%s0 + $0x4] sm:$0xf]
  %v17 = vld [vmem:[%s1] sm:$0xf]
  %v18 = vld [vmem:[%s1 + $0x4] sm:$0xf]
  %v19 = vld [vmem:[%s1 + $0x8] sm:$0xf]
  %v20 = vld [vmem:[%s1 + $0xc] sm:$0xf]
  %v21 = vld [vmem:[%s2] sm:$0x1]
  %v23 = vlaneseq
  %v24 = vshrl.u32 %v23, 7
  %v25 = vsub.s32 0, %v24
  %v26 = vrot.slane %v21, %v25
  %v30 = vunpack.c.l.b16 %v15
  %v31 = vunpack.c.l.b16 %v16
  %v32 = vpack.c.b16 %v31, %v30
  %v37 = vunpack.c.l.b16 %v17
  %v38 = vunpack.c.l.b16 %v18
  %v39 = vunpack.c.l.b16 %v19
  %v40 = vunpack.c.l.b16 %v20
  %v41 = vpack.c.b16 %v38, %v37
  %v42 = vpack.c.b16 %v40, %v39
  %vm45 = vcmask 261120
  %v47 = vsel %vm45, %v32, 0
  %49 = vmatprep.subr.bf16.mxu0 0
  %50 = vmatpush1.bf16.msra.mxu0 0
  %51 = vmatprep.subr.bf16.mxu0 0
  %52 = vmatpush1.bf16.msra.mxu0 0
  %53 = vmatprep.subr.bf16.mxu0 0
  %54 = vmatpush1.bf16.msra.mxu0 0
  %55 = vmatprep.subr.bf16.mxu0 0
  %56 = vmatpush1.bf16.msra.mxu0 0
  %57 = vmatprep.subr.bf16.mxu0 0
  %58 = vmatpush1.bf16.msra.mxu0 0
  %59 = vmatprep.subr.bf16.mxu0 0
  %60 = vmatpush1.bf16.msra.mxu0 0
  %61 = vmatprep.subr.bf16.mxu0 0
  %62 = vmatpush1.bf16.msra.mxu0 %v42
  %63 = vmatprep.subr.bf16.mxu0 0
  %64 = vmatpush1.bf16.msra.mxu0 %v41
  %65 = vmatprep.subr.bf16.mxu0 0
  %66 = vmatpush2.bf16.msra.mxu0 0
  %67 = vmatprep.subr.bf16.mxu0 0
  %68 = vmatpush2.bf16.msra.mxu0 0
  %69 = vmatprep.subr.bf16.mxu0 0
  %70 = vmatpush2.bf16.msra.mxu0 0
  %71 = vmatprep.subr.bf16.mxu0 0
  %72 = vmatpush2.bf16.msra.mxu0 0
  %73 = vmatprep.subr.bf16.mxu0 0
  %74 = vmatpush2.bf16.msra.mxu0 0
  %75 = vmatprep.subr.bf16.mxu0 0
  %76 = vmatpush2.bf16.msra.mxu0 0
  %77 = vmatprep.subr.bf16.mxu0 0
  %78 = vmatpush2.bf16.msra.mxu0 0
  %79 = vmatprep.subr.bf16.mxu0 0
  %80 = vmatpush2.bf16.msra.mxu0 0
  %81 = vmatprep.mubr.bf16.mxu0 0
  %82 = vmatmul.mubr.bf16.gmra.mxu0 %v47
  %v83 = vpop.f32.mrf.mxu0
  %v84 = vadd.f32 %v26, %v83
  %v85 = vpop.f32.mrf.mxu0
  %v86 = vpop.f32.mrf.mxu0
  %v87 = vadd.f32 %v26, %v86
  %v88 = vpop.f32.mrf.mxu0
  %89 = vdwg.mxu0
  %v90 = vpack.c.bf16 %v87, %v84
  %v92 = vunpack.c.l.b16 %v90
  %v93 = vunpack.c.h.b16 %v90
  %v94 = vpack.c.b16 %v92, %v92
  %v95 = vpack.c.b16 %v93, %v93
  %vm98 = vcmask 519168
  %99 = vst.msk [vmem:[%s3] sm:$0xf] %vm98, %v94
  %100 = vst.msk [vmem:[%s3 + $0x4] sm:$0xf] %vm98, %v95
  // Predicated region
  $region14: #{masked_predictor_forward.4} parent=0 // pred_check
    _
  $region15: #{masked_predictor_forward.4} parent=0 // pred_check_branch
    %102 = sbr.rel (0) target = $region17
  $region16: #{masked_predictor_forward.4} parent=0 // pred_region
    _
  $region17: #{masked_predictor_forward.4} parent=0 // pred_fallthru
    _
  // Predicated region
  $region18: #{masked_predictor_forward.4} parent=0 // pred_check
    _
  $region19: #{masked_predictor_forward.4} parent=0 // pred_check_branch
    %104 = sbr.rel (0) target = $region21
  $region20: #{masked_predictor_forward.4} parent=0 // pred_region
    _
  $region21: #{masked_predictor_forward.4} parent=0 // pred_fallthru
    _

// kernel: masked_predictor_forward.7
$region0: #{masked_predictor_forward.7}
  #allocation0 [shape = 'u32[]', space=smem, size = 0x4, offset = 0x4, fixed_abs, tag = 'smem constant byte address 0x4 - core index']
  #allocation1 [shape = 'u32[144,128]{1,0:T(1,128)}', space=vmem, size = 0x12000, scoped, tag = 'internal scratch']
  %s0 = inlined_call_operand.vmem [shape: bf16[32,64], index: 0, kind: input, shape index: {}]
  %s1 = inlined_call_operand.vmem [shape: f32[1,64], index: 1, kind: input, shape index: {}]
  %s2 = inlined_call_operand.vmem [shape: bf16[64,32], index: 2, kind: input, shape index: {}]
  %s3 = inlined_call_operand.vmem [shape: f32[1,32], index: 3, kind: input, shape index: {}]
  %s4 = inlined_call_operand.hbm [shape: f32[32,32], index: 4, kind: output, shape index: {}]
  %s5 = sld [smem:[#allocation0]]
  $region26: #{masked_predictor_forward.7} parent=0
    _
  %s7 = ssub.s32 1, %s5
  %s8 = scalar_select 0, %s7, %s5
  $region1: #{masked_predictor_forward.7} parent=0
    #allocation2 [shape = 'u8[16384]{0}', space=vmem, size = 0x4000, scoped, tag = 'output window, operand 0, single buffered']
    #allocation3 [shape = 's32[1]{0}', space=sflag, size = 0x4, scoped, tag = 'scoped memory for masked_predictor_forward.7']
    %9 = vsyncpa [#allocation3], 0
    // Predicated region
    $region2: #{masked_predictor_forward.7} parent=1 // pred_check
      _
    $region3: #{masked_predictor_forward.7} parent=1 // pred_check_branch
      %11 = sbr.rel (0) target = $region5
    $region4: #{masked_predictor_forward.7} parent=1 // pred_region
      _
    $region5: #{masked_predictor_forward.7} parent=1 // pred_fallthru
      _
    // Predicated region
    $region6: #{masked_predictor_forward.7} parent=1 // pred_check
      _
    $region7: #{masked_predictor_forward.7} parent=1 // pred_check_branch
      %13 = sbr.rel (0) target = $region9
    $region8: #{masked_predictor_forward.7} parent=1 // pred_region
      _
    $region9: #{masked_predictor_forward.7} parent=1 // pred_fallthru
      _
    // Predicated region
    $region10: #{masked_predictor_forward.7} parent=1 // pred_check
      _
    $region11: #{masked_predictor_forward.7} parent=1 // pred_check_branch
      %15 = sbr.rel (0) target = $region13
    $region12: #{masked_predictor_forward.7} parent=1 // pred_region
      _
    $region13: #{masked_predictor_forward.7} parent=1 // pred_fallthru
      _
    // Predicated region
    $region14: #{masked_predictor_forward.7} parent=1 // pred_check
      _
    $region15: #{masked_predictor_forward.7} parent=1 // pred_check_branch
      %17 = sbr.rel (0) target = $region17
    $region16: #{masked_predictor_forward.7} parent=1 // pred_region
      _
    $region17: #{masked_predictor_forward.7} parent=1 // pred_fallthru
      _
    %v19 = vld [vmem:[%s0] sm:$0xf]
    %v20 = vld [vmem:[%s0 + $0x4] sm:$0xf]
    %v21 = vld [vmem:[%s0 + $0x8] sm:$0xf]
    %v22 = vld [vmem:[%s0 + $0xc] sm:$0xf]
    %v23 = vunpack.c.l.bf16 %v19
    %v24 = vunpack.c.l.bf16 %v20
    %v25 = vunpack.c.l.bf16 %v21
    %v26 = vunpack.c.l.bf16 %v22
    %v27 = vld [vmem:[%s1] sm:$0x1]
    %v28 = vmul.f32 %v23, %v23
    %v29 = vmul.f32 %v24, %v24
    %v30 = vmul.f32 %v25, %v25
    %v31 = vmul.f32 %v26, %v26
    %vm32 = vcmask 523264
    %v33 = vsel %vm32, %v28, 0.0
    %34 = vadd.xlane.f32.xlu0 %v33
    %v35 = vpop.xlane.xlu0 %34
    %v36 = vsel %vm32, %v29, 0.0
    %37 = vadd.xlane.f32.xlu0 %v36
    %v38 = vpop.xlane.xlu0 %37
    %v39 = vsel %vm32, %v30, 0.0
    %40 = vadd.xlane.f32.xlu0 %v39
    %v41 = vpop.xlane.xlu0 %40
    %v42 = vsel %vm32, %v31, 0.0
    %43 = vadd.xlane.f32.xlu0 %v42
    %v44 = vpop.xlane.xlu0 %43
    %v45 = vrcp.pop 64.0
    %v46 = vmul.f32 %v35, %v45
    %v47 = vmul.f32 %v38, %v45
    %v48 = vmul.f32 %v41, %v45
    %v49 = vmul.f32 %v44, %v45
    %v50 = vadd.f32 %v46, 1e-05
    %v51 = vadd.f32 %v47, 1e-05
    %v52 = vadd.f32 %v48, 1e-05
    %v53 = vadd.f32 %v49, 1e-05
    %v54 = vrsqrt.pop %v50
    %v55 = vrsqrt.pop %v51
    %v56 = vrsqrt.pop %v52
    %v57 = vrsqrt.pop %v53
    %v58 = vmul.f32 %v23, %v54
    %v59 = vmul.f32 %v24, %v55
    %v60 = vmul.f32 %v25, %v56
    %v61 = vmul.f32 %v26, %v57
    %v63 = vlaneseq
    %v64 = vshrl.u32 %v63, 7
    %v65 = vsub.s32 0, %v64
    %v66 = vrot.slane %v27, %v65
    %v68 = vmul.f32 %v58, %v66
    %v69 = vmul.f32 %v59, %v66
    %v70 = vmul.f32 %v60, %v66
    %v71 = vmul.f32 %v61, %v66
    %v72 = vpack.c.bf16 %v69, %v68
    %v73 = vpack.c.bf16 %v71, %v70
    %v74 = vld [vmem:[%s2] sm:$0xf]
    %v75 = vld [vmem:[%s2 + $0x4] sm:$0xf]
    %v76 = vld [vmem:[%s2 + $0x8] sm:$0xf]
    %v77 = vld [vmem:[%s2 + $0xc] sm:$0xf]
    %v78 = vld [vmem:[%s2 + $0x10] sm:$0xf]
    %v79 = vld [vmem:[%s2 + $0x14] sm:$0xf]
    %v80 = vld [vmem:[%s2 + $0x18] sm:$0xf]
    %v81 = vld [vmem:[%s2 + $0x1c] sm:$0xf]
    %v82 = vld [vmem:[%s3] sm:$0x1]
    %v84 = vlaneseq
    %v85 = vshrl.u32 %v84, 7
    %v86 = vsub.s32 0, %v85
    %v87 = vrot.slane %v82, %v86
    %v97 = vunpack.c.l.b16 %v74
    %v98 = vunpack.c.l.b16 %v75
    %v99 = vunpack.c.l.b16 %v76
    %v100 = vunpack.c.l.b16 %v77
    %v101 = vunpack.c.l.b16 %v78
    %v102 = vunpack.c.l.b16 %v79
    %v103 = vunpack.c.l.b16 %v80
    %v104 = vunpack.c.l.b16 %v81
    %v105 = vpack.c.b16 %v98, %v97
    %v106 = vpack.c.b16 %v100, %v99
    %v107 = vpack.c.b16 %v102, %v101
    %v108 = vpack.c.b16 %v104, %v103
    %v114 = vsel %vm32, %v72, 0
    %v117 = vsel %vm32, %v73, 0
    %119 = vmatprep.subr.bf16.mxu0 0
    %120 = vmatpush1.bf16.msra.mxu0 0
    %121 = vmatprep.subr.bf16.mxu0 0
    %122 = vmatpush1.bf16.msra.mxu0 0
    %123 = vmatprep.subr.bf16.mxu0 0
    %124 = vmatpush1.bf16.msra.mxu0 0
    %125 = vmatprep.subr.bf16.mxu0 0
    %126 = vmatpush1.bf16.msra.mxu0 0
    %127 = vmatprep.subr.bf16.mxu0 0
    %128 = vmatpush1.bf16.msra.mxu0 %v108
    %129 = vmatprep.subr.bf16.mxu0 0
    %130 = vmatpush1.bf16.msra.mxu0 %v107
    %131 = vmatprep.subr.bf16.mxu0 0
    %132 = vmatpush1.bf16.msra.mxu0 %v106
    %133 = vmatprep.subr.bf16.mxu0 0
    %134 = vmatpush1.bf16.msra.mxu0 %v105
    %135 = vmatprep.subr.bf16.mxu0 0
    %136 = vmatpush2.bf16.msra.mxu0 0
    %137 = vmatprep.subr.bf16.mxu0 0
    %138 = vmatpush2.bf16.msra.mxu0 0
    %139 = vmatprep.subr.bf16.mxu0 0
    %140 = vmatpush2.bf16.msra.mxu0 0
    %141 = vmatprep.subr.bf16.mxu0 0
    %142 = vmatpush2.bf16.msra.mxu0 0
    %143 = vmatprep.subr.bf16.mxu0 0
    %144 = vmatpush2.bf16.msra.mxu0 0
    %145 = vmatprep.subr.bf16.mxu0 0
    %146 = vmatpush2.bf16.msra.mxu0 0
    %147 = vmatprep.subr.bf16.mxu0 0
    %148 = vmatpush2.bf16.msra.mxu0 0
    %149 = vmatprep.subr.bf16.mxu0 0
    %150 = vmatpush2.bf16.msra.mxu0 0
    %151 = vmatprep.mubr.bf16.mxu0 0
    %152 = vmatmul.mubr.bf16.gmra.mxu0 %v114
    %v153 = vpop.f32.mrf.mxu0
    %v154 = vadd.f32 %v87, %v153
    %v155 = vpop.f32.mrf.mxu0
    %v156 = vpop.f32.mrf.mxu0
    %v157 = vadd.f32 %v87, %v156
    %v158 = vpop.f32.mrf.mxu0
    %159 = vmatprep.mubr.bf16.mxu0 0
    %160 = vmatmul.mubr.bf16.gmra.mxu0 %v117
    %v161 = vpop.f32.mrf.mxu0
    %v162 = vadd.f32 %v87, %v161
    %v163 = vpop.f32.mrf.mxu0
    %v164 = vpop.f32.mrf.mxu0
    %v165 = vadd.f32 %v87, %v164
    %v166 = vpop.f32.mrf.mxu0
    %167 = vdwg.mxu0
    %vm168 = vcmask 261120
    %169 = vst.msk [vmem:[#allocation2] sm:$0xff] %vm168, %v154
    %170 = vst.msk [vmem:[#allocation2 + $0x8] sm:$0xff] %vm168, %v157
    %171 = vst.msk [vmem:[#allocation2 + $0x10] sm:$0xff] %vm168, %v162
    %172 = vst.msk [vmem:[#allocation2 + $0x18] sm:$0xff] %vm168, %v165
    // Predicated region
    $region18: #{masked_predictor_forward.7} parent=1 // pred_check
      _
    $region19: #{masked_predictor_forward.7} parent=1 // pred_check_branch
      %174 = sbr.rel (0) target = $region21
    $region20: #{masked_predictor_forward.7} parent=1 // pred_region
      %s176 = ssub.s32 512, 512
      %177 = vsyncadd [#allocation3], %s176
      %s178 = sshll.u32 [#allocation2], 4
      %s179 = int_to_ptr.vmem [resolvable:$true] %s178
      %184 = dma.vmem_to_hbm [thread:$0]  %s179, 512, %s4, [#allocation3], 128, 128, 8
    $region21: #{masked_predictor_forward.7} parent=1 // pred_fallthru
      _
    // Predicated region
    $region22: #{masked_predictor_forward.7} parent=1 // pred_check
      _
    $region23: #{masked_predictor_forward.7} parent=1 // pred_check_branch
      %186 = sbr.rel (0) target = $region25
    $region24: #{masked_predictor_forward.7} parent=1 // pred_region
      %187 = dma.done [#allocation3], 512
    $region25: #{masked_predictor_forward.7} parent=1 // pred_fallthru
      _
    %188 = vsyncpa [#allocation3], 1

// kernel: masked_predictor_forward.5
$region0: #{masked_predictor_forward.5}
  #allocation0 [shape = 'u32[]', space=smem, size = 0x4, offset = 0x4, fixed_abs, tag = 'smem constant byte address 0x4 - core index']
  #allocation1 [shape = 'u32[144,128]{1,0:T(1,128)}', space=vmem, size = 0x12000, scoped, tag = 'internal scratch']
  %s0 = inlined_call_operand.vmem [shape: bf16[2,16,64], index: 0, kind: input, shape index: {}]
  %s1 = inlined_call_operand.vmem [shape: f32[16,64], index: 1, kind: input, shape index: {}]
  %s2 = inlined_call_operand.vmem [shape: f32[1,64], index: 2, kind: input, shape index: {}]
  %s3 = inlined_call_operand.vmem [shape: bf16[64,64], index: 3, kind: input, shape index: {}]
  %s4 = inlined_call_operand.vmem [shape: bf16[64,64], index: 4, kind: input, shape index: {}]
  %s5 = inlined_call_operand.vmem [shape: bf16[64,64], index: 5, kind: input, shape index: {}]
  %s6 = inlined_call_operand.vmem [shape: f32[1,64], index: 6, kind: input, shape index: {}]
  %s7 = inlined_call_operand.vmem [shape: f32[1,64], index: 7, kind: input, shape index: {}]
  %s8 = inlined_call_operand.vmem [shape: f32[1,64], index: 8, kind: input, shape index: {}]
  %s9 = inlined_call_operand.vmem [shape: bf16[64,64], index: 9, kind: input, shape index: {}]
  %s10 = inlined_call_operand.vmem [shape: f32[1,64], index: 10, kind: input, shape index: {}]
  %s11 = inlined_call_operand.vmem [shape: f32[1,64], index: 11, kind: input, shape index: {}]
  %s12 = inlined_call_operand.vmem [shape: bf16[64,256], index: 12, kind: input, shape index: {}]
  %s13 = inlined_call_operand.vmem [shape: f32[1,256], index: 13, kind: input, shape index: {}]
  %s14 = inlined_call_operand.vmem [shape: bf16[64,256], index: 14, kind: input, shape index: {}]
  %s15 = inlined_call_operand.vmem [shape: f32[1,256], index: 15, kind: input, shape index: {}]
  %s16 = inlined_call_operand.vmem [shape: bf16[256,64], index: 16, kind: input, shape index: {}]
  %s17 = inlined_call_operand.vmem [shape: f32[1,64], index: 17, kind: input, shape index: {}]
  %s18 = inlined_call_operand.vmem [shape: bf16[2,16,64], index: 18, kind: output, shape index: {}]
  %s19 = sld [smem:[#allocation0]]
  $region105: #{masked_predictor_forward.5} parent=0
    _
  %s21 = ssub.s32 1, %s19
  %s22 = scalar_select 0, %s21, %s19
  loop: start=0, step=1, limit=4
  $region2: #{masked_predictor_forward.5} parent=0 // loop_pre_header
    _
  $region3: #{masked_predictor_forward.5} parent=0 // loop_header
    %s24 = sphi 0, %s28
    %p25 = scmp.ge.s32.totalorder %s24, 4
    %s34 = sphi 0, %s36
    %s37 = sphi 0, %s34
    %s38 = sphi 0, %s37
    %s54 = sphi 0, %s38
    %s58 = sphi 0, %s58
    %s60 = sphi 0, %s58
    %s61 = sphi 0, %s60
    %s75 = sphi 0, %s61
    %s79 = sphi 0, %s79
    %s81 = sphi 0, %s79
    %s82 = sphi 0, %s81
    %s96 = sphi 0, %s82
    %s100 = sphi 0, %s100
    %s102 = sphi 0, %s100
    %s103 = sphi 0, %s102
    %s117 = sphi 0, %s103
    %s121 = sphi 0, %s121
    %s123 = sphi 0, %s121
    %s124 = sphi 0, %s123
    %s138 = sphi 0, %s124
    %s142 = sphi 0, %s142
    %s144 = sphi 0, %s142
    %s145 = sphi 0, %s144
    %s159 = sphi 0, %s145
    %s163 = sphi 0, %s163
    %s165 = sphi 0, %s163
    %s166 = sphi 0, %s165
    %s180 = sphi 0, %s166
    %s184 = sphi 0, %s184
    %s186 = sphi 0, %s184
    %s187 = sphi 0, %s186
    %s201 = sphi 0, %s187
    %s205 = sphi 0, %s205
    %s207 = sphi 0, %s205
    %s208 = sphi 0, %s207
    %s222 = sphi 0, %s208
    %s226 = sphi 0, %s226
    %s228 = sphi 0, %s226
    %s229 = sphi 0, %s228
    %s243 = sphi 0, %s229
    %s247 = sphi 0, %s247
    %s249 = sphi 0, %s247
    %s250 = sphi 0, %s249
    %s264 = sphi 0, %s250
    %s268 = sphi 0, %s268
    %s270 = sphi 0, %s268
    %s271 = sphi 0, %s270
    %s285 = sphi 0, %s271
    %s289 = sphi 0, %s289
    %s291 = sphi 0, %s289
    %s292 = sphi 0, %s291
    %s306 = sphi 0, %s292
    %s310 = sphi 0, %s310
    %s312 = sphi 0, %s310
    %s313 = sphi 0, %s312
    %s327 = sphi 0, %s313
    %s331 = sphi 0, %s331
    %s333 = sphi 0, %s331
    %s334 = sphi 0, %s333
    %s348 = sphi 0, %s334
    %s352 = sphi 0, %s352
    %s354 = sphi 0, %s352
    %s355 = sphi 0, %s354
    %s369 = sphi 0, %s355
    %s373 = sphi 0, %s373
    %s375 = sphi 0, %s373
    %s376 = sphi 0, %s375
    %s390 = sphi 0, %s376
    %s394 = sphi 0, %s394
    %s396 = sphi 0, %s394
    %s397 = sphi 0, %s396
    %s411 = sphi 0, %s397
    %s417 = sphi 0, %s419
    %s420 = sphi 0, %s417
    %s421 = sphi 0, %s420
    %s437 = sphi 0, %s421
  $region4: #{masked_predictor_forward.5} parent=0 // loop_header_branch
    %27 = sbr.rel (%p25) target = $region8
  $region5: #{masked_predictor_forward.5} parent=0 // loop_body
    %s29 = ssub.s32 %s24, 1
    %s30 = ssub.s32 %s24, 2
    %s31 = sadd.s32 %s24, 1
    %s32 = ssub.s32 %s24, %s31
    %p33 = scmp.eq.s32.totalorder %s32, 0
    %s35 = sadd.s32 %s34, 1
    %s36 = scalar_select %p33, %s34, %s35
    %p39 = pneg %p33
    %p40 = scmp.eq.s32.totalorder %s24, 1
    %p41 = por %p39, %p40
    %p42 = scmp.ne.s32.totalorder %s34, %s37
    %p43 = scmp.eq.s32.totalorder %s24, 0
    %p44 = por %p42, %p43
    %p45 = scmp.ne.s32.totalorder %s34, %s37
    %p46 = scmp.eq.s32.totalorder %s29, 1
    %p47 = por %p45, %p46
    %p48 = scmp.ne.s32.totalorder %s37, %s38
    %p49 = scmp.eq.s32.totalorder %s29, 0
    %p50 = por %p48, %p49
    %p51 = scmp.ne.s32.totalorder %s37, %s38
    %p52 = scmp.eq.s32.totalorder %s30, 1
    %p53 = por %p51, %p52
    %p55 = scmp.ne.s32.totalorder %s38, %s54
    %p56 = scmp.eq.s32.totalorder %s30, 0
    %p57 = por %p55, %p56
    %s59 = sadd.s32 %s58, 1
    %p62 = scmp.eq.s32.totalorder %s24, 1
    %p63 = scmp.ne.s32.totalorder %s58, %s60
    %p64 = scmp.eq.s32.totalorder %s24, 0
    %p65 = por %p63, %p64
    %p66 = scmp.ne.s32.totalorder %s58, %s60
    %p67 = scmp.eq.s32.totalorder %s29, 1
    %p68 = por %p66, %p67
    %p69 = scmp.ne.s32.totalorder %s60, %s61
    %p70 = scmp.eq.s32.totalorder %s29, 0
    %p71 = por %p69, %p70
    %p72 = scmp.ne.s32.totalorder %s60, %s61
    %p73 = scmp.eq.s32.totalorder %s30, 1
    %p74 = por %p72, %p73
    %p76 = scmp.ne.s32.totalorder %s61, %s75
    %p77 = scmp.eq.s32.totalorder %s30, 0
    %p78 = por %p76, %p77
    %s80 = sadd.s32 %s79, 1
    %p83 = scmp.eq.s32.totalorder %s24, 1
    %p84 = scmp.ne.s32.totalorder %s79, %s81
    %p85 = scmp.eq.s32.totalorder %s24, 0
    %p86 = por %p84, %p85
    %p87 = scmp.ne.s32.totalorder %s79, %s81
    %p88 = scmp.eq.s32.totalorder %s29, 1
    %p89 = por %p87, %p88
    %p90 = scmp.ne.s32.totalorder %s81, %s82
    %p91 = scmp.eq.s32.totalorder %s29, 0
    %p92 = por %p90, %p91
    %p93 = scmp.ne.s32.totalorder %s81, %s82
    %p94 = scmp.eq.s32.totalorder %s30, 1
    %p95 = por %p93, %p94
    %p97 = scmp.ne.s32.totalorder %s82, %s96
    %p98 = scmp.eq.s32.totalorder %s30, 0
    %p99 = por %p97, %p98
    %s101 = sadd.s32 %s100, 1
    %p104 = scmp.eq.s32.totalorder %s24, 1
    %p105 = scmp.ne.s32.totalorder %s100, %s102
    %p106 = scmp.eq.s32.totalorder %s24, 0
    %p107 = por %p105, %p106
    %p108 = scmp.ne.s32.totalorder %s100, %s102
    %p109 = scmp.eq.s32.totalorder %s29, 1
    %p110 = por %p108, %p109
    %p111 = scmp.ne.s32.totalorder %s102, %s103
    %p112 = scmp.eq.s32.totalorder %s29, 0
    %p113 = por %p111, %p112
    %p114 = scmp.ne.s32.totalorder %s102, %s103
    %p115 = scmp.eq.s32.totalorder %s30, 1
    %p116 = por %p114, %p115
    %p118 = scmp.ne.s32.totalorder %s103, %s117
    %p119 = scmp.eq.s32.totalorder %s30, 0
    %p120 = por %p118, %p119
    %s122 = sadd.s32 %s121, 1
    %p125 = scmp.eq.s32.totalorder %s24, 1
    %p126 = scmp.ne.s32.totalorder %s121, %s123
    %p127 = scmp.eq.s32.totalorder %s24, 0
    %p128 = por %p126, %p127
    %p129 = scmp.ne.s32.totalorder %s121, %s123
    %p130 = scmp.eq.s32.totalorder %s29, 1
    %p131 = por %p129, %p130
    %p132 = scmp.ne.s32.totalorder %s123, %s124
    %p133 = scmp.eq.s32.totalorder %s29, 0
    %p134 = por %p132, %p133
    %p135 = scmp.ne.s32.totalorder %s123, %s124
    %p136 = scmp.eq.s32.totalorder %s30, 1
    %p137 = por %p135, %p136
    %p139 = scmp.ne.s32.totalorder %s124, %s138
    %p140 = scmp.eq.s32.totalorder %s30, 0
    %p141 = por %p139, %p140
    %s143 = sadd.s32 %s142, 1
    %p146 = scmp.eq.s32.totalorder %s24, 1
    %p147 = scmp.ne.s32.totalorder %s142, %s144
    %p148 = scmp.eq.s32.totalorder %s24, 0
    %p149 = por %p147, %p148
    %p150 = scmp.ne.s32.totalorder %s142, %s144
    %p151 = scmp.eq.s32.totalorder %s29, 1
    %p152 = por %p150, %p151
    %p153 = scmp.ne.s32.totalorder %s144, %s145
    %p154 = scmp.eq.s32.totalorder %s29, 0
    %p155 = por %p153, %p154
    %p156 = scmp.ne.s32.totalorder %s144, %s145
    %p157 = scmp.eq.s32.totalorder %s30, 1
    %p158 = por %p156, %p157
    %p160 = scmp.ne.s32.totalorder %s145, %s159
    %p161 = scmp.eq.s32.totalorder %s30, 0
    %p162 = por %p160, %p161
    %s164 = sadd.s32 %s163, 1
    %p167 = scmp.eq.s32.totalorder %s24, 1
    %p168 = scmp.ne.s32.totalorder %s163, %s165
    %p169 = scmp.eq.s32.totalorder %s24, 0
    %p170 = por %p168, %p169
    %p171 = scmp.ne.s32.totalorder %s163, %s165
    %p172 = scmp.eq.s32.totalorder %s29, 1
    %p173 = por %p171, %p172
    %p174 = scmp.ne.s32.totalorder %s165, %s166
    %p175 = scmp.eq.s32.totalorder %s29, 0
    %p176 = por %p174, %p175
    %p177 = scmp.ne.s32.totalorder %s165, %s166
    %p178 = scmp.eq.s32.totalorder %s30, 1
    %p179 = por %p177, %p178
    %p181 = scmp.ne.s32.totalorder %s166, %s180
    %p182 = scmp.eq.s32.totalorder %s30, 0
    %p183 = por %p181, %p182
    %s185 = sadd.s32 %s184, 1
    %p188 = scmp.eq.s32.totalorder %s24, 1
    %p189 = scmp.ne.s32.totalorder %s184, %s186
    %p190 = scmp.eq.s32.totalorder %s24, 0
    %p191 = por %p189, %p190
    %p192 = scmp.ne.s32.totalorder %s184, %s186
    %p193 = scmp.eq.s32.totalorder %s29, 1
    %p194 = por %p192, %p193
    %p195 = scmp.ne.s32.totalorder %s186, %s187
    %p196 = scmp.eq.s32.totalorder %s29, 0
    %p197 = por %p195, %p196
    %p198 = scmp.ne.s32.totalorder %s186, %s187
    %p199 = scmp.eq.s32.totalorder %s30, 1
    %p200 = por %p198, %p199
    %p202 = scmp.ne.s32.totalorder %s187, %s201
    %p203 = scmp.eq.s32.totalorder %s30, 0
    %p204 = por %p202, %p203
    %s206 = sadd.s32 %s205, 1
    %p209 = scmp.eq.s32.totalorder %s24, 1
    %p210 = scmp.ne.s32.totalorder %s205, %s207
    %p211 = scmp.eq.s32.totalorder %s24, 0
    %p212 = por %p210, %p211
    %p213 = scmp.ne.s32.totalorder %s205, %s207
    %p214 = scmp.eq.s32.totalorder %s29, 1
    %p215 = por %p213, %p214
    %p216 = scmp.ne.s32.totalorder %s207, %s208
    %p217 = scmp.eq.s32.totalorder %s29, 0
    %p218 = por %p216, %p217
    %p219 = scmp.ne.s32.totalorder %s207, %s208
    %p220 = scmp.eq.s32.totalorder %s30, 1
    %p221 = por %p219, %p220
    %p223 = scmp.ne.s32.totalorder %s208, %s222
    %p224 = scmp.eq.s32.totalorder %s30, 0
    %p225 = por %p223, %p224
    %s227 = sadd.s32 %s226, 1
    %p230 = scmp.eq.s32.totalorder %s24, 1
    %p231 = scmp.ne.s32.totalorder %s226, %s228
    %p232 = scmp.eq.s32.totalorder %s24, 0
    %p233 = por %p231, %p232
    %p234 = scmp.ne.s32.totalorder %s226, %s228
    %p235 = scmp.eq.s32.totalorder %s29, 1
    %p236 = por %p234, %p235
    %p237 = scmp.ne.s32.totalorder %s228, %s229
    %p238 = scmp.eq.s32.totalorder %s29, 0
    %p239 = por %p237, %p238
    %p240 = scmp.ne.s32.totalorder %s228, %s229
    %p241 = scmp.eq.s32.totalorder %s30, 1
    %p242 = por %p240, %p241
    %p244 = scmp.ne.s32.totalorder %s229, %s243
    %p245 = scmp.eq.s32.totalorder %s30, 0
    %p246 = por %p244, %p245
    %s248 = sadd.s32 %s247, 1
    %p251 = scmp.eq.s32.totalorder %s24, 1
    %p252 = scmp.ne.s32.totalorder %s247, %s249
    %p253 = scmp.eq.s32.totalorder %s24, 0
    %p254 = por %p252, %p253
    %p255 = scmp.ne.s32.totalorder %s247, %s249
    %p256 = scmp.eq.s32.totalorder %s29, 1
    %p257 = por %p255, %p256
    %p258 = scmp.ne.s32.totalorder %s249, %s250
    %p259 = scmp.eq.s32.totalorder %s29, 0
    %p260 = por %p258, %p259
    %p261 = scmp.ne.s32.totalorder %s249, %s250
    %p262 = scmp.eq.s32.totalorder %s30, 1
    %p263 = por %p261, %p262
    %p265 = scmp.ne.s32.totalorder %s250, %s264
    %p266 = scmp.eq.s32.totalorder %s30, 0
    %p267 = por %p265, %p266
    %s269 = sadd.s32 %s268, 1
    %p272 = scmp.eq.s32.totalorder %s24, 1
    %p273 = scmp.ne.s32.totalorder %s268, %s270
    %p274 = scmp.eq.s32.totalorder %s24, 0
    %p275 = por %p273, %p274
    %p276 = scmp.ne.s32.totalorder %s268, %s270
    %p277 = scmp.eq.s32.totalorder %s29, 1
    %p278 = por %p276, %p277
    %p279 = scmp.ne.s32.totalorder %s270, %s271
    %p280 = scmp.eq.s32.totalorder %s29, 0
    %p281 = por %p279, %p280
    %p282 = scmp.ne.s32.totalorder %s270, %s271
    %p283 = scmp.eq.s32.totalorder %s30, 1
    %p284 = por %p282, %p283
    %p286 = scmp.ne.s32.totalorder %s271, %s285
    %p287 = scmp.eq.s32.totalorder %s30, 0
    %p288 = por %p286, %p287
    %s290 = sadd.s32 %s289, 1
    %p293 = scmp.eq.s32.totalorder %s24, 1
    %p294 = scmp.ne.s32.totalorder %s289, %s291
    %p295 = scmp.eq.s32.totalorder %s24, 0
    %p296 = por %p294, %p295
    %p297 = scmp.ne.s32.totalorder %s289, %s291
    %p298 = scmp.eq.s32.totalorder %s29, 1
    %p299 = por %p297, %p298
    %p300 = scmp.ne.s32.totalorder %s291, %s292
    %p301 = scmp.eq.s32.totalorder %s29, 0
    %p302 = por %p300, %p301
    %p303 = scmp.ne.s32.totalorder %s291, %s292
    %p304 = scmp.eq.s32.totalorder %s30, 1
    %p305 = por %p303, %p304
    %p307 = scmp.ne.s32.totalorder %s292, %s306
    %p308 = scmp.eq.s32.totalorder %s30, 0
    %p309 = por %p307, %p308
    %s311 = sadd.s32 %s310, 1
    %p314 = scmp.eq.s32.totalorder %s24, 1
    %p315 = scmp.ne.s32.totalorder %s310, %s312
    %p316 = scmp.eq.s32.totalorder %s24, 0
    %p317 = por %p315, %p316
    %p318 = scmp.ne.s32.totalorder %s310, %s312
    %p319 = scmp.eq.s32.totalorder %s29, 1
    %p320 = por %p318, %p319
    %p321 = scmp.ne.s32.totalorder %s312, %s313
    %p322 = scmp.eq.s32.totalorder %s29, 0
    %p323 = por %p321, %p322
    %p324 = scmp.ne.s32.totalorder %s312, %s313
    %p325 = scmp.eq.s32.totalorder %s30, 1
    %p326 = por %p324, %p325
    %p328 = scmp.ne.s32.totalorder %s313, %s327
    %p329 = scmp.eq.s32.totalorder %s30, 0
    %p330 = por %p328, %p329
    %s332 = sadd.s32 %s331, 1
    %p335 = scmp.eq.s32.totalorder %s24, 1
    %p336 = scmp.ne.s32.totalorder %s331, %s333
    %p337 = scmp.eq.s32.totalorder %s24, 0
    %p338 = por %p336, %p337
    %p339 = scmp.ne.s32.totalorder %s331, %s333
    %p340 = scmp.eq.s32.totalorder %s29, 1
    %p341 = por %p339, %p340
    %p342 = scmp.ne.s32.totalorder %s333, %s334
    %p343 = scmp.eq.s32.totalorder %s29, 0
    %p344 = por %p342, %p343
    %p345 = scmp.ne.s32.totalorder %s333, %s334
    %p346 = scmp.eq.s32.totalorder %s30, 1
    %p347 = por %p345, %p346
    %p349 = scmp.ne.s32.totalorder %s334, %s348
    %p350 = scmp.eq.s32.totalorder %s30, 0
    %p351 = por %p349, %p350
    %s353 = sadd.s32 %s352, 1
    %p356 = scmp.eq.s32.totalorder %s24, 1
    %p357 = scmp.ne.s32.totalorder %s352, %s354
    %p358 = scmp.eq.s32.totalorder %s24, 0
    %p359 = por %p357, %p358
    %p360 = scmp.ne.s32.totalorder %s352, %s354
    %p361 = scmp.eq.s32.totalorder %s29, 1
    %p362 = por %p360, %p361
    %p363 = scmp.ne.s32.totalorder %s354, %s355
    %p364 = scmp.eq.s32.totalorder %s29, 0
    %p365 = por %p363, %p364
    %p366 = scmp.ne.s32.totalorder %s354, %s355
    %p367 = scmp.eq.s32.totalorder %s30, 1
    %p368 = por %p366, %p367
    %p370 = scmp.ne.s32.totalorder %s355, %s369
    %p371 = scmp.eq.s32.totalorder %s30, 0
    %p372 = por %p370, %p371
    %s374 = sadd.s32 %s373, 1
    %p377 = scmp.eq.s32.totalorder %s24, 1
    %p378 = scmp.ne.s32.totalorder %s373, %s375
    %p379 = scmp.eq.s32.totalorder %s24, 0
    %p380 = por %p378, %p379
    %p381 = scmp.ne.s32.totalorder %s373, %s375
    %p382 = scmp.eq.s32.totalorder %s29, 1
    %p383 = por %p381, %p382
    %p384 = scmp.ne.s32.totalorder %s375, %s376
    %p385 = scmp.eq.s32.totalorder %s29, 0
    %p386 = por %p384, %p385
    %p387 = scmp.ne.s32.totalorder %s375, %s376
    %p388 = scmp.eq.s32.totalorder %s30, 1
    %p389 = por %p387, %p388
    %p391 = scmp.ne.s32.totalorder %s376, %s390
    %p392 = scmp.eq.s32.totalorder %s30, 0
    %p393 = por %p391, %p392
    %s395 = sadd.s32 %s394, 1
    %p398 = scmp.eq.s32.totalorder %s24, 1
    %p399 = scmp.ne.s32.totalorder %s394, %s396
    %p400 = scmp.eq.s32.totalorder %s24, 0
    %p401 = por %p399, %p400
    %p402 = scmp.ne.s32.totalorder %s394, %s396
    %p403 = scmp.eq.s32.totalorder %s29, 1
    %p404 = por %p402, %p403
    %p405 = scmp.ne.s32.totalorder %s396, %s397
    %p406 = scmp.eq.s32.totalorder %s29, 0
    %p407 = por %p405, %p406
    %p408 = scmp.ne.s32.totalorder %s396, %s397
    %p409 = scmp.eq.s32.totalorder %s30, 1
    %p410 = por %p408, %p409
    %p412 = scmp.ne.s32.totalorder %s397, %s411
    %p413 = scmp.eq.s32.totalorder %s30, 0
    %p414 = por %p412, %p413
    %s415 = ssub.s32 %s24, %s31
    %p416 = scmp.eq.s32.totalorder %s415, 0
    %s418 = sadd.s32 %s417, 1
    %s419 = scalar_select %p416, %s417, %s418
    %p422 = pneg %p416
    %p423 = scmp.eq.s32.totalorder %s24, 1
    %p424 = por %p422, %p423
    %p425 = scmp.ne.s32.totalorder %s417, %s420
    %p426 = scmp.eq.s32.totalorder %s24, 0
    %p427 = por %p425, %p426
    %p428 = scmp.ne.s32.totalorder %s417, %s420
    %p429 = scmp.eq.s32.totalorder %s29, 1
    %p430 = por %p428, %p429
    %p431 = scmp.ne.s32.totalorder %s420, %s421
    %p432 = scmp.eq.s32.totalorder %s29, 0
    %p433 = por %p431, %p432
    %p434 = scmp.ne.s32.totalorder %s420, %s421
    %p435 = scmp.eq.s32.totalorder %s30, 1
    %p436 = por %p434, %p435
    %p438 = scmp.ne.s32.totalorder %s421, %s437
    %p439 = scmp.eq.s32.totalorder %s30, 0
    %p440 = por %p438, %p439
    %p441 = scmp.le.s32.totalorder 1, %s24
    %p442 = scmp.lt.s32.totalorder %s24, 3
    %p443 = pnand %p441, %p442
    %p444 = pneg %p443
    // Predicated region
    $region9: #{masked_predictor_forward.5} parent=5 // pred_check
      _
    $region10: #{masked_predictor_forward.5} parent=5 // pred_check_branch
      %446 = sbr.rel (%p443) target = $region12
    $region11: #{masked_predictor_forward.5} parent=5 // pred_region
      %s447 = ssub.s32 %s24, 1
      // Predicated region
      $region13: #{masked_predictor_forward.5} parent=11 // pred_check
        %p448 = pneg %p71
      $region14: #{masked_predictor_forward.5} parent=11 // pred_check_branch
        %450 = sbr.rel (%p448) target = $region16
      $region15: #{masked_predictor_forward.5} parent=11 // pred_region
        _
      $region16: #{masked_predictor_forward.5} parent=11 // pred_fallthru
        _
      // Predicated region
      $region17: #{masked_predictor_forward.5} parent=11 // pred_check
        %p451 = pneg %p92
      $region18: #{masked_predictor_forward.5} parent=11 // pred_check_branch
        %453 = sbr.rel (%p451) target = $region20
      $region19: #{masked_predictor_forward.5} parent=11 // pred_region
        _
      $region20: #{masked_predictor_forward.5} parent=11 // pred_fallthru
        _
      // Predicated region
      $region21: #{masked_predictor_forward.5} parent=11 // pred_check
        %p454 = pneg %p113
      $region22: #{masked_predictor_forward.5} parent=11 // pred_check_branch
        %456 = sbr.rel (%p454) target = $region24
      $region23: #{masked_predictor_forward.5} parent=11 // pred_region
        _
      $region24: #{masked_predictor_forward.5} parent=11 // pred_fallthru
        _
      // Predicated region
      $region25: #{masked_predictor_forward.5} parent=11 // pred_check
        %p457 = pneg %p134
      $region26: #{masked_predictor_forward.5} parent=11 // pred_check_branch
        %459 = sbr.rel (%p457) target = $region28
      $region27: #{masked_predictor_forward.5} parent=11 // pred_region
        _
      $region28: #{masked_predictor_forward.5} parent=11 // pred_fallthru
        _
      // Predicated region
      $region29: #{masked_predictor_forward.5} parent=11 // pred_check
        %p460 = pneg %p155
      $region30: #{masked_predictor_forward.5} parent=11 // pred_check_branch
        %462 = sbr.rel (%p460) target = $region32
      $region31: #{masked_predictor_forward.5} parent=11 // pred_region
        _
      $region32: #{masked_predictor_forward.5} parent=11 // pred_fallthru
        _
      // Predicated region
      $region33: #{masked_predictor_forward.5} parent=11 // pred_check
        %p463 = pneg %p176
      $region34: #{masked_predictor_forward.5} parent=11 // pred_check_branch
        %465 = sbr.rel (%p463) target = $region36
      $region35: #{masked_predictor_forward.5} parent=11 // pred_region
        _
      $region36: #{masked_predictor_forward.5} parent=11 // pred_fallthru
        _
      // Predicated region
      $region37: #{masked_predictor_forward.5} parent=11 // pred_check
        %p466 = pneg %p197
      $region38: #{masked_predictor_forward.5} parent=11 // pred_check_branch
        %468 = sbr.rel (%p466) target = $region40
      $region39: #{masked_predictor_forward.5} parent=11 // pred_region
        _
      $region40: #{masked_predictor_forward.5} parent=11 // pred_fallthru
        _
      // Predicated region
      $region41: #{masked_predictor_forward.5} parent=11 // pred_check
        %p469 = pneg %p218
      $region42: #{masked_predictor_forward.5} parent=11 // pred_check_branch
        %471 = sbr.rel (%p469) target = $region44
      $region43: #{masked_predictor_forward.5} parent=11 // pred_region
        _
      $region44: #{masked_predictor_forward.5} parent=11 // pred_fallthru
        _
      // Predicated region
      $region45: #{masked_predictor_forward.5} parent=11 // pred_check
        %p472 = pneg %p239
      $region46: #{masked_predictor_forward.5} parent=11 // pred_check_branch
        %474 = sbr.rel (%p472) target = $region48
      $region47: #{masked_predictor_forward.5} parent=11 // pred_region
        _
      $region48: #{masked_predictor_forward.5} parent=11 // pred_fallthru
        _
      // Predicated region
      $region49: #{masked_predictor_forward.5} parent=11 // pred_check
        %p475 = pneg %p260
      $region50: #{masked_predictor_forward.5} parent=11 // pred_check_branch
        %477 = sbr.rel (%p475) target = $region52
      $region51: #{masked_predictor_forward.5} parent=11 // pred_region
        _
      $region52: #{masked_predictor_forward.5} parent=11 // pred_fallthru
        _
      // Predicated region
      $region53: #{masked_predictor_forward.5} parent=11 // pred_check
        %p478 = pneg %p281
      $region54: #{masked_predictor_forward.5} parent=11 // pred_check_branch
        %480 = sbr.rel (%p478) target = $region56
      $region55: #{masked_predictor_forward.5} parent=11 // pred_region
        _
      $region56: #{masked_predictor_forward.5} parent=11 // pred_fallthru
        _
      // Predicated region
      $region57: #{masked_predictor_forward.5} parent=11 // pred_check
        %p481 = pneg %p302
      $region58: #{masked_predictor_forward.5} parent=11 // pred_check_branch
        %483 = sbr.rel (%p481) target = $region60
      $region59: #{masked_predictor_forward.5} parent=11 // pred_region
        _
      $region60: #{masked_predictor_forward.5} parent=11 // pred_fallthru
        _
      // Predicated region
      $region61: #{masked_predictor_forward.5} parent=11 // pred_check
        %p484 = pneg %p323
      $region62: #{masked_predictor_forward.5} parent=11 // pred_check_branch
        %486 = sbr.rel (%p484) target = $region64
      $region63: #{masked_predictor_forward.5} parent=11 // pred_region
        _
      $region64: #{masked_predictor_forward.5} parent=11 // pred_fallthru
        _
      // Predicated region
      $region65: #{masked_predictor_forward.5} parent=11 // pred_check
        %p487 = pneg %p344
      $region66: #{masked_predictor_forward.5} parent=11 // pred_check_branch
        %489 = sbr.rel (%p487) target = $region68
      $region67: #{masked_predictor_forward.5} parent=11 // pred_region
        _
      $region68: #{masked_predictor_forward.5} parent=11 // pred_fallthru
        _
      // Predicated region
      $region69: #{masked_predictor_forward.5} parent=11 // pred_check
        %p490 = pneg %p365
      $region70: #{masked_predictor_forward.5} parent=11 // pred_check_branch
        %492 = sbr.rel (%p490) target = $region72
      $region71: #{masked_predictor_forward.5} parent=11 // pred_region
        _
      $region72: #{masked_predictor_forward.5} parent=11 // pred_fallthru
        _
      // Predicated region
      $region73: #{masked_predictor_forward.5} parent=11 // pred_check
        %p493 = pneg %p386
      $region74: #{masked_predictor_forward.5} parent=11 // pred_check_branch
        %495 = sbr.rel (%p493) target = $region76
      $region75: #{masked_predictor_forward.5} parent=11 // pred_region
        _
      $region76: #{masked_predictor_forward.5} parent=11 // pred_fallthru
        _
      // Predicated region
      $region77: #{masked_predictor_forward.5} parent=11 // pred_check
        %p496 = pneg %p407
      $region78: #{masked_predictor_forward.5} parent=11 // pred_check_branch
        %498 = sbr.rel (%p496) target = $region80
      $region79: #{masked_predictor_forward.5} parent=11 // pred_region
        _
      $region80: #{masked_predictor_forward.5} parent=11 // pred_fallthru
        _
    $region12: #{masked_predictor_forward.5} parent=5 // pred_fallthru
      _
    %p499 = scmp.lt.s32.totalorder %s24, 2
    // Predicated region
    $region81: #{masked_predictor_forward.5} parent=5 // pred_check
      %p500 = pneg %p499
    $region82: #{masked_predictor_forward.5} parent=5 // pred_check_branch
      %502 = sbr.rel (%p500) target = $region84
    $region83: #{masked_predictor_forward.5} parent=5 // pred_region
      // Predicated region
      $region85: #{masked_predictor_forward.5} parent=83 // pred_check
        %p503 = pneg %p44
      $region86: #{masked_predictor_forward.5} parent=83 // pred_check_branch
        %505 = sbr.rel (%p503) target = $region88
      $region87: #{masked_predictor_forward.5} parent=83 // pred_region
        %p506 = scmp.lt.s32.totalorder %s24, 1
        %s507 = scalar_select %p506, %s24, 1
        %s508 = smul.addr %s507, 2
        %s509 = smul.addr %s508, 4
        %s510 = scalar_lea.vmem %s0, %s509
      $region88: #{masked_predictor_forward.5} parent=83 // pred_fallthru
        _
    $region84: #{masked_predictor_forward.5} parent=5 // pred_fallthru
      _
    %p511 = scmp.le.s32.totalorder 1, %s24
    %p512 = scmp.lt.s32.totalorder %s24, 3
    %p513 = pnand %p511, %p512
    %p514 = pneg %p513
    // Predicated region
    $region89: #{masked_predictor_forward.5} parent=5 // pred_check
      _
    $region90: #{masked_predictor_forward.5} parent=5 // pred_check_branch
      %516 = sbr.rel (%p513) target = $region92
    $region91: #{masked_predictor_forward.5} parent=5 // pred_region
      %s517 = ssub.s32 %s24, 1
      %p518 = scmp.lt.s32.totalorder %s29, 1
      %s519 = scalar_select %p518, %s29, 1
      %s520 = smul.addr %s519, 2
      %s521 = smul.addr %s520, 4
      %s522 = scalar_lea.vmem %s0, %s521
      %p523 = pneg %p50
      %p524 = pneg %p47
      %p525 = pneg %p71
      %p526 = pneg %p68
      %p527 = pneg %p92
      %p528 = pneg %p89
      %p529 = pneg %p113
      %p530 = pneg %p110
      %p531 = pneg %p134
      %p532 = pneg %p131
      %p533 = pneg %p155
      %p534 = pneg %p152
      %p535 = pneg %p176
      %p536 = pneg %p173
      %p537 = pneg %p197
      %p538 = pneg %p194
      %p539 = pneg %p218
      %p540 = pneg %p215
      %p541 = pneg %p239
      %p542 = pneg %p236
      %p543 = pneg %p260
      %p544 = pneg %p257
      %p545 = pneg %p281
      %p546 = pneg %p278
      %p547 = pneg %p302
      %p548 = pneg %p299
      %p549 = pneg %p323
      %p550 = pneg %p320
      %p551 = pneg %p344
      %p552 = pneg %p341
      %p553 = pneg %p365
      %p554 = pneg %p362
      %p555 = pneg %p386
      %p556 = pneg %p383
      %p557 = pneg %p407
      %p558 = pneg %p404
      %p559 = pneg %p433
      %p560 = pneg %p430
      %p561 = scmp.lt.s32.totalorder %s29, 1
      %s562 = scalar_select %p561, %s29, 1
      %s563 = smul.addr %s562, 2
      %s564 = smul.addr %s563, 4
      %s565 = scalar_lea.vmem %s18, %s564
      %p566 = scmp.lt.s32.totalorder %s29, 1
      %s567 = scalar_select %p566, %s29, 1
      %s568 = smul.addr %s567, 2
      %s569 = smul.addr %s568, 4
      %s570 = scalar_lea.vmem %s0, %s569
      %p571 = scmp.lt.s32.totalorder %s29, 1
      %s572 = scalar_select %p571, %s29, 1
      %s573 = smul.addr %s572, 2
      %s574 = smul.addr %s573, 4
      %s575 = scalar_lea.vmem %s18, %s574
      %v577 = vld [vmem:[%s570] sm:$0xf]
      %v578 = vld [vmem:[%s570 + $0x4] sm:$0xf]
      %v579 = vunpack.c.l.bf16 %v577
      %v580 = vunpack.c.l.bf16 %v578
      %v581 = vld [vmem:[%s1] sm:$0xff]
      %v582 = vld [vmem:[%s1 + $0x8] sm:$0xff]
      %v583 = vadd.f32 %v579, %v581
      %v584 = vadd.f32 %v580, %v582
      %v585 = vld [vmem:[%s2] sm:$0x1]
      %v586 = vmul.f32 %v583, %v583
      %v587 = vmul.f32 %v584, %v584
      %vm588 = vcmask 523264
      %v589 = vsel %vm588, %v586, 0.0
      %590 = vadd.xlane.f32.xlu0 %v589
      %v591 = vpop.xlane.xlu0 %590
      %v592 = vsel %vm588, %v587, 0.0
      %593 = vadd.xlane.f32.xlu0 %v592
      %v594 = vpop.xlane.xlu0 %593
      %v595 = vrcp.pop 64.0
      %v596 = vmul.f32 %v591, %v595
      %v597 = vmul.f32 %v594, %v595
      %v598 = vadd.f32 %v596, 1e-05
      %v599 = vadd.f32 %v597, 1e-05
      %v600 = vrsqrt.pop %v598
      %v601 = vrsqrt.pop %v599
      %v602 = vmul.f32 %v583, %v600
      %v603 = vmul.f32 %v584, %v601
      %v605 = vlaneseq
      %v606 = vshrl.u32 %v605, 7
      %v607 = vsub.s32 0, %v606
      %v608 = vrot.slane %v585, %v607
      %v610 = vmul.f32 %v602, %v608
      %v611 = vmul.f32 %v603, %v608
      %v612 = vpack.c.bf16 %v611, %v610
      %v613 = vld [vmem:[%s3] sm:$0xf]
      %v614 = vld [vmem:[%s3 + $0x4] sm:$0xf]
      %v615 = vld [vmem:[%s3 + $0x8] sm:$0xf]
      %v616 = vld [vmem:[%s3 + $0xc] sm:$0xf]
      %v617 = vld [vmem:[%s3 + $0x10] sm:$0xf]
      %v618 = vld [vmem:[%s3 + $0x14] sm:$0xf]
      %v619 = vld [vmem:[%s3 + $0x18] sm:$0xf]
      %v620 = vld [vmem:[%s3 + $0x1c] sm:$0xf]
      %v621 = vld [vmem:[%s6] sm:$0x1]
      %v623 = vlaneseq
      %v624 = vshrl.u32 %v623, 7
      %v625 = vsub.s32 0, %v624
      %v626 = vrot.slane %v621, %v625
      %v636 = vunpack.c.l.b16 %v613
      %v637 = vunpack.c.l.b16 %v614
      %v638 = vunpack.c.l.b16 %v615
      %v639 = vunpack.c.l.b16 %v616
      %v640 = vunpack.c.l.b16 %v617
      %v641 = vunpack.c.l.b16 %v618
      %v642 = vunpack.c.l.b16 %v619
      %v643 = vunpack.c.l.b16 %v620
      %v644 = vpack.c.b16 %v637, %v636
      %v645 = vpack.c.b16 %v639, %v638
      %v646 = vpack.c.b16 %v641, %v640
      %v647 = vpack.c.b16 %v643, %v642
      %v653 = vsel %vm588, %v612, 0
      %655 = vmatprep.subr.bf16.mxu0 0
      %656 = vmatpush1.bf16.msra.mxu0 0
      %657 = vmatprep.subr.bf16.mxu0 0
      %658 = vmatpush1.bf16.msra.mxu0 0
      %659 = vmatprep.subr.bf16.mxu0 0
      %660 = vmatpush1.bf16.msra.mxu0 0
      %661 = vmatprep.subr.bf16.mxu0 0
      %662 = vmatpush1.bf16.msra.mxu0 0
      %663 = vmatprep.subr.bf16.mxu0 0
      %664 = vmatpush1.bf16.msra.mxu0 %v647
      %665 = vmatprep.subr.bf16.mxu0 0
      %666 = vmatpush1.bf16.msra.mxu0 %v646
      %667 = vmatprep.subr.bf16.mxu0 0
      %668 = vmatpush1.bf16.msra.mxu0 %v645
      %669 = vmatprep.subr.bf16.mxu0 0
      %670 = vmatpush1.bf16.msra.mxu0 %v644
      %671 = vmatprep.subr.bf16.mxu0 0
      %672 = vmatpush2.bf16.msra.mxu0 0
      %673 = vmatprep.subr.bf16.mxu0 0
      %674 = vmatpush2.bf16.msra.mxu0 0
      %675 = vmatprep.subr.bf16.mxu0 0
      %676 = vmatpush2.bf16.msra.mxu0 0
      %677 = vmatprep.subr.bf16.mxu0 0
      %678 = vmatpush2.bf16.msra.mxu0 0
      %679 = vmatprep.subr.bf16.mxu0 0
      %680 = vmatpush2.bf16.msra.mxu0 0
      %681 = vmatprep.subr.bf16.mxu0 0
      %682 = vmatpush2.bf16.msra.mxu0 0
      %683 = vmatprep.subr.bf16.mxu0 0
      %684 = vmatpush2.bf16.msra.mxu0 0
      %685 = vmatprep.subr.bf16.mxu0 0
      %686 = vmatpush2.bf16.msra.mxu0 0
      %687 = vmatprep.mubr.bf16.mxu0 0
      %688 = vmatmul.mubr.bf16.gmra.mxu0 %v653
      %v689 = vpop.f32.mrf.mxu0
      %v690 = vadd.f32 %v626, %v689
      %v691 = vpop.f32.mrf.mxu0
      %v692 = vpop.f32.mrf.mxu0
      %v693 = vadd.f32 %v626, %v692
      %v694 = vpop.f32.mrf.mxu0
      %695 = vdwg.mxu0
      %v696 = vld [vmem:[%s4] sm:$0xf]
      %v697 = vld [vmem:[%s4 + $0x4] sm:$0xf]
      %v698 = vld [vmem:[%s4 + $0x8] sm:$0xf]
      %v699 = vld [vmem:[%s4 + $0xc] sm:$0xf]
      %v700 = vld [vmem:[%s4 + $0x10] sm:$0xf]
      %v701 = vld [vmem:[%s4 + $0x14] sm:$0xf]
      %v702 = vld [vmem:[%s4 + $0x18] sm:$0xf]
      %v703 = vld [vmem:[%s4 + $0x1c] sm:$0xf]
      %v704 = vld [vmem:[%s7] sm:$0x1]
      %v706 = vlaneseq
      %v707 = vshrl.u32 %v706, 7
      %v708 = vsub.s32 0, %v707
      %v709 = vrot.slane %v704, %v708
      %v719 = vunpack.c.l.b16 %v696
      %v720 = vunpack.c.l.b16 %v697
      %v721 = vunpack.c.l.b16 %v698
      %v722 = vunpack.c.l.b16 %v699
      %v723 = vunpack.c.l.b16 %v700
      %v724 = vunpack.c.l.b16 %v701
      %v725 = vunpack.c.l.b16 %v702
      %v726 = vunpack.c.l.b16 %v703
      %v727 = vpack.c.b16 %v720, %v719
      %v728 = vpack.c.b16 %v722, %v721
      %v729 = vpack.c.b16 %v724, %v723
      %v730 = vpack.c.b16 %v726, %v725
      %735 = vmatprep.subr.bf16.mxu0 0
      %736 = vmatpush1.bf16.msra.mxu0 0
      %737 = vmatprep.subr.bf16.mxu0 0
      %738 = vmatpush1.bf16.msra.mxu0 0
      %739 = vmatprep.subr.bf16.mxu0 0
      %740 = vmatpush1.bf16.msra.mxu0 0
      %741 = vmatprep.subr.bf16.mxu0 0
      %742 = vmatpush1.bf16.msra.mxu0 0
      %743 = vmatprep.subr.bf16.mxu0 0
      %744 = vmatpush1.bf16.msra.mxu0 %v730
      %745 = vmatprep.subr.bf16.mxu0 0
      %746 = vmatpush1.bf16.msra.mxu0 %v729
      %747 = vmatprep.subr.bf16.mxu0 0
      %748 = vmatpush1.bf16.msra.mxu0 %v728
      %749 = vmatprep.subr.bf16.mxu0 0
      %750 = vmatpush1.bf16.msra.mxu0 %v727
      %751 = vmatprep.subr.bf16.mxu0 0
      %752 = vmatpush2.bf16.msra.mxu0 0
      %753 = vmatprep.subr.bf16.mxu0 0
      %754 = vmatpush2.bf16.msra.mxu0 0
      %755 = vmatprep.subr.bf16.mxu0 0
      %756 = vmatpush2.bf16.msra.mxu0 0
      %757 = vmatprep.subr.bf16.mxu0 0
      %758 = vmatpush2.bf16.msra.mxu0 0
      %759 = vmatprep.subr.bf16.mxu0 0
      %760 = vmatpush2.bf16.msra.mxu0 0
      %761 = vmatprep.subr.bf16.mxu0 0
      %762 = vmatpush2.bf16.msra.mxu0 0
      %763 = vmatprep.subr.bf16.mxu0 0
      %764 = vmatpush2.bf16.msra.mxu0 0
      %765 = vmatprep.subr.bf16.mxu0 0
      %766 = vmatpush2.bf16.msra.mxu0 0
      %767 = vmatprep.mubr.bf16.mxu0 0
      %768 = vmatmul.mubr.bf16.gmra.mxu0 %v653
      %v769 = vpop.f32.mrf.mxu0
      %v770 = vadd.f32 %v709, %v769
      %v771 = vpop.f32.mrf.mxu0
      %v772 = vpop.f32.mrf.mxu0
      %v773 = vadd.f32 %v709, %v772
      %v774 = vpop.f32.mrf.mxu0
      %775 = vdwg.mxu0
      %v776 = vld [vmem:[%s5] sm:$0xf]
      %v777 = vld [vmem:[%s5 + $0x4] sm:$0xf]
      %v778 = vld [vmem:[%s5 + $0x8] sm:$0xf]
      %v779 = vld [vmem:[%s5 + $0xc] sm:$0xf]
      %v780 = vld [vmem:[%s5 + $0x10] sm:$0xf]
      %v781 = vld [vmem:[%s5 + $0x14] sm:$0xf]
      %v782 = vld [vmem:[%s5 + $0x18] sm:$0xf]
      %v783 = vld [vmem:[%s5 + $0x1c] sm:$0xf]
      %v784 = vld [vmem:[%s8] sm:$0x1]
      %v786 = vlaneseq
      %v787 = vshrl.u32 %v786, 7
      %v788 = vsub.s32 0, %v787
      %v789 = vrot.slane %v784, %v788
      %v799 = vunpack.c.l.b16 %v776
      %v800 = vunpack.c.l.b16 %v777
      %v801 = vunpack.c.l.b16 %v778
      %v802 = vunpack.c.l.b16 %v779
      %v803 = vunpack.c.l.b16 %v780
      %v804 = vunpack.c.l.b16 %v781
      %v805 = vunpack.c.l.b16 %v782
      %v806 = vunpack.c.l.b16 %v783
      %v807 = vpack.c.b16 %v800, %v799
      %v808 = vpack.c.b16 %v802, %v801
      %v809 = vpack.c.b16 %v804, %v803
      %v810 = vpack.c.b16 %v806, %v805
      %815 = vmatprep.subr.bf16.mxu0 0
      %816 = vmatpush1.bf16.msra.mxu0 0
      %817 = vmatprep.subr.bf16.mxu0 0
      %818 = vmatpush1.bf16.msra.mxu0 0
      %819 = vmatprep.subr.bf16.mxu0 0
      %820 = vmatpush1.bf16.msra.mxu0 0
      %821 = vmatprep.subr.bf16.mxu0 0
      %822 = vmatpush1.bf16.msra.mxu0 0
      %823 = vmatprep.subr.bf16.mxu0 0
      %824 = vmatpush1.bf16.msra.mxu0 %v810
      %825 = vmatprep.subr.bf16.mxu0 0
      %826 = vmatpush1.bf16.msra.mxu0 %v809
      %827 = vmatprep.subr.bf16.mxu0 0
      %828 = vmatpush1.bf16.msra.mxu0 %v808
      %829 = vmatprep.subr.bf16.mxu0 0
      %830 = vmatpush1.bf16.msra.mxu0 %v807
      %831 = vmatprep.subr.bf16.mxu0 0
      %832 = vmatpush2.bf16.msra.mxu0 0
      %833 = vmatprep.subr.bf16.mxu0 0
      %834 = vmatpush2.bf16.msra.mxu0 0
      %835 = vmatprep.subr.bf16.mxu0 0
      %836 = vmatpush2.bf16.msra.mxu0 0
      %837 = vmatprep.subr.bf16.mxu0 0
      %838 = vmatpush2.bf16.msra.mxu0 0
      %839 = vmatprep.subr.bf16.mxu0 0
      %840 = vmatpush2.bf16.msra.mxu0 0
      %841 = vmatprep.subr.bf16.mxu0 0
      %842 = vmatpush2.bf16.msra.mxu0 0
      %843 = vmatprep.subr.bf16.mxu0 0
      %844 = vmatpush2.bf16.msra.mxu0 0
      %845 = vmatprep.subr.bf16.mxu0 0
      %846 = vmatpush2.bf16.msra.mxu0 0
      %847 = vmatprep.mubr.bf16.mxu0 0
      %848 = vmatmul.mubr.bf16.gmra.mxu0 %v653
      %v849 = vpop.f32.mrf.mxu0
      %v850 = vadd.f32 %v789, %v849
      %v851 = vpop.f32.mrf.mxu0
      %v852 = vpop.f32.mrf.mxu0
      %v853 = vadd.f32 %v789, %v852
      %v854 = vpop.f32.mrf.mxu0
      %855 = vdwg.mxu0
      %858 = vrot.lane.b32.xlu0 %v690, 96
      %v859 = vpop.permute.xlu0 %858
      %860 = vrot.lane.b32.xlu0 %v693, 96
      %v861 = vpop.permute.xlu0 %860
      %v864 = vcombine.high %v690, 0.0
      %v866 = vunpack.c.l.s4 1983009808
      %v867 = vunpack.c.0.s8 %v866
      %v868 = vlaneseq
      %v869 = vshrl.u32 %v868, 7
      %v870 = vsub.s32 %v867, %v869
      %v871 = vrot.slane %v690, %v870
      %v873 = vunpack.c.l.s4 1983009808
      %v874 = vunpack.c.0.s8 %v873
      %v875 = vlaneseq
      %v876 = vshrl.u32 %v875, 7
      %v877 = vsub.s32 %v874, %v876
      %v878 = vrot.slane %v864, %v877
      %v879 = vcombine.high %v859, 0.0
      %v881 = vunpack.c.l.s4 1983009808
      %v882 = vunpack.c.0.s8 %v881
      %v883 = vlaneseq
      %v884 = vshrl.u32 %v883, 7
      %v885 = vsub.s32 %v882, %v884
      %v886 = vrot.slane %v859, %v885
      %v888 = vunpack.c.l.s4 1983009808
      %v889 = vunpack.c.0.s8 %v888
      %v890 = vlaneseq
      %v891 = vshrl.u32 %v890, 7
      %v892 = vsub.s32 %v889, %v891
      %v893 = vrot.slane %v879, %v892
      %v894 = vcombine.low %v871, %v886
      %v895 = vcombine.high %v871, %v886
      %v897 = vunpack.c.l.s4 1934713408
      %v898 = vunpack.c.0.s8 %v897
      %v899 = vlaneseq
      %v900 = vshrl.u32 %v899, 7
      %v901 = vsub.s32 %v898, %v900
      %v902 = vrot.slane %v894, %v901
      %v904 = vunpack.c.l.s4 1934713408
      %v905 = vunpack.c.0.s8 %v904
      %v906 = vlaneseq
      %v907 = vshrl.u32 %v906, 7
      %v908 = vsub.s32 %v905, %v907
      %v909 = vrot.slane %v895, %v908
      %v910 = vcombine.low %v878, %v893
      %v911 = vcombine.high %v878, %v893
      %v913 = vunpack.c.l.s4 1934713408
      %v914 = vunpack.c.0.s8 %v913
      %v915 = vlaneseq
      %v916 = vshrl.u32 %v915, 7
      %v917 = vsub.s32 %v914, %v916
      %v918 = vrot.slane %v910, %v917
      %v920 = vunpack.c.l.s4 1934713408
      %v921 = vunpack.c.0.s8 %v920
      %v922 = vlaneseq
      %v923 = vshrl.u32 %v922, 7
      %v924 = vsub.s32 %v921, %v923
      %v925 = vrot.slane %v911, %v924
      %v926 = vcombine.high %v902, 0.0
      %v927 = vcombine.high %v909, 0.0
      %v928 = vcombine.high %v918, 0.0
      %v929 = vcombine.high %v925, 0.0
      %v930 = vcombine.high %v693, 0.0
      %v932 = vunpack.c.l.s4 1983009808
      %v933 = vunpack.c.0.s8 %v932
      %v934 = vlaneseq
      %v935 = vshrl.u32 %v934, 7
      %v936 = vsub.s32 %v933, %v935
      %v937 = vrot.slane %v693, %v936
      %v939 = vunpack.c.l.s4 1983009808
      %v940 = vunpack.c.0.s8 %v939
      %v941 = vlaneseq
      %v942 = vshrl.u32 %v941, 7
      %v943 = vsub.s32 %v940, %v942
      %v944 = vrot.slane %v930, %v943
      %v945 = vcombine.high %v861, 0.0
      %v947 = vunpack.c.l.s4 1983009808
      %v948 = vunpack.c.0.s8 %v947
      %v949 = vlaneseq
      %v950 = vshrl.u32 %v949, 7
      %v951 = vsub.s32 %v948, %v950
      %v952 = vrot.slane %v861, %v951
      %v954 = vunpack.c.l.s4 1983009808
      %v955 = vunpack.c.0.s8 %v954
      %v956 = vlaneseq
      %v957 = vshrl.u32 %v956, 7
      %v958 = vsub.s32 %v955, %v957
      %v959 = vrot.slane %v945, %v958
      %v960 = vcombine.low %v937, %v952
      %v961 = vcombine.high %v937, %v952
      %v963 = vunpack.c.l.s4 1934713408
      %v964 = vunpack.c.0.s8 %v963
      %v965 = vlaneseq
      %v966 = vshrl.u32 %v965, 7
      %v967 = vsub.s32 %v964, %v966
      %v968 = vrot.slane %v960, %v967
      %v970 = vunpack.c.l.s4 1934713408
      %v971 = vunpack.c.0.s8 %v970
      %v972 = vlaneseq
      %v973 = vshrl.u32 %v972, 7
      %v974 = vsub.s32 %v971, %v973
      %v975 = vrot.slane %v961, %v974
      %v976 = vcombine.low %v944, %v959
      %v977 = vcombine.high %v944, %v959
      %v979 = vunpack.c.l.s4 1934713408
      %v980 = vunpack.c.0.s8 %v979
      %v981 = vlaneseq
      %v982 = vshrl.u32 %v981, 7
      %v983 = vsub.s32 %v980, %v982
      %v984 = vrot.slane %v976, %v983
      %v986 = vunpack.c.l.s4 1934713408
      %v987 = vunpack.c.0.s8 %v986
      %v988 = vlaneseq
      %v989 = vshrl.u32 %v988, 7
      %v990 = vsub.s32 %v987, %v989
      %v991 = vrot.slane %v977, %v990
      %v992 = vcombine.high %v968, 0.0
      %v993 = vcombine.high %v975, 0.0
      %v994 = vcombine.high %v984, 0.0
      %v995 = vcombine.high %v991, 0.0
      %v996 = vcombine.low %v902, %v909
      %v998 = vunpack.c.l.s4 1983009808
      %v999 = vunpack.c.0.s8 %v998
      %v1000 = vlaneseq
      %v1001 = vshrl.u32 %v1000, 7
      %v1002 = vsub.s32 %v999, %v1001
      %v1003 = vrot.slane %v996, %v1002
      %v1004 = vcombine.low %v926, %v927
      %v1006 = vunpack.c.l.s4 1983009808
      %v1007 = vunpack.c.0.s8 %v1006
      %v1008 = vlaneseq
      %v1009 = vshrl.u32 %v1008, 7
      %v1010 = vsub.s32 %v1007, %v1009
      %v1011 = vrot.slane %v1004, %v1010
      %v1012 = vcombine.low %v918, %v925
      %v1014 = vunpack.c.l.s4 1983009808
      %v1015 = vunpack.c.0.s8 %v1014
      %v1016 = vlaneseq
      %v1017 = vshrl.u32 %v1016, 7
      %v1018 = vsub.s32 %v1015, %v1017
      %v1019 = vrot.slane %v1012, %v1018
      %v1020 = vcombine.low %v928, %v929
      %v1022 = vunpack.c.l.s4 1983009808
      %v1023 = vunpack.c.0.s8 %v1022
      %v1024 = vlaneseq
      %v1025 = vshrl.u32 %v1024, 7
      %v1026 = vsub.s32 %v1023, %v1025
      %v1027 = vrot.slane %v1020, %v1026
      %v1028 = vcombine.low %v1003, %v1011
      %v1030 = vunpack.c.l.s4 1934713408
      %v1031 = vunpack.c.0.s8 %v1030
      %v1032 = vlaneseq
      %v1033 = vshrl.u32 %v1032, 7
      %v1034 = vsub.s32 %v1031, %v1033
      %v1035 = vrot.slane %v1028, %v1034
      %v1036 = vcombine.low %v1019, %v1027
      %v1038 = vunpack.c.l.s4 1934713408
      %v1039 = vunpack.c.0.s8 %v1038
      %v1040 = vlaneseq
      %v1041 = vshrl.u32 %v1040, 7
      %v1042 = vsub.s32 %v1039, %v1041
      %v1043 = vrot.slane %v1036, %v1042
      %v1044 = vcombine.low %v1035, %v1043
      %v1045 = vcombine.high %v1035, %v1043
      %v1046 = vcombine.low %v968, %v975
      %v1048 = vunpack.c.l.s4 1983009808
      %v1049 = vunpack.c.0.s8 %v1048
      %v1050 = vlaneseq
      %v1051 = vshrl.u32 %v1050, 7
      %v1052 = vsub.s32 %v1049, %v1051
      %v1053 = vrot.slane %v1046, %v1052
      %v1054 = vcombine.low %v992, %v993
      %v1056 = vunpack.c.l.s4 1983009808
      %v1057 = vunpack.c.0.s8 %v1056
      %v1058 = vlaneseq
      %v1059 = vshrl.u32 %v1058, 7
      %v1060 = vsub.s32 %v1057, %v1059
      %v1061 = vrot.slane %v1054, %v1060
      %v1062 = vcombine.low %v984, %v991
      %v1064 = vunpack.c.l.s4 1983009808
      %v1065 = vunpack.c.0.s8 %v1064
      %v1066 = vlaneseq
      %v1067 = vshrl.u32 %v1066, 7
      %v1068 = vsub.s32 %v1065, %v1067
      %v1069 = vrot.slane %v1062, %v1068
      %v1070 = vcombine.low %v994, %v995
      %v1072 = vunpack.c.l.s4 1983009808
      %v1073 = vunpack.c.0.s8 %v1072
      %v1074 = vlaneseq
      %v1075 = vshrl.u32 %v1074, 7
      %v1076 = vsub.s32 %v1073, %v1075
      %v1077 = vrot.slane %v1070, %v1076
      %v1078 = vcombine.low %v1053, %v1061
      %v1080 = vunpack.c.l.s4 1934713408
      %v1081 = vunpack.c.0.s8 %v1080
      %v1082 = vlaneseq
      %v1083 = vshrl.u32 %v1082, 7
      %v1084 = vsub.s32 %v1081, %v1083
      %v1085 = vrot.slane %v1078, %v1084
      %v1086 = vcombine.low %v1069, %v1077
      %v1088 = vunpack.c.l.s4 1934713408
      %v1089 = vunpack.c.0.s8 %v1088
      %v1090 = vlaneseq
      %v1091 = vshrl.u32 %v1090, 7
      %v1092 = vsub.s32 %v1089, %v1091
      %v1093 = vrot.slane %v1086, %v1092
      %v1094 = vcombine.low %v1085, %v1093
      %v1095 = vcombine.high %v1085, %v1093
      %v1096 = vpack.c.bf16 %v1094, %v1044
      %v1097 = vpack.c.bf16 %v1095, %v1045
      %1100 = vrot.lane.b32.xlu0 %v770, 96
      %v1101 = vpop.permute.xlu0 %1100
      %1102 = vrot.lane.b32.xlu0 %v773, 96
      %v1103 = vpop.permute.xlu0 %1102
      %v1106 = vcombine.high %v770, 0.0
      %v1108 = vunpack.c.l.s4 1983009808
      %v1109 = vunpack.c.0.s8 %v1108
      %v1110 = vlaneseq
      %v1111 = vshrl.u32 %v1110, 7
      %v1112 = vsub.s32 %v1109, %v1111
      %v1113 = vrot.slane %v770, %v1112
      %v1115 = vunpack.c.l.s4 1983009808
      %v1116 = vunpack.c.0.s8 %v1115
      %v1117 = vlaneseq
      %v1118 = vshrl.u32 %v1117, 7
      %v1119 = vsub.s32 %v1116, %v1118
      %v1120 = vrot.slane %v1106, %v1119
      %v1121 = vcombine.high %v1101, 0.0
      %v1123 = vunpack.c.l.s4 1983009808
      %v1124 = vunpack.c.0.s8 %v1123
      %v1125 = vlaneseq
      %v1126 = vshrl.u32 %v1125, 7
      %v1127 = vsub.s32 %v1124, %v1126
      %v1128 = vrot.slane %v1101, %v1127
      %v1130 = vunpack.c.l.s4 1983009808
      %v1131 = vunpack.c.0.s8 %v1130
      %v1132 = vlaneseq
      %v1133 = vshrl.u32 %v1132, 7
      %v1134 = vsub.s32 %v1131, %v1133
      %v1135 = vrot.slane %v1121, %v1134
      %v1136 = vcombine.low %v1113, %v1128
      %v1137 = vcombine.high %v1113, %v1128
      %v1139 = vunpack.c.l.s4 1934713408
      %v1140 = vunpack.c.0.s8 %v1139
      %v1141 = vlaneseq
      %v1142 = vshrl.u32 %v1141, 7
      %v1143 = vsub.s32 %v1140, %v1142
      %v1144 = vrot.slane %v1136, %v1143
      %v1146 = vunpack.c.l.s4 1934713408
      %v1147 = vunpack.c.0.s8 %v1146
      %v1148 = vlaneseq
      %v1149 = vshrl.u32 %v1148, 7
      %v1150 = vsub.s32 %v1147, %v1149
      %v1151 = vrot.slane %v1137, %v1150
      %v1152 = vcombine.low %v1120, %v1135
      %v1153 = vcombine.high %v1120, %v1135
      %v1155 = vunpack.c.l.s4 1934713408
      %v1156 = vunpack.c.0.s8 %v1155
      %v1157 = vlaneseq
      %v1158 = vshrl.u32 %v1157, 7
      %v1159 = vsub.s32 %v1156, %v1158
      %v1160 = vrot.slane %v1152, %v1159
      %v1162 = vunpack.c.l.s4 1934713408
      %v1163 = vunpack.c.0.s8 %v1162
      %v1164 = vlaneseq
      %v1165 = vshrl.u32 %v1164, 7
      %v1166 = vsub.s32 %v1163, %v1165
      %v1167 = vrot.slane %v1153, %v1166
      %v1168 = vcombine.high %v1144, 0.0
      %v1169 = vcombine.high %v1151, 0.0
      %v1170 = vcombine.high %v1160, 0.0
      %v1171 = vcombine.high %v1167, 0.0
      %v1172 = vcombine.high %v773, 0.0
      %v1174 = vunpack.c.l.s4 1983009808
      %v1175 = vunpack.c.0.s8 %v1174
      %v1176 = vlaneseq
      %v1177 = vshrl.u32 %v1176, 7
      %v1178 = vsub.s32 %v1175, %v1177
      %v1179 = vrot.slane %v773, %v1178
      %v1181 = vunpack.c.l.s4 1983009808
      %v1182 = vunpack.c.0.s8 %v1181
      %v1183 = vlaneseq
      %v1184 = vshrl.u32 %v1183, 7
      %v1185 = vsub.s32 %v1182, %v1184
      %v1186 = vrot.slane %v1172, %v1185
      %v1187 = vcombine.high %v1103, 0.0
      %v1189 = vunpack.c.l.s4 1983009808
      %v1190 = vunpack.c.0.s8 %v1189
      %v1191 = vlaneseq
      %v1192 = vshrl.u32 %v1191, 7
      %v1193 = vsub.s32 %v1190, %v1192
      %v1194 = vrot.slane %v1103, %v1193
      %v1196 = vunpack.c.l.s4 1983009808
      %v1197 = vunpack.c.0.s8 %v1196
      %v1198 = vlaneseq
      %v1199 = vshrl.u32 %v1198, 7
      %v1200 = vsub.s32 %v1197, %v1199
      %v1201 = vrot.slane %v1187, %v1200
      %v1202 = vcombine.low %v1179, %v1194
      %v1203 = vcombine.high %v1179, %v1194
      %v1205 = vunpack.c.l.s4 1934713408
      %v1206 = vunpack.c.0.s8 %v1205
      %v1207 = vlaneseq
      %v1208 = vshrl.u32 %v1207, 7
      %v1209 = vsub.s32 %v1206, %v1208
      %v1210 = vrot.slane %v1202, %v1209
      %v1212 = vunpack.c.l.s4 1934713408
      %v1213 = vunpack.c.0.s8 %v1212
      %v1214 = vlaneseq
      %v1215 = vshrl.u32 %v1214, 7
      %v1216 = vsub.s32 %v1213, %v1215
      %v1217 = vrot.slane %v1203, %v1216
      %v1218 = vcombine.low %v1186, %v1201
      %v1219 = vcombine.high %v1186, %v1201
      %v1221 = vunpack.c.l.s4 1934713408
      %v1222 = vunpack.c.0.s8 %v1221
      %v1223 = vlaneseq
      %v1224 = vshrl.u32 %v1223, 7
      %v1225 = vsub.s32 %v1222, %v1224
      %v1226 = vrot.slane %v1218, %v1225
      %v1228 = vunpack.c.l.s4 1934713408
      %v1229 = vunpack.c.0.s8 %v1228
      %v1230 = vlaneseq
      %v1231 = vshrl.u32 %v1230, 7
      %v1232 = vsub.s32 %v1229, %v1231
      %v1233 = vrot.slane %v1219, %v1232
      %v1234 = vcombine.high %v1210, 0.0
      %v1235 = vcombine.high %v1217, 0.0
      %v1236 = vcombine.high %v1226, 0.0
      %v1237 = vcombine.high %v1233, 0.0
      %v1238 = vcombine.low %v1144, %v1151
      %v1240 = vunpack.c.l.s4 1983009808
      %v1241 = vunpack.c.0.s8 %v1240
      %v1242 = vlaneseq
      %v1243 = vshrl.u32 %v1242, 7
      %v1244 = vsub.s32 %v1241, %v1243
      %v1245 = vrot.slane %v1238, %v1244
      %v1246 = vcombine.low %v1168, %v1169
      %v1248 = vunpack.c.l.s4 1983009808
      %v1249 = vunpack.c.0.s8 %v1248
      %v1250 = vlaneseq
      %v1251 = vshrl.u32 %v1250, 7
      %v1252 = vsub.s32 %v1249, %v1251
      %v1253 = vrot.slane %v1246, %v1252
      %v1254 = vcombine.low %v1160, %v1167
      %v1256 = vunpack.c.l.s4 1983009808
      %v1257 = vunpack.c.0.s8 %v1256
      %v1258 = vlaneseq
      %v1259 = vshrl.u32 %v1258, 7
      %v1260 = vsub.s32 %v1257, %v1259
      %v1261 = vrot.slane %v1254, %v1260
      %v1262 = vcombine.low %v1170, %v1171
      %v1264 = vunpack.c.l.s4 1983009808
      %v1265 = vunpack.c.0.s8 %v1264
      %v1266 = vlaneseq
      %v1267 = vshrl.u32 %v1266, 7
      %v1268 = vsub.s32 %v1265, %v1267
      %v1269 = vrot.slane %v1262, %v1268
      %v1270 = vcombine.low %v1245, %v1253
      %v1272 = vunpack.c.l.s4 1934713408
      %v1273 = vunpack.c.0.s8 %v1272
      %v1274 = vlaneseq
      %v1275 = vshrl.u32 %v1274, 7
      %v1276 = vsub.s32 %v1273, %v1275
      %v1277 = vrot.slane %v1270, %v1276
      %v1278 = vcombine.low %v1261, %v1269
      %v1280 = vunpack.c.l.s4 1934713408
      %v1281 = vunpack.c.0.s8 %v1280
      %v1282 = vlaneseq
      %v1283 = vshrl.u32 %v1282, 7
      %v1284 = vsub.s32 %v1281, %v1283
      %v1285 = vrot.slane %v1278, %v1284
      %v1286 = vcombine.low %v1277, %v1285
      %v1287 = vcombine.high %v1277, %v1285
      %v1288 = vcombine.low %v1210, %v1217
      %v1290 = vunpack.c.l.s4 1983009808
      %v1291 = vunpack.c.0.s8 %v1290
      %v1292 = vlaneseq
      %v1293 = vshrl.u32 %v1292, 7
      %v1294 = vsub.s32 %v1291, %v1293
      %v1295 = vrot.slane %v1288, %v1294
      %v1296 = vcombine.low %v1234, %v1235
      %v1298 = vunpack.c.l.s4 1983009808
      %v1299 = vunpack.c.0.s8 %v1298
      %v1300 = vlaneseq
      %v1301 = vshrl.u32 %v1300, 7
      %v1302 = vsub.s32 %v1299, %v1301
      %v1303 = vrot.slane %v1296, %v1302
      %v1304 = vcombine.low %v1226, %v1233
      %v1306 = vunpack.c.l.s4 1983009808
      %v1307 = vunpack.c.0.s8 %v1306
      %v1308 = vlaneseq
      %v1309 = vshrl.u32 %v1308, 7
      %v1310 = vsub.s32 %v1307, %v1309
      %v1311 = vrot.slane %v1304, %v1310
      %v1312 = vcombine.low %v1236, %v1237
      %v1314 = vunpack.c.l.s4 1983009808
      %v1315 = vunpack.c.0.s8 %v1314
      %v1316 = vlaneseq
      %v1317 = vshrl.u32 %v1316, 7
      %v1318 = vsub.s32 %v1315, %v1317
      %v1319 = vrot.slane %v1312, %v1318
      %v1320 = vcombine.low %v1295, %v1303
      %v1322 = vunpack.c.l.s4 1934713408
      %v1323 = vunpack.c.0.s8 %v1322
      %v1324 = vlaneseq
      %v1325 = vshrl.u32 %v1324, 7
      %v1326 = vsub.s32 %v1323, %v1325
      %v1327 = vrot.slane %v1320, %v1326
      %v1328 = vcombine.low %v1311, %v1319
      %v1330 = vunpack.c.l.s4 1934713408
      %v1331 = vunpack.c.0.s8 %v1330
      %v1332 = vlaneseq
      %v1333 = vshrl.u32 %v1332, 7
      %v1334 = vsub.s32 %v1331, %v1333
      %v1335 = vrot.slane %v1328, %v1334
      %v1336 = vcombine.low %v1327, %v1335
      %v1337 = vcombine.high %v1327, %v1335
      %v1338 = vpack.c.bf16 %v1336, %v1286
      %v1339 = vpack.c.bf16 %v1337, %v1287
      %1342 = vrot.lane.b32.xlu0 %v850, 96
      %v1343 = vpop.permute.xlu0 %1342
      %1344 = vrot.lane.b32.xlu0 %v853, 96
      %v1345 = vpop.permute.xlu0 %1344
      %v1348 = vcombine.high %v850, 0.0
      %v1350 = vunpack.c.l.s4 1983009808
      %v1351 = vunpack.c.0.s8 %v1350
      %v1352 = vlaneseq
      %v1353 = vshrl.u32 %v1352, 7
      %v1354 = vsub.s32 %v1351, %v1353
      %v1355 = vrot.slane %v850, %v1354
      %v1357 = vunpack.c.l.s4 1983009808
      %v1358 = vunpack.c.0.s8 %v1357
      %v1359 = vlaneseq
      %v1360 = vshrl.u32 %v1359, 7
      %v1361 = vsub.s32 %v1358, %v1360
      %v1362 = vrot.slane %v1348, %v1361
      %v1363 = vcombine.high %v1343, 0.0
      %v1365 = vunpack.c.l.s4 1983009808
      %v1366 = vunpack.c.0.s8 %v1365
      %v1367 = vlaneseq
      %v1368 = vshrl.u32 %v1367, 7
      %v1369 = vsub.s32 %v1366, %v1368
      %v1370 = vrot.slane %v1343, %v1369
      %v1372 = vunpack.c.l.s4 1983009808
      %v1373 = vunpack.c.0.s8 %v1372
      %v1374 = vlaneseq
      %v1375 = vshrl.u32 %v1374, 7
      %v1376 = vsub.s32 %v1373, %v1375
      %v1377 = vrot.slane %v1363, %v1376
      %v1378 = vcombine.low %v1355, %v1370
      %v1379 = vcombine.high %v1355, %v1370
      %v1381 = vunpack.c.l.s4 1934713408
      %v1382 = vunpack.c.0.s8 %v1381
      %v1383 = vlaneseq
      %v1384 = vshrl.u32 %v1383, 7
      %v1385 = vsub.s32 %v1382, %v1384
      %v1386 = vrot.slane %v1378, %v1385
      %v1388 = vunpack.c.l.s4 1934713408
      %v1389 = vunpack.c.0.s8 %v1388
      %v1390 = vlaneseq
      %v1391 = vshrl.u32 %v1390, 7
      %v1392 = vsub.s32 %v1389, %v1391
      %v1393 = vrot.slane %v1379, %v1392
      %v1394 = vcombine.low %v1362, %v1377
      %v1395 = vcombine.high %v1362, %v1377
      %v1397 = vunpack.c.l.s4 1934713408
      %v1398 = vunpack.c.0.s8 %v1397
      %v1399 = vlaneseq
      %v1400 = vshrl.u32 %v1399, 7
      %v1401 = vsub.s32 %v1398, %v1400
      %v1402 = vrot.slane %v1394, %v1401
      %v1404 = vunpack.c.l.s4 1934713408
      %v1405 = vunpack.c.0.s8 %v1404
      %v1406 = vlaneseq
      %v1407 = vshrl.u32 %v1406, 7
      %v1408 = vsub.s32 %v1405, %v1407
      %v1409 = vrot.slane %v1395, %v1408
      %v1410 = vcombine.high %v1386, 0.0
      %v1411 = vcombine.high %v1393, 0.0
      %v1412 = vcombine.high %v1402, 0.0
      %v1413 = vcombine.high %v1409, 0.0
      %v1414 = vcombine.high %v853, 0.0
      %v1416 = vunpack.c.l.s4 1983009808
      %v1417 = vunpack.c.0.s8 %v1416
      %v1418 = vlaneseq
      %v1419 = vshrl.u32 %v1418, 7
      %v1420 = vsub.s32 %v1417, %v1419
      %v1421 = vrot.slane %v853, %v1420
      %v1423 = vunpack.c.l.s4 1983009808
      %v1424 = vunpack.c.0.s8 %v1423
      %v1425 = vlaneseq
      %v1426 = vshrl.u32 %v1425, 7
      %v1427 = vsub.s32 %v1424, %v1426
      %v1428 = vrot.slane %v1414, %v1427
      %v1429 = vcombine.high %v1345, 0.0
      %v1431 = vunpack.c.l.s4 1983009808
      %v1432 = vunpack.c.0.s8 %v1431
      %v1433 = vlaneseq
      %v1434 = vshrl.u32 %v1433, 7
      %v1435 = vsub.s32 %v1432, %v1434
      %v1436 = vrot.slane %v1345, %v1435
      %v1438 = vunpack.c.l.s4 1983009808
      %v1439 = vunpack.c.0.s8 %v1438
      %v1440 = vlaneseq
      %v1441 = vshrl.u32 %v1440, 7
      %v1442 = vsub.s32 %v1439, %v1441
      %v1443 = vrot.slane %v1429, %v1442
      %v1444 = vcombine.low %v1421, %v1436
      %v1445 = vcombine.high %v1421, %v1436
      %v1447 = vunpack.c.l.s4 1934713408
      %v1448 = vunpack.c.0.s8 %v1447
      %v1449 = vlaneseq
      %v1450 = vshrl.u32 %v1449, 7
      %v1451 = vsub.s32 %v1448, %v1450
      %v1452 = vrot.slane %v1444, %v1451
      %v1454 = vunpack.c.l.s4 1934713408
      %v1455 = vunpack.c.0.s8 %v1454
      %v1456 = vlaneseq
      %v1457 = vshrl.u32 %v1456, 7
      %v1458 = vsub.s32 %v1455, %v1457
      %v1459 = vrot.slane %v1445, %v1458
      %v1460 = vcombine.low %v1428, %v1443
      %v1461 = vcombine.high %v1428, %v1443
      %v1463 = vunpack.c.l.s4 1934713408
      %v1464 = vunpack.c.0.s8 %v1463
      %v1465 = vlaneseq
      %v1466 = vshrl.u32 %v1465, 7
      %v1467 = vsub.s32 %v1464, %v1466
      %v1468 = vrot.slane %v1460, %v1467
      %v1470 = vunpack.c.l.s4 1934713408
      %v1471 = vunpack.c.0.s8 %v1470
      %v1472 = vlaneseq
      %v1473 = vshrl.u32 %v1472, 7
      %v1474 = vsub.s32 %v1471, %v1473
      %v1475 = vrot.slane %v1461, %v1474
      %v1476 = vcombine.high %v1452, 0.0
      %v1477 = vcombine.high %v1459, 0.0
      %v1478 = vcombine.high %v1468, 0.0
      %v1479 = vcombine.high %v1475, 0.0
      %v1480 = vcombine.low %v1386, %v1393
      %v1482 = vunpack.c.l.s4 1983009808
      %v1483 = vunpack.c.0.s8 %v1482
      %v1484 = vlaneseq
      %v1485 = vshrl.u32 %v1484, 7
      %v1486 = vsub.s32 %v1483, %v1485
      %v1487 = vrot.slane %v1480, %v1486
      %v1488 = vcombine.low %v1410, %v1411
      %v1490 = vunpack.c.l.s4 1983009808
      %v1491 = vunpack.c.0.s8 %v1490
      %v1492 = vlaneseq
      %v1493 = vshrl.u32 %v1492, 7
      %v1494 = vsub.s32 %v1491, %v1493
      %v1495 = vrot.slane %v1488, %v1494
      %v1496 = vcombine.low %v1402, %v1409
      %v1498 = vunpack.c.l.s4 1983009808
      %v1499 = vunpack.c.0.s8 %v1498
      %v1500 = vlaneseq
      %v1501 = vshrl.u32 %v1500, 7
      %v1502 = vsub.s32 %v1499, %v1501
      %v1503 = vrot.slane %v1496, %v1502
      %v1504 = vcombine.low %v1412, %v1413
      %v1506 = vunpack.c.l.s4 1983009808
      %v1507 = vunpack.c.0.s8 %v1506
      %v1508 = vlaneseq
      %v1509 = vshrl.u32 %v1508, 7
      %v1510 = vsub.s32 %v1507, %v1509
      %v1511 = vrot.slane %v1504, %v1510
      %v1512 = vcombine.low %v1487, %v1495
      %v1514 = vunpack.c.l.s4 1934713408
      %v1515 = vunpack.c.0.s8 %v1514
      %v1516 = vlaneseq
      %v1517 = vshrl.u32 %v1516, 7
      %v1518 = vsub.s32 %v1515, %v1517
      %v1519 = vrot.slane %v1512, %v1518
      %v1520 = vcombine.low %v1503, %v1511
      %v1522 = vunpack.c.l.s4 1934713408
      %v1523 = vunpack.c.0.s8 %v1522
      %v1524 = vlaneseq
      %v1525 = vshrl.u32 %v1524, 7
      %v1526 = vsub.s32 %v1523, %v1525
      %v1527 = vrot.slane %v1520, %v1526
      %v1528 = vcombine.low %v1519, %v1527
      %v1529 = vcombine.high %v1519, %v1527
      %v1530 = vcombine.low %v1452, %v1459
      %v1532 = vunpack.c.l.s4 1983009808
      %v1533 = vunpack.c.0.s8 %v1532
      %v1534 = vlaneseq
      %v1535 = vshrl.u32 %v1534, 7
      %v1536 = vsub.s32 %v1533, %v1535
      %v1537 = vrot.slane %v1530, %v1536
      %v1538 = vcombine.low %v1476, %v1477
      %v1540 = vunpack.c.l.s4 1983009808
      %v1541 = vunpack.c.0.s8 %v1540
      %v1542 = vlaneseq
      %v1543 = vshrl.u32 %v1542, 7
      %v1544 = vsub.s32 %v1541, %v1543
      %v1545 = vrot.slane %v1538, %v1544
      %v1546 = vcombine.low %v1468, %v1475
      %v1548 = vunpack.c.l.s4 1983009808
      %v1549 = vunpack.c.0.s8 %v1548
      %v1550 = vlaneseq
      %v1551 = vshrl.u32 %v1550, 7
      %v1552 = vsub.s32 %v1549, %v1551
      %v1553 = vrot.slane %v1546, %v1552
      %v1554 = vcombine.low %v1478, %v1479
      %v1556 = vunpack.c.l.s4 1983009808
      %v1557 = vunpack.c.0.s8 %v1556
      %v1558 = vlaneseq
      %v1559 = vshrl.u32 %v1558, 7
      %v1560 = vsub.s32 %v1557, %v1559
      %v1561 = vrot.slane %v1554, %v1560
      %v1562 = vcombine.low %v1537, %v1545
      %v1564 = vunpack.c.l.s4 1934713408
      %v1565 = vunpack.c.0.s8 %v1564
      %v1566 = vlaneseq
      %v1567 = vshrl.u32 %v1566, 7
      %v1568 = vsub.s32 %v1565, %v1567
      %v1569 = vrot.slane %v1562, %v1568
      %v1570 = vcombine.low %v1553, %v1561
      %v1572 = vunpack.c.l.s4 1934713408
      %v1573 = vunpack.c.0.s8 %v1572
      %v1574 = vlaneseq
      %v1575 = vshrl.u32 %v1574, 7
      %v1576 = vsub.s32 %v1573, %v1575
      %v1577 = vrot.slane %v1570, %v1576
      %v1578 = vcombine.low %v1569, %v1577
      %v1579 = vcombine.high %v1569, %v1577
      %v1580 = vpack.c.bf16 %v1578, %v1528
      %v1581 = vpack.c.bf16 %v1579, %v1529
      %vm1582 = vcmask 261120
      %v1584 = vsel %vm1582, %v1096, 0
      %v1587 = vsel %vm1582, %v1338, 0
      %1589 = vmatprep.subr.bf16.mxu0 0
      %1590 = vmatpush1.bf16.xpose.msra.mxu0 0
      %1591 = vmatprep.subr.bf16.mxu0 0
      %1592 = vmatpush1.bf16.xpose.msra.mxu0 0
      %1593 = vmatprep.subr.bf16.mxu0 0
      %1594 = vmatpush1.bf16.xpose.msra.mxu0 0
      %1595 = vmatprep.subr.bf16.mxu0 0
      %1596 = vmatpush1.bf16.xpose.msra.mxu0 0
      %1597 = vmatprep.subr.bf16.mxu0 0
      %1598 = vmatpush1.bf16.xpose.msra.mxu0 0
      %1599 = vmatprep.subr.bf16.mxu0 0
      %1600 = vmatpush1.bf16.xpose.msra.mxu0 0
      %1601 = vmatprep.subr.bf16.mxu0 0
      %1602 = vmatpush1.bf16.xpose.msra.mxu0 0
      %1603 = vmatprep.subr.bf16.mxu0 0
      %1604 = vmatpush1.bf16.xpose.msra.mxu0 %v1587
      %1605 = vmatprep.subr.bf16.mxu0 0
      %1606 = vmatpush2.bf16.xpose.msra.mxu0 0
      %1607 = vmatprep.subr.bf16.mxu0 0
      %1608 = vmatpush2.bf16.xpose.msra.mxu0 0
      %1609 = vmatprep.subr.bf16.mxu0 0
      %1610 = vmatpush2.bf16.xpose.msra.mxu0 0
      %1611 = vmatprep.subr.bf16.mxu0 0
      %1612 = vmatpush2.bf16.xpose.msra.mxu0 0
      %1613 = vmatprep.subr.bf16.mxu0 0
      %1614 = vmatpush2.bf16.xpose.msra.mxu0 0
      %1615 = vmatprep.subr.bf16.mxu0 0
      %1616 = vmatpush2.bf16.xpose.msra.mxu0 0
      %1617 = vmatprep.subr.bf16.mxu0 0
      %1618 = vmatpush2.bf16.xpose.msra.mxu0 0
      %1619 = vmatprep.subr.bf16.mxu0 0
      %1620 = vmatpush2.bf16.xpose.msra.mxu0 0
      %1621 = vmatprep.mubr.bf16.mxu0 0
      %1622 = vmatmul.mubr.bf16.gmra.mxu0 %v1584
      %v1623 = vpop.f32.mrf.mxu0
      %v1624 = vadd.f32 0.0, %v1623
      %v1625 = vpop.f32.mrf.mxu0
      %v1626 = vpop.f32.mrf.mxu0
      %v1627 = vadd.f32 0.0, %v1626
      %v1628 = vpop.f32.mrf.mxu0
      %1629 = vdwg.mxu0
      %v1631 = vsel %vm1582, %v1097, 0
      %v1634 = vsel %vm1582, %v1339, 0
      %1636 = vmatprep.subr.bf16.mxu0 0
      %1637 = vmatpush1.bf16.xpose.msra.mxu0 0
      %1638 = vmatprep.subr.bf16.mxu0 0
      %1639 = vmatpush1.bf16.xpose.msra.mxu0 0
      %1640 = vmatprep.subr.bf16.mxu0 0
      %1641 = vmatpush1.bf16.xpose.msra.mxu0 0
      %1642 = vmatprep.subr.bf16.mxu0 0
      %1643 = vmatpush1.bf16.xpose.msra.mxu0 0
      %1644 = vmatprep.subr.bf16.mxu0 0
      %1645 = vmatpush1.bf16.xpose.msra.mxu0 0
      %1646 = vmatprep.subr.bf16.mxu0 0
      %1647 = vmatpush1.bf16.xpose.msra.mxu0 0
      %1648 = vmatprep.subr.bf16.mxu0 0
      %1649 = vmatpush1.bf16.xpose.msra.mxu0 0
      %1650 = vmatprep.subr.bf16.mxu0 0
      %1651 = vmatpush1.bf16.xpose.msra.mxu0 %v1634
      %1652 = vmatprep.subr.bf16.mxu0 0
      %1653 = vmatpush2.bf16.xpose.msra.mxu0 0
      %1654 = vmatprep.subr.bf16.mxu0 0
      %1655 = vmatpush2.bf16.xpose.msra.mxu0 0
      %1656 = vmatprep.subr.bf16.mxu0 0
      %1657 = vmatpush2.bf16.xpose.msra.mxu0 0
      %1658 = vmatprep.subr.bf16.mxu0 0
      %1659 = vmatpush2.bf16.xpose.msra.mxu0 0
      %1660 = vmatprep.subr.bf16.mxu0 0
      %1661 = vmatpush2.bf16.xpose.msra.mxu0 0
      %1662 = vmatprep.subr.bf16.mxu0 0
      %1663 = vmatpush2.bf16.xpose.msra.mxu0 0
      %1664 = vmatprep.subr.bf16.mxu0 0
      %1665 = vmatpush2.bf16.xpose.msra.mxu0 0
      %1666 = vmatprep.subr.bf16.mxu0 0
      %1667 = vmatpush2.bf16.xpose.msra.mxu0 0
      %1668 = vmatprep.mubr.bf16.mxu0 0
      %1669 = vmatmul.mubr.bf16.gmra.mxu0 %v1631
      %v1670 = vpop.f32.mrf.mxu0
      %v1671 = vadd.f32 0.0, %v1670
      %v1672 = vpop.f32.mrf.mxu0
      %v1673 = vpop.f32.mrf.mxu0
      %v1674 = vadd.f32 0.0, %v1673
      %v1675 = vpop.f32.mrf.mxu0
      %1676 = vdwg.mxu0
      %v1677 = vmul.f32 %v1624, 0.17677669
      %v1678 = vmul.f32 %v1627, 0.17677669
      %v1679 = vmul.f32 %v1671, 0.17677669
      %v1680 = vmul.f32 %v1674, 0.17677669
      %vm1681 = vcmask 130048
      %v1682 = vsel %vm1681, %v1677, -inf
      %1683 = vmax.xlane.f32.xlu0 %v1682
      %v1684 = vpop.xlane.xlu0 %1683
      %v1685 = vsel %vm1681, %v1678, -inf
      %1686 = vmax.xlane.f32.xlu0 %v1685
      %v1687 = vpop.xlane.xlu0 %1686
      %v1688 = vsel %vm1681, %v1679, -inf
      %1689 = vmax.xlane.f32.xlu0 %v1688
      %v1690 = vpop.xlane.xlu0 %1689
      %v1691 = vsel %vm1681, %v1680, -inf
      %1692 = vmax.xlane.f32.xlu0 %v1691
      %v1693 = vpop.xlane.xlu0 %1692
      %v1694 = vsub.f32 %v1677, %v1684
      %v1695 = vsub.f32 %v1678, %v1687
      %v1696 = vsub.f32 %v1679, %v1690
      %v1697 = vsub.f32 %v1680, %v1693
      %v1698 = vmul.f32 %v1694, 1.442695
      %v1699 = vpow.pop %v1698
      %v1700 = vmul.f32 %v1695, 1.442695
      %v1701 = vpow.pop %v1700
      %v1702 = vmul.f32 %v1696, 1.442695
      %v1703 = vpow.pop %v1702
      %v1704 = vmul.f32 %v1697, 1.442695
      %v1705 = vpow.pop %v1704
      %v1706 = vsel %vm1681, %v1699, 0.0
      %1707 = vadd.xlane.f32.xlu0 %v1706
      %v1708 = vpop.xlane.xlu0 %1707
      %v1709 = vsel %vm1681, %v1701, 0.0
      %1710 = vadd.xlane.f32.xlu0 %v1709
      %v1711 = vpop.xlane.xlu0 %1710
      %v1712 = vsel %vm1681, %v1703, 0.0
      %1713 = vadd.xlane.f32.xlu0 %v1712
      %v1714 = vpop.xlane.xlu0 %1713
      %v1715 = vsel %vm1681, %v1705, 0.0
      %1716 = vadd.xlane.f32.xlu0 %v1715
      %v1717 = vpop.xlane.xlu0 %1716
      %v1718 = vrcp.pop %v1708
      %v1719 = vrcp.pop %v1711
      %v1720 = vrcp.pop %v1714
      %v1721 = vrcp.pop %v1717
      %v1722 = vmul.f32 %v1699, %v1718
      %v1723 = vmul.f32 %v1701, %v1719
      %v1724 = vmul.f32 %v1703, %v1720
      %v1725 = vmul.f32 %v1705, %v1721
      %v1726 = vpack.c.bf16 %v1723, %v1722
      %v1727 = vpack.c.bf16 %v1725, %v1724
      %v1729 = vsel %vm1681, %v1726, 0
      %1731 = vmatprep.subr.bf16.mxu0 0
      %1732 = vmatpush1.bf16.msra.mxu0 0
      %1733 = vmatprep.subr.bf16.mxu0 0
      %1734 = vmatpush1.bf16.msra.mxu0 0
      %1735 = vmatprep.subr.bf16.mxu0 0
      %1736 = vmatpush1.bf16.msra.mxu0 0
      %1737 = vmatprep.subr.bf16.mxu0 0
      %1738 = vmatpush1.bf16.msra.mxu0 0
      %1739 = vmatprep.subr.bf16.mxu0 0
      %1740 = vmatpush1.bf16.msra.mxu0 0
      %1741 = vmatprep.subr.bf16.mxu0 0
      %1742 = vmatpush1.bf16.msra.mxu0 0
      %1743 = vmatprep.subr.bf16.mxu0 0
      %1744 = vmatpush1.bf16.msra.mxu0 0
      %1745 = vmatprep.subr.bf16.mxu0 0
      %1746 = vmatpush1.bf16.msra.mxu0 %v1580
      %1747 = vmatprep.subr.bf16.mxu0 0
      %1748 = vmatpush2.bf16.msra.mxu0 0
      %1749 = vmatprep.subr.bf16.mxu0 0
      %1750 = vmatpush2.bf16.msra.mxu0 0
      %1751 = vmatprep.subr.bf16.mxu0 0
      %1752 = vmatpush2.bf16.msra.mxu0 0
      %1753 = vmatprep.subr.bf16.mxu0 0
      %1754 = vmatpush2.bf16.msra.mxu0 0
      %1755 = vmatprep.subr.bf16.mxu0 0
      %1756 = vmatpush2.bf16.msra.mxu0 0
      %1757 = vmatprep.subr.bf16.mxu0 0
      %1758 = vmatpush2.bf16.msra.mxu0 0
      %1759 = vmatprep.subr.bf16.mxu0 0
      %1760 = vmatpush2.bf16.msra.mxu0 0
      %1761 = vmatprep.subr.bf16.mxu0 0
      %1762 = vmatpush2.bf16.msra.mxu0 0
      %1763 = vmatprep.mubr.bf16.mxu0 0
      %1764 = vmatmul.mubr.bf16.gmra.mxu0 %v1729
      %v1765 = vpop.f32.mrf.mxu0
      %v1766 = vadd.f32 0.0, %v1765
      %v1767 = vpop.f32.mrf.mxu0
      %v1768 = vpop.f32.mrf.mxu0
      %v1769 = vadd.f32 0.0, %v1768
      %v1770 = vpop.f32.mrf.mxu0
      %1771 = vdwg.mxu0
      %v1773 = vsel %vm1681, %v1727, 0
      %1775 = vmatprep.subr.bf16.mxu0 0
      %1776 = vmatpush1.bf16.msra.mxu0 0
      %1777 = vmatprep.subr.bf16.mxu0 0
      %1778 = vmatpush1.bf16.msra.mxu0 0
      %1779 = vmatprep.subr.bf16.mxu0 0
      %1780 = vmatpush1.bf16.msra.mxu0 0
      %1781 = vmatprep.subr.bf16.mxu0 0
      %1782 = vmatpush1.bf16.msra.mxu0 0
      %1783 = vmatprep.subr.bf16.mxu0 0
      %1784 = vmatpush1.bf16.msra.mxu0 0
      %1785 = vmatprep.subr.bf16.mxu0 0
      %1786 = vmatpush1.bf16.msra.mxu0 0
      %1787 = vmatprep.subr.bf16.mxu0 0
      %1788 = vmatpush1.bf16.msra.mxu0 0
      %1789 = vmatprep.subr.bf16.mxu0 0
      %1790 = vmatpush1.bf16.msra.mxu0 %v1581
      %1791 = vmatprep.subr.bf16.mxu0 0
      %1792 = vmatpush2.bf16.msra.mxu0 0
      %1793 = vmatprep.subr.bf16.mxu0 0
      %1794 = vmatpush2.bf16.msra.mxu0 0
      %1795 = vmatprep.subr.bf16.mxu0 0
      %1796 = vmatpush2.bf16.msra.mxu0 0
      %1797 = vmatprep.subr.bf16.mxu0 0
      %1798 = vmatpush2.bf16.msra.mxu0 0
      %1799 = vmatprep.subr.bf16.mxu0 0
      %1800 = vmatpush2.bf16.msra.mxu0 0
      %1801 = vmatprep.subr.bf16.mxu0 0
      %1802 = vmatpush2.bf16.msra.mxu0 0
      %1803 = vmatprep.subr.bf16.mxu0 0
      %1804 = vmatpush2.bf16.msra.mxu0 0
      %1805 = vmatprep.subr.bf16.mxu0 0
      %1806 = vmatpush2.bf16.msra.mxu0 0
      %1807 = vmatprep.mubr.bf16.mxu0 0
      %1808 = vmatmul.mubr.bf16.gmra.mxu0 %v1773
      %v1809 = vpop.f32.mrf.mxu0
      %v1810 = vadd.f32 0.0, %v1809
      %v1811 = vpop.f32.mrf.mxu0
      %v1812 = vpop.f32.mrf.mxu0
      %v1813 = vadd.f32 0.0, %v1812
      %v1814 = vpop.f32.mrf.mxu0
      %1815 = vdwg.mxu0
      %v1816 = vcombine.high %v1766, 0.0
      %v1818 = vunpack.c.l.s4 1983009808
      %v1819 = vunpack.c.0.s8 %v1818
      %v1820 = vlaneseq
      %v1821 = vshrl.u32 %v1820, 7
      %v1822 = vsub.s32 %v1819, %v1821
      %v1823 = vrot.slane %v1766, %v1822
      %v1825 = vunpack.c.l.s4 1983009808
      %v1826 = vunpack.c.0.s8 %v1825
      %v1827 = vlaneseq
      %v1828 = vshrl.u32 %v1827, 7
      %v1829 = vsub.s32 %v1826, %v1828
      %v1830 = vrot.slane %v1816, %v1829
      %v1831 = vcombine.high %v1810, 0.0
      %v1833 = vunpack.c.l.s4 1983009808
      %v1834 = vunpack.c.0.s8 %v1833
      %v1835 = vlaneseq
      %v1836 = vshrl.u32 %v1835, 7
      %v1837 = vsub.s32 %v1834, %v1836
      %v1838 = vrot.slane %v1810, %v1837
      %v1840 = vunpack.c.l.s4 1983009808
      %v1841 = vunpack.c.0.s8 %v1840
      %v1842 = vlaneseq
      %v1843 = vshrl.u32 %v1842, 7
      %v1844 = vsub.s32 %v1841, %v1843
      %v1845 = vrot.slane %v1831, %v1844
      %v1846 = vcombine.low %v1823, %v1838
      %v1847 = vcombine.high %v1823, %v1838
      %v1849 = vunpack.c.l.s4 1934713408
      %v1850 = vunpack.c.0.s8 %v1849
      %v1851 = vlaneseq
      %v1852 = vshrl.u32 %v1851, 7
      %v1853 = vsub.s32 %v1850, %v1852
      %v1854 = vrot.slane %v1846, %v1853
      %v1856 = vunpack.c.l.s4 1934713408
      %v1857 = vunpack.c.0.s8 %v1856
      %v1858 = vlaneseq
      %v1859 = vshrl.u32 %v1858, 7
      %v1860 = vsub.s32 %v1857, %v1859
      %v1861 = vrot.slane %v1847, %v1860
      %v1862 = vcombine.low %v1830, %v1845
      %v1863 = vcombine.high %v1830, %v1845
      %v1865 = vunpack.c.l.s4 1934713408
      %v1866 = vunpack.c.0.s8 %v1865
      %v1867 = vlaneseq
      %v1868 = vshrl.u32 %v1867, 7
      %v1869 = vsub.s32 %v1866, %v1868
      %v1870 = vrot.slane %v1862, %v1869
      %v1872 = vunpack.c.l.s4 1934713408
      %v1873 = vunpack.c.0.s8 %v1872
      %v1874 = vlaneseq
      %v1875 = vshrl.u32 %v1874, 7
      %v1876 = vsub.s32 %v1873, %v1875
      %v1877 = vrot.slane %v1863, %v1876
      %v1878 = vcombine.high %v1854, 0.0
      %v1879 = vcombine.high %v1861, 0.0
      %v1880 = vcombine.high %v1870, 0.0
      %v1881 = vcombine.high %v1877, 0.0
      %v1882 = vcombine.high %v1769, 0.0
      %v1884 = vunpack.c.l.s4 1983009808
      %v1885 = vunpack.c.0.s8 %v1884
      %v1886 = vlaneseq
      %v1887 = vshrl.u32 %v1886, 7
      %v1888 = vsub.s32 %v1885, %v1887
      %v1889 = vrot.slane %v1769, %v1888
      %v1891 = vunpack.c.l.s4 1983009808
      %v1892 = vunpack.c.0.s8 %v1891
      %v1893 = vlaneseq
      %v1894 = vshrl.u32 %v1893, 7
      %v1895 = vsub.s32 %v1892, %v1894
      %v1896 = vrot.slane %v1882, %v1895
      %v1897 = vcombine.high %v1813, 0.0
      %v1899 = vunpack.c.l.s4 1983009808
      %v1900 = vunpack.c.0.s8 %v1899
      %v1901 = vlaneseq
      %v1902 = vshrl.u32 %v1901, 7
      %v1903 = vsub.s32 %v1900, %v1902
      %v1904 = vrot.slane %v1813, %v1903
      %v1906 = vunpack.c.l.s4 1983009808
      %v1907 = vunpack.c.0.s8 %v1906
      %v1908 = vlaneseq
      %v1909 = vshrl.u32 %v1908, 7
      %v1910 = vsub.s32 %v1907, %v1909
      %v1911 = vrot.slane %v1897, %v1910
      %v1912 = vcombine.low %v1889, %v1904
      %v1913 = vcombine.high %v1889, %v1904
      %v1915 = vunpack.c.l.s4 1934713408
      %v1916 = vunpack.c.0.s8 %v1915
      %v1917 = vlaneseq
      %v1918 = vshrl.u32 %v1917, 7
      %v1919 = vsub.s32 %v1916, %v1918
      %v1920 = vrot.slane %v1912, %v1919
      %v1922 = vunpack.c.l.s4 1934713408
      %v1923 = vunpack.c.0.s8 %v1922
      %v1924 = vlaneseq
      %v1925 = vshrl.u32 %v1924, 7
      %v1926 = vsub.s32 %v1923, %v1925
      %v1927 = vrot.slane %v1913, %v1926
      %v1928 = vcombine.low %v1896, %v1911
      %v1929 = vcombine.high %v1896, %v1911
      %v1931 = vunpack.c.l.s4 1934713408
      %v1932 = vunpack.c.0.s8 %v1931
      %v1933 = vlaneseq
      %v1934 = vshrl.u32 %v1933, 7
      %v1935 = vsub.s32 %v1932, %v1934
      %v1936 = vrot.slane %v1928, %v1935
      %v1938 = vunpack.c.l.s4 1934713408
      %v1939 = vunpack.c.0.s8 %v1938
      %v1940 = vlaneseq
      %v1941 = vshrl.u32 %v1940, 7
      %v1942 = vsub.s32 %v1939, %v1941
      %v1943 = vrot.slane %v1929, %v1942
      %v1944 = vcombine.high %v1920, 0.0
      %v1945 = vcombine.high %v1927, 0.0
      %v1946 = vcombine.high %v1936, 0.0
      %v1947 = vcombine.high %v1943, 0.0
      %v1948 = vcombine.low %v1854, %v1861
      %v1950 = vunpack.c.l.s4 1983009808
      %v1951 = vunpack.c.0.s8 %v1950
      %v1952 = vlaneseq
      %v1953 = vshrl.u32 %v1952, 7
      %v1954 = vsub.s32 %v1951, %v1953
      %v1955 = vrot.slane %v1948, %v1954
      %v1956 = vcombine.low %v1878, %v1879
      %v1958 = vunpack.c.l.s4 1983009808
      %v1959 = vunpack.c.0.s8 %v1958
      %v1960 = vlaneseq
      %v1961 = vshrl.u32 %v1960, 7
      %v1962 = vsub.s32 %v1959, %v1961
      %v1963 = vrot.slane %v1956, %v1962
      %v1964 = vcombine.low %v1870, %v1877
      %v1966 = vunpack.c.l.s4 1983009808
      %v1967 = vunpack.c.0.s8 %v1966
      %v1968 = vlaneseq
      %v1969 = vshrl.u32 %v1968, 7
      %v1970 = vsub.s32 %v1967, %v1969
      %v1971 = vrot.slane %v1964, %v1970
      %v1972 = vcombine.low %v1880, %v1881
      %v1974 = vunpack.c.l.s4 1983009808
      %v1975 = vunpack.c.0.s8 %v1974
      %v1976 = vlaneseq
      %v1977 = vshrl.u32 %v1976, 7
      %v1978 = vsub.s32 %v1975, %v1977
      %v1979 = vrot.slane %v1972, %v1978
      %v1980 = vcombine.low %v1955, %v1963
      %v1982 = vunpack.c.l.s4 1934713408
      %v1983 = vunpack.c.0.s8 %v1982
      %v1984 = vlaneseq
      %v1985 = vshrl.u32 %v1984, 7
      %v1986 = vsub.s32 %v1983, %v1985
      %v1987 = vrot.slane %v1980, %v1986
      %v1988 = vcombine.low %v1971, %v1979
      %v1990 = vunpack.c.l.s4 1934713408
      %v1991 = vunpack.c.0.s8 %v1990
      %v1992 = vlaneseq
      %v1993 = vshrl.u32 %v1992, 7
      %v1994 = vsub.s32 %v1991, %v1993
      %v1995 = vrot.slane %v1988, %v1994
      %v1996 = vcombine.low %v1987, %v1995
      %v1997 = vcombine.high %v1987, %v1995
      %v1998 = vcombine.low %v1920, %v1927
      %v2000 = vunpack.c.l.s4 1983009808
      %v2001 = vunpack.c.0.s8 %v2000
      %v2002 = vlaneseq
      %v2003 = vshrl.u32 %v2002, 7
      %v2004 = vsub.s32 %v2001, %v2003
      %v2005 = vrot.slane %v1998, %v2004
      %v2006 = vcombine.low %v1944, %v1945
      %v2008 = vunpack.c.l.s4 1983009808
      %v2009 = vunpack.c.0.s8 %v2008
      %v2010 = vlaneseq
      %v2011 = vshrl.u32 %v2010, 7
      %v2012 = vsub.s32 %v2009, %v2011
      %v2013 = vrot.slane %v2006, %v2012
      %v2014 = vcombine.low %v1936, %v1943
      %v2016 = vunpack.c.l.s4 1983009808
      %v2017 = vunpack.c.0.s8 %v2016
      %v2018 = vlaneseq
      %v2019 = vshrl.u32 %v2018, 7
      %v2020 = vsub.s32 %v2017, %v2019
      %v2021 = vrot.slane %v2014, %v2020
      %v2022 = vcombine.low %v1946, %v1947
      %v2024 = vunpack.c.l.s4 1983009808
      %v2025 = vunpack.c.0.s8 %v2024
      %v2026 = vlaneseq
      %v2027 = vshrl.u32 %v2026, 7
      %v2028 = vsub.s32 %v2025, %v2027
      %v2029 = vrot.slane %v2022, %v2028
      %v2030 = vcombine.low %v2005, %v2013
      %v2032 = vunpack.c.l.s4 1934713408
      %v2033 = vunpack.c.0.s8 %v2032
      %v2034 = vlaneseq
      %v2035 = vshrl.u32 %v2034, 7
      %v2036 = vsub.s32 %v2033, %v2035
      %v2037 = vrot.slane %v2030, %v2036
      %v2038 = vcombine.low %v2021, %v2029
      %v2040 = vunpack.c.l.s4 1934713408
      %v2041 = vunpack.c.0.s8 %v2040
      %v2042 = vlaneseq
      %v2043 = vshrl.u32 %v2042, 7
      %v2044 = vsub.s32 %v2041, %v2043
      %v2045 = vrot.slane %v2038, %v2044
      %v2046 = vcombine.low %v2037, %v2045
      %v2047 = vcombine.high %v2037, %v2045
      %2050 = vrot.lane.b32.xlu0 %v1997, 32
      %v2051 = vpop.permute.xlu0 %2050
      %2052 = vrot.lane.b32.xlu0 %v2047, 32
      %v2053 = vpop.permute.xlu0 %2052
      %v2056 = vsel %vm1582, %v1996, %v2051
      %v2057 = vsel %vm1582, %v2046, %v2053
      %v2058 = vpack.c.bf16 %v2057, %v2056
      %v2059 = vld [vmem:[%s9] sm:$0xf]
      %v2060 = vld [vmem:[%s9 + $0x4] sm:$0xf]
      %v2061 = vld [vmem:[%s9 + $0x8] sm:$0xf]
      %v2062 = vld [vmem:[%s9 + $0xc] sm:$0xf]
      %v2063 = vld [vmem:[%s9 + $0x10] sm:$0xf]
      %v2064 = vld [vmem:[%s9 + $0x14] sm:$0xf]
      %v2065 = vld [vmem:[%s9 + $0x18] sm:$0xf]
      %v2066 = vld [vmem:[%s9 + $0x1c] sm:$0xf]
      %v2067 = vld [vmem:[%s10] sm:$0x1]
      %v2069 = vlaneseq
      %v2070 = vshrl.u32 %v2069, 7
      %v2071 = vsub.s32 0, %v2070
      %v2072 = vrot.slane %v2067, %v2071
      %v2082 = vunpack.c.l.b16 %v2059
      %v2083 = vunpack.c.l.b16 %v2060
      %v2084 = vunpack.c.l.b16 %v2061
      %v2085 = vunpack.c.l.b16 %v2062
      %v2086 = vunpack.c.l.b16 %v2063
      %v2087 = vunpack.c.l.b16 %v2064
      %v2088 = vunpack.c.l.b16 %v2065
      %v2089 = vunpack.c.l.b16 %v2066
      %v2090 = vpack.c.b16 %v2083, %v2082
      %v2091 = vpack.c.b16 %v2085, %v2084
      %v2092 = vpack.c.b16 %v2087, %v2086
      %v2093 = vpack.c.b16 %v2089, %v2088
      %v2099 = vsel %vm588, %v2058, 0
      %2101 = vmatprep.subr.bf16.mxu0 0
      %2102 = vmatpush1.bf16.msra.mxu0 0
      %2103 = vmatprep.subr.bf16.mxu0 0
      %2104 = vmatpush1.bf16.msra.mxu0 0
      %2105 = vmatprep.subr.bf16.mxu0 0
      %2106 = vmatpush1.bf16.msra.mxu0 0
      %2107 = vmatprep.subr.bf16.mxu0 0
      %2108 = vmatpush1.bf16.msra.mxu0 0
      %2109 = vmatprep.subr.bf16.mxu0 0
      %2110 = vmatpush1.bf16.msra.mxu0 %v2093
      %2111 = vmatprep.subr.bf16.mxu0 0
      %2112 = vmatpush1.bf16.msra.mxu0 %v2092
      %2113 = vmatprep.subr.bf16.mxu0 0
      %2114 = vmatpush1.bf16.msra.mxu0 %v2091
      %2115 = vmatprep.subr.bf16.mxu0 0
      %2116 = vmatpush1.bf16.msra.mxu0 %v2090
      %2117 = vmatprep.subr.bf16.mxu0 0
      %2118 = vmatpush2.bf16.msra.mxu0 0
      %2119 = vmatprep.subr.bf16.mxu0 0
      %2120 = vmatpush2.bf16.msra.mxu0 0
      %2121 = vmatprep.subr.bf16.mxu0 0
      %2122 = vmatpush2.bf16.msra.mxu0 0
      %2123 = vmatprep.subr.bf16.mxu0 0
      %2124 = vmatpush2.bf16.msra.mxu0 0
      %2125 = vmatprep.subr.bf16.mxu0 0
      %2126 = vmatpush2.bf16.msra.mxu0 0
      %2127 = vmatprep.subr.bf16.mxu0 0
      %2128 = vmatpush2.bf16.msra.mxu0 0
      %2129 = vmatprep.subr.bf16.mxu0 0
      %2130 = vmatpush2.bf16.msra.mxu0 0
      %2131 = vmatprep.subr.bf16.mxu0 0
      %2132 = vmatpush2.bf16.msra.mxu0 0
      %2133 = vmatprep.mubr.bf16.mxu0 0
      %2134 = vmatmul.mubr.bf16.gmra.mxu0 %v2099
      %v2135 = vpop.f32.mrf.mxu0
      %v2136 = vadd.f32 %v2072, %v2135
      %v2137 = vpop.f32.mrf.mxu0
      %v2138 = vpop.f32.mrf.mxu0
      %v2139 = vadd.f32 %v2072, %v2138
      %v2140 = vpop.f32.mrf.mxu0
      %2141 = vdwg.mxu0
      %v2142 = vadd.f32 %v583, %v2136
      %v2143 = vadd.f32 %v584, %v2139
      %v2144 = vld [vmem:[%s11] sm:$0x1]
      %v2145 = vmul.f32 %v2142, %v2142
      %v2146 = vmul.f32 %v2143, %v2143
      %v2147 = vsel %vm588, %v2145, 0.0
      %2148 = vadd.xlane.f32.xlu0 %v2147
      %v2149 = vpop.xlane.xlu0 %2148
      %v2150 = vsel %vm588, %v2146, 0.0
      %2151 = vadd.xlane.f32.xlu0 %v2150
      %v2152 = vpop.xlane.xlu0 %2151
      %v2153 = vmul.f32 %v2149, %v595
      %v2154 = vmul.f32 %v2152, %v595
      %v2155 = vadd.f32 %v2153, 1e-05
      %v2156 = vadd.f32 %v2154, 1e-05
      %v2157 = vrsqrt.pop %v2155
      %v2158 = vrsqrt.pop %v2156
      %v2159 = vmul.f32 %v2142, %v2157
      %v2160 = vmul.f32 %v2143, %v2158
      %v2162 = vlaneseq
      %v2163 = vshrl.u32 %v2162, 7
      %v2164 = vsub.s32 0, %v2163
      %v2165 = vrot.slane %v2144, %v2164
      %v2167 = vmul.f32 %v2159, %v2165
      %v2168 = vmul.f32 %v2160, %v2165
      %v2169 = vpack.c.bf16 %v2168, %v2167
      %v2170 = vld [vmem:[%s12] sm:$0xff]
      %v2171 = vld [vmem:[%s12 + $0x8] sm:$0xff]
      %v2172 = vld [vmem:[%s12 + $0x10] sm:$0xff]
      %v2173 = vld [vmem:[%s12 + $0x18] sm:$0xff]
      %v2174 = vld [vmem:[%s12 + $0x20] sm:$0xff]
      %v2175 = vld [vmem:[%s12 + $0x28] sm:$0xff]
      %v2176 = vld [vmem:[%s12 + $0x30] sm:$0xff]
      %v2177 = vld [vmem:[%s12 + $0x38] sm:$0xff]
      %v2178 = vld [vmem:[%s13] sm:$0x3]
      %v2180 = vlaneseq
      %v2181 = vshrl.u32 %v2180, 7
      %v2182 = vsub.s32 0, %v2181
      %v2183 = vrot.slane %v2178, %v2182
      %v2184 = vlaneseq
      %v2185 = vshrl.u32 %v2184, 7
      %v2186 = vsub.s32 1, %v2185
      %v2187 = vrot.slane %v2178, %v2186
      %v2198 = vunpack.c.l.b16 %v2170
      %v2199 = vunpack.c.h.b16 %v2170
      %v2200 = vunpack.c.l.b16 %v2171
      %v2201 = vunpack.c.h.b16 %v2171
      %v2202 = vunpack.c.l.b16 %v2172
      %v2203 = vunpack.c.h.b16 %v2172
      %v2204 = vunpack.c.l.b16 %v2173
      %v2205 = vunpack.c.h.b16 %v2173
      %v2206 = vunpack.c.l.b16 %v2174
      %v2207 = vunpack.c.h.b16 %v2174
      %v2208 = vunpack.c.l.b16 %v2175
      %v2209 = vunpack.c.h.b16 %v2175
      %v2210 = vunpack.c.l.b16 %v2176
      %v2211 = vunpack.c.h.b16 %v2176
      %v2212 = vunpack.c.l.b16 %v2177
      %v2213 = vunpack.c.h.b16 %v2177
      %v2214 = vpack.c.b16 %v2200, %v2198
      %v2215 = vpack.c.b16 %v2201, %v2199
      %v2216 = vpack.c.b16 %v2204, %v2202
      %v2217 = vpack.c.b16 %v2205, %v2203
      %v2218 = vpack.c.b16 %v2208, %v2206
      %v2219 = vpack.c.b16 %v2209, %v2207
      %v2220 = vpack.c.b16 %v2212, %v2210
      %v2221 = vpack.c.b16 %v2213, %v2211
      %v2231 = vsel %vm588, %v2169, 0
      %2233 = vmatprep.subr.bf16.mxu0 0
      %2234 = vmatpush1.bf16.msra.mxu0 0
      %2235 = vmatprep.subr.bf16.mxu0 0
      %2236 = vmatpush1.bf16.msra.mxu0 0
      %2237 = vmatprep.subr.bf16.mxu0 0
      %2238 = vmatpush1.bf16.msra.mxu0 0
      %2239 = vmatprep.subr.bf16.mxu0 0
      %2240 = vmatpush1.bf16.msra.mxu0 0
      %2241 = vmatprep.subr.bf16.mxu0 %v2221
      %2242 = vmatpush1.bf16.msra.mxu0 %v2220
      %2243 = vmatprep.subr.bf16.mxu0 %v2219
      %2244 = vmatpush1.bf16.msra.mxu0 %v2218
      %2245 = vmatprep.subr.bf16.mxu0 %v2217
      %2246 = vmatpush1.bf16.msra.mxu0 %v2216
      %2247 = vmatprep.subr.bf16.mxu0 %v2215
      %2248 = vmatpush1.bf16.msra.mxu0 %v2214
      %2249 = vmatprep.subr.bf16.mxu0 0
      %2250 = vmatpush2.bf16.msra.mxu0 0
      %2251 = vmatprep.subr.bf16.mxu0 0
      %2252 = vmatpush2.bf16.msra.mxu0 0
      %2253 = vmatprep.subr.bf16.mxu0 0
      %2254 = vmatpush2.bf16.msra.mxu0 0
      %2255 = vmatprep.subr.bf16.mxu0 0
      %2256 = vmatpush2.bf16.msra.mxu0 0
      %2257 = vmatprep.subr.bf16.mxu0 0
      %2258 = vmatpush2.bf16.msra.mxu0 0
      %2259 = vmatprep.subr.bf16.mxu0 0
      %2260 = vmatpush2.bf16.msra.mxu0 0
      %2261 = vmatprep.subr.bf16.mxu0 0
      %2262 = vmatpush2.bf16.msra.mxu0 0
      %2263 = vmatprep.subr.bf16.mxu0 0
      %2264 = vmatpush2.bf16.msra.mxu0 0
      %2265 = vmatprep.mubr.bf16.mxu0 0
      %2266 = vmatmul.mubr.bf16.gmra.mxu0 %v2231
      %v2267 = vpop.f32.mrf.mxu0
      %v2268 = vadd.f32 %v2183, %v2267
      %v2269 = vpop.f32.mrf.mxu0
      %v2270 = vadd.f32 %v2187, %v2269
      %v2271 = vpop.f32.mrf.mxu0
      %v2272 = vadd.f32 %v2183, %v2271
      %v2273 = vpop.f32.mrf.mxu0
      %v2274 = vadd.f32 %v2187, %v2273
      %2275 = vdwg.mxu0
      %v2276 = vld [vmem:[%s14] sm:$0xff]
      %v2277 = vld [vmem:[%s14 + $0x8] sm:$0xff]
      %v2278 = vld [vmem:[%s14 + $0x10] sm:$0xff]
      %v2279 = vld [vmem:[%s14 + $0x18] sm:$0xff]
      %v2280 = vld [vmem:[%s14 + $0x20] sm:$0xff]
      %v2281 = vld [vmem:[%s14 + $0x28] sm:$0xff]
      %v2282 = vld [vmem:[%s14 + $0x30] sm:$0xff]
      %v2283 = vld [vmem:[%s14 + $0x38] sm:$0xff]
      %v2284 = vld [vmem:[%s15] sm:$0x3]
      %v2286 = vlaneseq
      %v2287 = vshrl.u32 %v2286, 7
      %v2288 = vsub.s32 0, %v2287
      %v2289 = vrot.slane %v2284, %v2288
      %v2290 = vlaneseq
      %v2291 = vshrl.u32 %v2290, 7
      %v2292 = vsub.s32 1, %v2291
      %v2293 = vrot.slane %v2284, %v2292
      %v2304 = vunpack.c.l.b16 %v2276
      %v2305 = vunpack.c.h.b16 %v2276
      %v2306 = vunpack.c.l.b16 %v2277
      %v2307 = vunpack.c.h.b16 %v2277
      %v2308 = vunpack.c.l.b16 %v2278
      %v2309 = vunpack.c.h.b16 %v2278
      %v2310 = vunpack.c.l.b16 %v2279
      %v2311 = vunpack.c.h.b16 %v2279
      %v2312 = vunpack.c.l.b16 %v2280
      %v2313 = vunpack.c.h.b16 %v2280
      %v2314 = vunpack.c.l.b16 %v2281
      %v2315 = vunpack.c.h.b16 %v2281
      %v2316 = vunpack.c.l.b16 %v2282
      %v2317 = vunpack.c.h.b16 %v2282
      %v2318 = vunpack.c.l.b16 %v2283
      %v2319 = vunpack.c.h.b16 %v2283
      %v2320 = vpack.c.b16 %v2306, %v2304
      %v2321 = vpack.c.b16 %v2307, %v2305
      %v2322 = vpack.c.b16 %v2310, %v2308
      %v2323 = vpack.c.b16 %v2311, %v2309
      %v2324 = vpack.c.b16 %v2314, %v2312
      %v2325 = vpack.c.b16 %v2315, %v2313
      %v2326 = vpack.c.b16 %v2318, %v2316
      %v2327 = vpack.c.b16 %v2319, %v2317
      %2336 = vmatprep.subr.bf16.mxu0 0
      %2337 = vmatpush1.bf16.msra.mxu0 0
      %2338 = vmatprep.subr.bf16.mxu0 0
      %2339 = vmatpush1.bf16.msra.mxu0 0
      %2340 = vmatprep.subr.bf16.mxu0 0
      %2341 = vmatpush1.bf16.msra.mxu0 0
      %2342 = vmatprep.subr.bf16.mxu0 0
      %2343 = vmatpush1.bf16.msra.mxu0 0
      %2344 = vmatprep.subr.bf16.mxu0 %v2327
      %2345 = vmatpush1.bf16.msra.mxu0 %v2326
      %2346 = vmatprep.subr.bf16.mxu0 %v2325
      %2347 = vmatpush1.bf16.msra.mxu0 %v2324
      %2348 = vmatprep.subr.bf16.mxu0 %v2323
      %2349 = vmatpush1.bf16.msra.mxu0 %v2322
      %2350 = vmatprep.subr.bf16.mxu0 %v2321
      %2351 = vmatpush1.bf16.msra.mxu0 %v2320
      %2352 = vmatprep.subr.bf16.mxu0 0
      %2353 = vmatpush2.bf16.msra.mxu0 0
      %2354 = vmatprep.subr.bf16.mxu0 0
      %2355 = vmatpush2.bf16.msra.mxu0 0
      %2356 = vmatprep.subr.bf16.mxu0 0
      %2357 = vmatpush2.bf16.msra.mxu0 0
      %2358 = vmatprep.subr.bf16.mxu0 0
      %2359 = vmatpush2.bf16.msra.mxu0 0
      %2360 = vmatprep.subr.bf16.mxu0 0
      %2361 = vmatpush2.bf16.msra.mxu0 0
      %2362 = vmatprep.subr.bf16.mxu0 0
      %2363 = vmatpush2.bf16.msra.mxu0 0
      %2364 = vmatprep.subr.bf16.mxu0 0
      %2365 = vmatpush2.bf16.msra.mxu0 0
      %2366 = vmatprep.subr.bf16.mxu0 0
      %2367 = vmatpush2.bf16.msra.mxu0 0
      %2368 = vmatprep.mubr.bf16.mxu0 0
      %2369 = vmatmul.mubr.bf16.gmra.mxu0 %v2231
      %v2370 = vpop.f32.mrf.mxu0
      %v2371 = vadd.f32 %v2289, %v2370
      %v2372 = vpop.f32.mrf.mxu0
      %v2373 = vadd.f32 %v2293, %v2372
      %v2374 = vpop.f32.mrf.mxu0
      %v2375 = vadd.f32 %v2289, %v2374
      %v2376 = vpop.f32.mrf.mxu0
      %v2377 = vadd.f32 %v2293, %v2376
      %2378 = vdwg.mxu0
      %v2379 = vxor.u32 %v2268, 2147483648
      %v2380 = vxor.u32 %v2270, 2147483648
      %v2381 = vxor.u32 %v2272, 2147483648
      %v2382 = vxor.u32 %v2274, 2147483648
      %v2383 = vmul.f32 %v2379, 1.442695
      %v2384 = vpow.pop %v2383
      %v2385 = vmul.f32 %v2380, 1.442695
      %v2386 = vpow.pop %v2385
      %v2387 = vmul.f32 %v2381, 1.442695
      %v2388 = vpow.pop %v2387
      %v2389 = vmul.f32 %v2382, 1.442695
      %v2390 = vpow.pop %v2389
      %v2391 = vadd.f32 %v2384, 1.0
      %v2392 = vadd.f32 %v2386, 1.0
      %v2393 = vadd.f32 %v2388, 1.0
      %v2394 = vadd.f32 %v2390, 1.0
      %v2395 = vrcp.pop %v2391
      %v2396 = vmul.f32 1.0, %v2395
      %v2397 = vrcp.pop %v2392
      %v2398 = vmul.f32 1.0, %v2397
      %v2399 = vrcp.pop %v2393
      %v2400 = vmul.f32 1.0, %v2399
      %v2401 = vrcp.pop %v2394
      %v2402 = vmul.f32 1.0, %v2401
      %v2403 = vmul.f32 %v2268, %v2396
      %v2404 = vmul.f32 %v2270, %v2398
      %v2405 = vmul.f32 %v2272, %v2400
      %v2406 = vmul.f32 %v2274, %v2402
      %v2407 = vmul.f32 %v2403, %v2371
      %v2408 = vmul.f32 %v2404, %v2373
      %v2409 = vmul.f32 %v2405, %v2375
      %v2410 = vmul.f32 %v2406, %v2377
      %v2411 = vpack.c.bf16 %v2409, %v2407
      %v2412 = vpack.c.bf16 %v2410, %v2408
      %v2413 = vld [vmem:[%s16] sm:$0xf]
      %v2414 = vld [vmem:[%s16 + $0x4] sm:$0xf]
      %v2415 = vld [vmem:[%s16 + $0x8] sm:$0xf]
      %v2416 = vld [vmem:[%s16 + $0xc] sm:$0xf]
      %v2417 = vld [vmem:[%s16 + $0x10] sm:$0xf]
      %v2418 = vld [vmem:[%s16 + $0x14] sm:$0xf]
      %v2419 = vld [vmem:[%s16 + $0x18] sm:$0xf]
      %v2420 = vld [vmem:[%s16 + $0x1c] sm:$0xf]
      %v2421 = vld [vmem:[%s16 + $0x20] sm:$0xf]
      %v2422 = vld [vmem:[%s16 + $0x24] sm:$0xf]
      %v2423 = vld [vmem:[%s16 + $0x28] sm:$0xf]
      %v2424 = vld [vmem:[%s16 + $0x2c] sm:$0xf]
      %v2425 = vld [vmem:[%s16 + $0x30] sm:$0xf]
      %v2426 = vld [vmem:[%s16 + $0x34] sm:$0xf]
      %v2427 = vld [vmem:[%s16 + $0x38] sm:$0xf]
      %v2428 = vld [vmem:[%s16 + $0x3c] sm:$0xf]
      %v2429 = vld [vmem:[%s16 + $0x40] sm:$0xf]
      %v2430 = vld [vmem:[%s16 + $0x44] sm:$0xf]
      %v2431 = vld [vmem:[%s16 + $0x48] sm:$0xf]
      %v2432 = vld [vmem:[%s16 + $0x4c] sm:$0xf]
      %v2433 = vld [vmem:[%s16 + $0x50] sm:$0xf]
      %v2434 = vld [vmem:[%s16 + $0x54] sm:$0xf]
      %v2435 = vld [vmem:[%s16 + $0x58] sm:$0xf]
      %v2436 = vld [vmem:[%s16 + $0x5c] sm:$0xf]
      %v2437 = vld [vmem:[%s16 + $0x60] sm:$0xf]
      %v2438 = vld [vmem:[%s16 + $0x64] sm:$0xf]
      %v2439 = vld [vmem:[%s16 + $0x68] sm:$0xf]
      %v2440 = vld [vmem:[%s16 + $0x6c] sm:$0xf]
      %v2441 = vld [vmem:[%s16 + $0x70] sm:$0xf]
      %v2442 = vld [vmem:[%s16 + $0x74] sm:$0xf]
      %v2443 = vld [vmem:[%s16 + $0x78] sm:$0xf]
      %v2444 = vld [vmem:[%s16 + $0x7c] sm:$0xf]
      %v2445 = vld [vmem:[%s17] sm:$0x1]
      %v2447 = vlaneseq
      %v2448 = vshrl.u32 %v2447, 7
      %v2449 = vsub.s32 0, %v2448
      %v2450 = vrot.slane %v2445, %v2449
      %v2484 = vunpack.c.l.b16 %v2413
      %v2485 = vunpack.c.l.b16 %v2414
      %v2486 = vunpack.c.l.b16 %v2415
      %v2487 = vunpack.c.l.b16 %v2416
      %v2488 = vunpack.c.l.b16 %v2417
      %v2489 = vunpack.c.l.b16 %v2418
      %v2490 = vunpack.c.l.b16 %v2419
      %v2491 = vunpack.c.l.b16 %v2420
      %v2492 = vunpack.c.l.b16 %v2421
      %v2493 = vunpack.c.l.b16 %v2422
      %v2494 = vunpack.c.l.b16 %v2423
      %v2495 = vunpack.c.l.b16 %v2424
      %v2496 = vunpack.c.l.b16 %v2425
      %v2497 = vunpack.c.l.b16 %v2426
      %v2498 = vunpack.c.l.b16 %v2427
      %v2499 = vunpack.c.l.b16 %v2428
      %v2500 = vunpack.c.l.b16 %v2429
      %v2501 = vunpack.c.l.b16 %v2430
      %v2502 = vunpack.c.l.b16 %v2431
      %v2503 = vunpack.c.l.b16 %v2432
      %v2504 = vunpack.c.l.b16 %v2433
      %v2505 = vunpack.c.l.b16 %v2434
      %v2506 = vunpack.c.l.b16 %v2435
      %v2507 = vunpack.c.l.b16 %v2436
      %v2508 = vunpack.c.l.b16 %v2437
      %v2509 = vunpack.c.l.b16 %v2438
      %v2510 = vunpack.c.l.b16 %v2439
      %v2511 = vunpack.c.l.b16 %v2440
      %v2512 = vunpack.c.l.b16 %v2441
      %v2513 = vunpack.c.l.b16 %v2442
      %v2514 = vunpack.c.l.b16 %v2443
      %v2515 = vunpack.c.l.b16 %v2444
      %v2516 = vpack.c.b16 %v2485, %v2484
      %v2517 = vpack.c.b16 %v2487, %v2486
      %v2518 = vpack.c.b16 %v2489, %v2488
      %v2519 = vpack.c.b16 %v2491, %v2490
      %v2520 = vpack.c.b16 %v2493, %v2492
      %v2521 = vpack.c.b16 %v2495, %v2494
      %v2522 = vpack.c.b16 %v2497, %v2496
      %v2523 = vpack.c.b16 %v2499, %v2498
      %v2524 = vpack.c.b16 %v2501, %v2500
      %v2525 = vpack.c.b16 %v2503, %v2502
      %v2526 = vpack.c.b16 %v2505, %v2504
      %v2527 = vpack.c.b16 %v2507, %v2506
      %v2528 = vpack.c.b16 %v2509, %v2508
      %v2529 = vpack.c.b16 %v2511, %v2510
      %v2530 = vpack.c.b16 %v2513, %v2512
      %v2531 = vpack.c.b16 %v2515, %v2514
      %2548 = vmatprep.subr.bf16.mxu0 0
      %2549 = vmatpush1.bf16.msra.mxu0 %v2523
      %2550 = vmatprep.subr.bf16.mxu0 0
      %2551 = vmatpush1.bf16.msra.mxu0 %v2522
      %2552 = vmatprep.subr.bf16.mxu0 0
      %2553 = vmatpush1.bf16.msra.mxu0 %v2521
      %2554 = vmatprep.subr.bf16.mxu0 0
      %2555 = vmatpush1.bf16.msra.mxu0 %v2520
      %2556 = vmatprep.subr.bf16.mxu0 0
      %2557 = vmatpush1.bf16.msra.mxu0 %v2519
      %2558 = vmatprep.subr.bf16.mxu0 0
      %2559 = vmatpush1.bf16.msra.mxu0 %v2518
      %2560 = vmatprep.subr.bf16.mxu0 0
      %2561 = vmatpush1.bf16.msra.mxu0 %v2517
      %2562 = vmatprep.subr.bf16.mxu0 0
      %2563 = vmatpush1.bf16.msra.mxu0 %v2516
      %2564 = vmatprep.subr.bf16.mxu0 0
      %2565 = vmatpush2.bf16.msra.mxu0 %v2531
      %2566 = vmatprep.subr.bf16.mxu0 0
      %2567 = vmatpush2.bf16.msra.mxu0 %v2530
      %2568 = vmatprep.subr.bf16.mxu0 0
      %2569 = vmatpush2.bf16.msra.mxu0 %v2529
      %2570 = vmatprep.subr.bf16.mxu0 0
      %2571 = vmatpush2.bf16.msra.mxu0 %v2528
      %2572 = vmatprep.subr.bf16.mxu0 0
      %2573 = vmatpush2.bf16.msra.mxu0 %v2527
      %2574 = vmatprep.subr.bf16.mxu0 0
      %2575 = vmatpush2.bf16.msra.mxu0 %v2526
      %2576 = vmatprep.subr.bf16.mxu0 0
      %2577 = vmatpush2.bf16.msra.mxu0 %v2525
      %2578 = vmatprep.subr.bf16.mxu0 0
      %2579 = vmatpush2.bf16.msra.mxu0 %v2524
      %2580 = vmatprep.mubr.bf16.mxu0 %v2412
      %2581 = vmatmul.mubr.bf16.gmra.mxu0 %v2411
      %v2582 = vpop.f32.mrf.mxu0
      %v2583 = vadd.f32 %v2450, %v2582
      %v2584 = vpop.f32.mrf.mxu0
      %v2585 = vpop.f32.mrf.mxu0
      %v2586 = vadd.f32 %v2450, %v2585
      %v2587 = vpop.f32.mrf.mxu0
      %2588 = vdwg.mxu0
      %v2589 = vadd.f32 %v2142, %v2583
      %v2590 = vadd.f32 %v2143, %v2586
      %v2591 = vpack.c.bf16 %v2590, %v2589
      %v2593 = vunpack.c.l.b16 %v2591
      %v2594 = vunpack.c.h.b16 %v2591
      %v2595 = vpack.c.b16 %v2593, %v2593
      %v2596 = vpack.c.b16 %v2594, %v2594
      %vm2599 = vcmask 519168
      %2600 = vst.msk [vmem:[%s575] sm:$0xf] %vm2599, %v2595
      %2601 = vst.msk [vmem:[%s575 + $0x4] sm:$0xf] %vm2599, %v2596
      %p2602 = scmp.lt.s32.totalorder %s29, 1
      %s2603 = scalar_select %p2602, %s29, 1
      %s2604 = smul.addr %s2603, 2
      %s2605 = smul.addr %s2604, 4
      %s2606 = scalar_lea.vmem %s18, %s2605
      // Predicated region
      $region93: #{masked_predictor_forward.5} parent=91 // pred_check
        %p2607 = pneg %p430
      $region94: #{masked_predictor_forward.5} parent=91 // pred_check_branch
        %2609 = sbr.rel (%p2607) target = $region96
      $region95: #{masked_predictor_forward.5} parent=91 // pred_region
        _
      $region96: #{masked_predictor_forward.5} parent=91 // pred_fallthru
        _
    $region92: #{masked_predictor_forward.5} parent=5 // pred_fallthru
      _
    %p2610 = scmp.le.s32.totalorder 2, %s24
    // Predicated region
    $region97: #{masked_predictor_forward.5} parent=5 // pred_check
      %p2611 = pneg %p2610
    $region98: #{masked_predictor_forward.5} parent=5 // pred_check_branch
      %2613 = sbr.rel (%p2611) target = $region100
    $region99: #{masked_predictor_forward.5} parent=5 // pred_region
      %s2614 = ssub.s32 %s24, 2
      // Predicated region
      $region101: #{masked_predictor_forward.5} parent=99 // pred_check
        %p2615 = pneg %p436
      $region102: #{masked_predictor_forward.5} parent=99 // pred_check_branch
        %2617 = sbr.rel (%p2615) target = $region104
      $region103: #{masked_predictor_forward.5} parent=99 // pred_region
        %p2618 = scmp.lt.s32.totalorder %s30, 1
        %s2619 = scalar_select %p2618, %s30, 1
        %s2620 = smul.addr %s2619, 2
        %s2621 = smul.addr %s2620, 4
        %s2622 = scalar_lea.vmem %s18, %s2621
      $region104: #{masked_predictor_forward.5} parent=99 // pred_fallthru
        _
    $region100: #{masked_predictor_forward.5} parent=5 // pred_fallthru
      _
  $region6: #{masked_predictor_forward.5} parent=0 // loop_footer
    %s28 = sadd.s32 1, %s24
  $region7: #{masked_predictor_forward.5} parent=0 // loop_footer_branch
    %23 = sbr.rel target = $region3
  $region8: #{masked_predictor_forward.5} parent=0 // loop_exit
    _

// kernel: masked_predictor_forward.6
$region0: #{masked_predictor_forward.6}
  #allocation0 [shape = 'u32[]', space=smem, size = 0x4, offset = 0x4, fixed_abs, tag = 'smem constant byte address 0x4 - core index']
  #allocation1 [shape = 'u32[144,128]{1,0:T(1,128)}', space=vmem, size = 0x12000, scoped, tag = 'internal scratch']
  %s0 = inlined_call_operand.vmem [shape: bf16[2,16,64], index: 0, kind: input, shape index: {}]
  %s1 = inlined_call_operand.vmem [shape: f32[1,64], index: 1, kind: input, shape index: {}]
  %s2 = inlined_call_operand.vmem [shape: bf16[64,64], index: 2, kind: input, shape index: {}]
  %s3 = inlined_call_operand.vmem [shape: bf16[64,64], index: 3, kind: input, shape index: {}]
  %s4 = inlined_call_operand.vmem [shape: bf16[64,64], index: 4, kind: input, shape index: {}]
  %s5 = inlined_call_operand.vmem [shape: f32[1,64], index: 5, kind: input, shape index: {}]
  %s6 = inlined_call_operand.vmem [shape: f32[1,64], index: 6, kind: input, shape index: {}]
  %s7 = inlined_call_operand.vmem [shape: f32[1,64], index: 7, kind: input, shape index: {}]
  %s8 = inlined_call_operand.vmem [shape: bf16[64,64], index: 8, kind: input, shape index: {}]
  %s9 = inlined_call_operand.vmem [shape: f32[1,64], index: 9, kind: input, shape index: {}]
  %s10 = inlined_call_operand.vmem [shape: f32[1,64], index: 10, kind: input, shape index: {}]
  %s11 = inlined_call_operand.vmem [shape: bf16[64,256], index: 11, kind: input, shape index: {}]
  %s12 = inlined_call_operand.vmem [shape: f32[1,256], index: 12, kind: input, shape index: {}]
  %s13 = inlined_call_operand.vmem [shape: bf16[64,256], index: 13, kind: input, shape index: {}]
  %s14 = inlined_call_operand.vmem [shape: f32[1,256], index: 14, kind: input, shape index: {}]
  %s15 = inlined_call_operand.vmem [shape: bf16[256,64], index: 15, kind: input, shape index: {}]
  %s16 = inlined_call_operand.vmem [shape: f32[1,64], index: 16, kind: input, shape index: {}]
  %s17 = inlined_call_operand.vmem [shape: bf16[2,16,64], index: 17, kind: output, shape index: {}]
  %s18 = sld [smem:[#allocation0]]
  $region101: #{masked_predictor_forward.6} parent=0
    _
  %s20 = ssub.s32 1, %s18
  %s21 = scalar_select 0, %s20, %s18
  loop: start=0, step=1, limit=4
  $region2: #{masked_predictor_forward.6} parent=0 // loop_pre_header
    _
  $region3: #{masked_predictor_forward.6} parent=0 // loop_header
    %s23 = sphi 0, %s27
    %p24 = scmp.ge.s32.totalorder %s23, 4
    %s33 = sphi 0, %s35
    %s36 = sphi 0, %s33
    %s37 = sphi 0, %s36
    %s53 = sphi 0, %s37
    %s57 = sphi 0, %s57
    %s59 = sphi 0, %s57
    %s60 = sphi 0, %s59
    %s74 = sphi 0, %s60
    %s78 = sphi 0, %s78
    %s80 = sphi 0, %s78
    %s81 = sphi 0, %s80
    %s95 = sphi 0, %s81
    %s99 = sphi 0, %s99
    %s101 = sphi 0, %s99
    %s102 = sphi 0, %s101
    %s116 = sphi 0, %s102
    %s120 = sphi 0, %s120
    %s122 = sphi 0, %s120
    %s123 = sphi 0, %s122
    %s137 = sphi 0, %s123
    %s141 = sphi 0, %s141
    %s143 = sphi 0, %s141
    %s144 = sphi 0, %s143
    %s158 = sphi 0, %s144
    %s162 = sphi 0, %s162
    %s164 = sphi 0, %s162
    %s165 = sphi 0, %s164
    %s179 = sphi 0, %s165
    %s183 = sphi 0, %s183
    %s185 = sphi 0, %s183
    %s186 = sphi 0, %s185
    %s200 = sphi 0, %s186
    %s204 = sphi 0, %s204
    %s206 = sphi 0, %s204
    %s207 = sphi 0, %s206
    %s221 = sphi 0, %s207
    %s225 = sphi 0, %s225
    %s227 = sphi 0, %s225
    %s228 = sphi 0, %s227
    %s242 = sphi 0, %s228
    %s246 = sphi 0, %s246
    %s248 = sphi 0, %s246
    %s249 = sphi 0, %s248
    %s263 = sphi 0, %s249
    %s267 = sphi 0, %s267
    %s269 = sphi 0, %s267
    %s270 = sphi 0, %s269
    %s284 = sphi 0, %s270
    %s288 = sphi 0, %s288
    %s290 = sphi 0, %s288
    %s291 = sphi 0, %s290
    %s305 = sphi 0, %s291
    %s309 = sphi 0, %s309
    %s311 = sphi 0, %s309
    %s312 = sphi 0, %s311
    %s326 = sphi 0, %s312
    %s330 = sphi 0, %s330
    %s332 = sphi 0, %s330
    %s333 = sphi 0, %s332
    %s347 = sphi 0, %s333
    %s351 = sphi 0, %s351
    %s353 = sphi 0, %s351
    %s354 = sphi 0, %s353
    %s368 = sphi 0, %s354
    %s372 = sphi 0, %s372
    %s374 = sphi 0, %s372
    %s375 = sphi 0, %s374
    %s389 = sphi 0, %s375
    %s395 = sphi 0, %s397
    %s398 = sphi 0, %s395
    %s399 = sphi 0, %s398
    %s415 = sphi 0, %s399
  $region4: #{masked_predictor_forward.6} parent=0 // loop_header_branch
    %26 = sbr.rel (%p24) target = $region8
  $region5: #{masked_predictor_forward.6} parent=0 // loop_body
    %s28 = ssub.s32 %s23, 1
    %s29 = ssub.s32 %s23, 2
    %s30 = sadd.s32 %s23, 1
    %s31 = ssub.s32 %s23, %s30
    %p32 = scmp.eq.s32.totalorder %s31, 0
    %s34 = sadd.s32 %s33, 1
    %s35 = scalar_select %p32, %s33, %s34
    %p38 = pneg %p32
    %p39 = scmp.eq.s32.totalorder %s23, 1
    %p40 = por %p38, %p39
    %p41 = scmp.ne.s32.totalorder %s33, %s36
    %p42 = scmp.eq.s32.totalorder %s23, 0
    %p43 = por %p41, %p42
    %p44 = scmp.ne.s32.totalorder %s33, %s36
    %p45 = scmp.eq.s32.totalorder %s28, 1
    %p46 = por %p44, %p45
    %p47 = scmp.ne.s32.totalorder %s36, %s37
    %p48 = scmp.eq.s32.totalorder %s28, 0
    %p49 = por %p47, %p48
    %p50 = scmp.ne.s32.totalorder %s36, %s37
    %p51 = scmp.eq.s32.totalorder %s29, 1
    %p52 = por %p50, %p51
    %p54 = scmp.ne.s32.totalorder %s37, %s53
    %p55 = scmp.eq.s32.totalorder %s29, 0
    %p56 = por %p54, %p55
    %s58 = sadd.s32 %s57, 1
    %p61 = scmp.eq.s32.totalorder %s23, 1
    %p62 = scmp.ne.s32.totalorder %s57, %s59
    %p63 = scmp.eq.s32.totalorder %s23, 0
    %p64 = por %p62, %p63
    %p65 = scmp.ne.s32.totalorder %s57, %s59
    %p66 = scmp.eq.s32.totalorder %s28, 1
    %p67 = por %p65, %p66
    %p68 = scmp.ne.s32.totalorder %s59, %s60
    %p69 = scmp.eq.s32.totalorder %s28, 0
    %p70 = por %p68, %p69
    %p71 = scmp.ne.s32.totalorder %s59, %s60
    %p72 = scmp.eq.s32.totalorder %s29, 1
    %p73 = por %p71, %p72
    %p75 = scmp.ne.s32.totalorder %s60, %s74
    %p76 = scmp.eq.s32.totalorder %s29, 0
    %p77 = por %p75, %p76
    %s79 = sadd.s32 %s78, 1
    %p82 = scmp.eq.s32.totalorder %s23, 1
    %p83 = scmp.ne.s32.totalorder %s78, %s80
    %p84 = scmp.eq.s32.totalorder %s23, 0
    %p85 = por %p83, %p84
    %p86 = scmp.ne.s32.totalorder %s78, %s80
    %p87 = scmp.eq.s32.totalorder %s28, 1
    %p88 = por %p86, %p87
    %p89 = scmp.ne.s32.totalorder %s80, %s81
    %p90 = scmp.eq.s32.totalorder %s28, 0
    %p91 = por %p89, %p90
    %p92 = scmp.ne.s32.totalorder %s80, %s81
    %p93 = scmp.eq.s32.totalorder %s29, 1
    %p94 = por %p92, %p93
    %p96 = scmp.ne.s32.totalorder %s81, %s95
    %p97 = scmp.eq.s32.totalorder %s29, 0
    %p98 = por %p96, %p97
    %s100 = sadd.s32 %s99, 1
    %p103 = scmp.eq.s32.totalorder %s23, 1
    %p104 = scmp.ne.s32.totalorder %s99, %s101
    %p105 = scmp.eq.s32.totalorder %s23, 0
    %p106 = por %p104, %p105
    %p107 = scmp.ne.s32.totalorder %s99, %s101
    %p108 = scmp.eq.s32.totalorder %s28, 1
    %p109 = por %p107, %p108
    %p110 = scmp.ne.s32.totalorder %s101, %s102
    %p111 = scmp.eq.s32.totalorder %s28, 0
    %p112 = por %p110, %p111
    %p113 = scmp.ne.s32.totalorder %s101, %s102
    %p114 = scmp.eq.s32.totalorder %s29, 1
    %p115 = por %p113, %p114
    %p117 = scmp.ne.s32.totalorder %s102, %s116
    %p118 = scmp.eq.s32.totalorder %s29, 0
    %p119 = por %p117, %p118
    %s121 = sadd.s32 %s120, 1
    %p124 = scmp.eq.s32.totalorder %s23, 1
    %p125 = scmp.ne.s32.totalorder %s120, %s122
    %p126 = scmp.eq.s32.totalorder %s23, 0
    %p127 = por %p125, %p126
    %p128 = scmp.ne.s32.totalorder %s120, %s122
    %p129 = scmp.eq.s32.totalorder %s28, 1
    %p130 = por %p128, %p129
    %p131 = scmp.ne.s32.totalorder %s122, %s123
    %p132 = scmp.eq.s32.totalorder %s28, 0
    %p133 = por %p131, %p132
    %p134 = scmp.ne.s32.totalorder %s122, %s123
    %p135 = scmp.eq.s32.totalorder %s29, 1
    %p136 = por %p134, %p135
    %p138 = scmp.ne.s32.totalorder %s123, %s137
    %p139 = scmp.eq.s32.totalorder %s29, 0
    %p140 = por %p138, %p139
    %s142 = sadd.s32 %s141, 1
    %p145 = scmp.eq.s32.totalorder %s23, 1
    %p146 = scmp.ne.s32.totalorder %s141, %s143
    %p147 = scmp.eq.s32.totalorder %s23, 0
    %p148 = por %p146, %p147
    %p149 = scmp.ne.s32.totalorder %s141, %s143
    %p150 = scmp.eq.s32.totalorder %s28, 1
    %p151 = por %p149, %p150
    %p152 = scmp.ne.s32.totalorder %s143, %s144
    %p153 = scmp.eq.s32.totalorder %s28, 0
    %p154 = por %p152, %p153
    %p155 = scmp.ne.s32.totalorder %s143, %s144
    %p156 = scmp.eq.s32.totalorder %s29, 1
    %p157 = por %p155, %p156
    %p159 = scmp.ne.s32.totalorder %s144, %s158
    %p160 = scmp.eq.s32.totalorder %s29, 0
    %p161 = por %p159, %p160
    %s163 = sadd.s32 %s162, 1
    %p166 = scmp.eq.s32.totalorder %s23, 1
    %p167 = scmp.ne.s32.totalorder %s162, %s164
    %p168 = scmp.eq.s32.totalorder %s23, 0
    %p169 = por %p167, %p168
    %p170 = scmp.ne.s32.totalorder %s162, %s164
    %p171 = scmp.eq.s32.totalorder %s28, 1
    %p172 = por %p170, %p171
    %p173 = scmp.ne.s32.totalorder %s164, %s165
    %p174 = scmp.eq.s32.totalorder %s28, 0
    %p175 = por %p173, %p174
    %p176 = scmp.ne.s32.totalorder %s164, %s165
    %p177 = scmp.eq.s32.totalorder %s29, 1
    %p178 = por %p176, %p177
    %p180 = scmp.ne.s32.totalorder %s165, %s179
    %p181 = scmp.eq.s32.totalorder %s29, 0
    %p182 = por %p180, %p181
    %s184 = sadd.s32 %s183, 1
    %p187 = scmp.eq.s32.totalorder %s23, 1
    %p188 = scmp.ne.s32.totalorder %s183, %s185
    %p189 = scmp.eq.s32.totalorder %s23, 0
    %p190 = por %p188, %p189
    %p191 = scmp.ne.s32.totalorder %s183, %s185
    %p192 = scmp.eq.s32.totalorder %s28, 1
    %p193 = por %p191, %p192
    %p194 = scmp.ne.s32.totalorder %s185, %s186
    %p195 = scmp.eq.s32.totalorder %s28, 0
    %p196 = por %p194, %p195
    %p197 = scmp.ne.s32.totalorder %s185, %s186
    %p198 = scmp.eq.s32.totalorder %s29, 1
    %p199 = por %p197, %p198
    %p201 = scmp.ne.s32.totalorder %s186, %s200
    %p202 = scmp.eq.s32.totalorder %s29, 0
    %p203 = por %p201, %p202
    %s205 = sadd.s32 %s204, 1
    %p208 = scmp.eq.s32.totalorder %s23, 1
    %p209 = scmp.ne.s32.totalorder %s204, %s206
    %p210 = scmp.eq.s32.totalorder %s23, 0
    %p211 = por %p209, %p210
    %p212 = scmp.ne.s32.totalorder %s204, %s206
    %p213 = scmp.eq.s32.totalorder %s28, 1
    %p214 = por %p212, %p213
    %p215 = scmp.ne.s32.totalorder %s206, %s207
    %p216 = scmp.eq.s32.totalorder %s28, 0
    %p217 = por %p215, %p216
    %p218 = scmp.ne.s32.totalorder %s206, %s207
    %p219 = scmp.eq.s32.totalorder %s29, 1
    %p220 = por %p218, %p219
    %p222 = scmp.ne.s32.totalorder %s207, %s221
    %p223 = scmp.eq.s32.totalorder %s29, 0
    %p224 = por %p222, %p223
    %s226 = sadd.s32 %s225, 1
    %p229 = scmp.eq.s32.totalorder %s23, 1
    %p230 = scmp.ne.s32.totalorder %s225, %s227
    %p231 = scmp.eq.s32.totalorder %s23, 0
    %p232 = por %p230, %p231
    %p233 = scmp.ne.s32.totalorder %s225, %s227
    %p234 = scmp.eq.s32.totalorder %s28, 1
    %p235 = por %p233, %p234
    %p236 = scmp.ne.s32.totalorder %s227, %s228
    %p237 = scmp.eq.s32.totalorder %s28, 0
    %p238 = por %p236, %p237
    %p239 = scmp.ne.s32.totalorder %s227, %s228
    %p240 = scmp.eq.s32.totalorder %s29, 1
    %p241 = por %p239, %p240
    %p243 = scmp.ne.s32.totalorder %s228, %s242
    %p244 = scmp.eq.s32.totalorder %s29, 0
    %p245 = por %p243, %p244
    %s247 = sadd.s32 %s246, 1
    %p250 = scmp.eq.s32.totalorder %s23, 1
    %p251 = scmp.ne.s32.totalorder %s246, %s248
    %p252 = scmp.eq.s32.totalorder %s23, 0
    %p253 = por %p251, %p252
    %p254 = scmp.ne.s32.totalorder %s246, %s248
    %p255 = scmp.eq.s32.totalorder %s28, 1
    %p256 = por %p254, %p255
    %p257 = scmp.ne.s32.totalorder %s248, %s249
    %p258 = scmp.eq.s32.totalorder %s28, 0
    %p259 = por %p257, %p258
    %p260 = scmp.ne.s32.totalorder %s248, %s249
    %p261 = scmp.eq.s32.totalorder %s29, 1
    %p262 = por %p260, %p261
    %p264 = scmp.ne.s32.totalorder %s249, %s263
    %p265 = scmp.eq.s32.totalorder %s29, 0
    %p266 = por %p264, %p265
    %s268 = sadd.s32 %s267, 1
    %p271 = scmp.eq.s32.totalorder %s23, 1
    %p272 = scmp.ne.s32.totalorder %s267, %s269
    %p273 = scmp.eq.s32.totalorder %s23, 0
    %p274 = por %p272, %p273
    %p275 = scmp.ne.s32.totalorder %s267, %s269
    %p276 = scmp.eq.s32.totalorder %s28, 1
    %p277 = por %p275, %p276
    %p278 = scmp.ne.s32.totalorder %s269, %s270
    %p279 = scmp.eq.s32.totalorder %s28, 0
    %p280 = por %p278, %p279
    %p281 = scmp.ne.s32.totalorder %s269, %s270
    %p282 = scmp.eq.s32.totalorder %s29, 1
    %p283 = por %p281, %p282
    %p285 = scmp.ne.s32.totalorder %s270, %s284
    %p286 = scmp.eq.s32.totalorder %s29, 0
    %p287 = por %p285, %p286
    %s289 = sadd.s32 %s288, 1
    %p292 = scmp.eq.s32.totalorder %s23, 1
    %p293 = scmp.ne.s32.totalorder %s288, %s290
    %p294 = scmp.eq.s32.totalorder %s23, 0
    %p295 = por %p293, %p294
    %p296 = scmp.ne.s32.totalorder %s288, %s290
    %p297 = scmp.eq.s32.totalorder %s28, 1
    %p298 = por %p296, %p297
    %p299 = scmp.ne.s32.totalorder %s290, %s291
    %p300 = scmp.eq.s32.totalorder %s28, 0
    %p301 = por %p299, %p300
    %p302 = scmp.ne.s32.totalorder %s290, %s291
    %p303 = scmp.eq.s32.totalorder %s29, 1
    %p304 = por %p302, %p303
    %p306 = scmp.ne.s32.totalorder %s291, %s305
    %p307 = scmp.eq.s32.totalorder %s29, 0
    %p308 = por %p306, %p307
    %s310 = sadd.s32 %s309, 1
    %p313 = scmp.eq.s32.totalorder %s23, 1
    %p314 = scmp.ne.s32.totalorder %s309, %s311
    %p315 = scmp.eq.s32.totalorder %s23, 0
    %p316 = por %p314, %p315
    %p317 = scmp.ne.s32.totalorder %s309, %s311
    %p318 = scmp.eq.s32.totalorder %s28, 1
    %p319 = por %p317, %p318
    %p320 = scmp.ne.s32.totalorder %s311, %s312
    %p321 = scmp.eq.s32.totalorder %s28, 0
    %p322 = por %p320, %p321
    %p323 = scmp.ne.s32.totalorder %s311, %s312
    %p324 = scmp.eq.s32.totalorder %s29, 1
    %p325 = por %p323, %p324
    %p327 = scmp.ne.s32.totalorder %s312, %s326
    %p328 = scmp.eq.s32.totalorder %s29, 0
    %p329 = por %p327, %p328
    %s331 = sadd.s32 %s330, 1
    %p334 = scmp.eq.s32.totalorder %s23, 1
    %p335 = scmp.ne.s32.totalorder %s330, %s332
    %p336 = scmp.eq.s32.totalorder %s23, 0
    %p337 = por %p335, %p336
    %p338 = scmp.ne.s32.totalorder %s330, %s332
    %p339 = scmp.eq.s32.totalorder %s28, 1
    %p340 = por %p338, %p339
    %p341 = scmp.ne.s32.totalorder %s332, %s333
    %p342 = scmp.eq.s32.totalorder %s28, 0
    %p343 = por %p341, %p342
    %p344 = scmp.ne.s32.totalorder %s332, %s333
    %p345 = scmp.eq.s32.totalorder %s29, 1
    %p346 = por %p344, %p345
    %p348 = scmp.ne.s32.totalorder %s333, %s347
    %p349 = scmp.eq.s32.totalorder %s29, 0
    %p350 = por %p348, %p349
    %s352 = sadd.s32 %s351, 1
    %p355 = scmp.eq.s32.totalorder %s23, 1
    %p356 = scmp.ne.s32.totalorder %s351, %s353
    %p357 = scmp.eq.s32.totalorder %s23, 0
    %p358 = por %p356, %p357
    %p359 = scmp.ne.s32.totalorder %s351, %s353
    %p360 = scmp.eq.s32.totalorder %s28, 1
    %p361 = por %p359, %p360
    %p362 = scmp.ne.s32.totalorder %s353, %s354
    %p363 = scmp.eq.s32.totalorder %s28, 0
    %p364 = por %p362, %p363
    %p365 = scmp.ne.s32.totalorder %s353, %s354
    %p366 = scmp.eq.s32.totalorder %s29, 1
    %p367 = por %p365, %p366
    %p369 = scmp.ne.s32.totalorder %s354, %s368
    %p370 = scmp.eq.s32.totalorder %s29, 0
    %p371 = por %p369, %p370
    %s373 = sadd.s32 %s372, 1
    %p376 = scmp.eq.s32.totalorder %s23, 1
    %p377 = scmp.ne.s32.totalorder %s372, %s374
    %p378 = scmp.eq.s32.totalorder %s23, 0
    %p379 = por %p377, %p378
    %p380 = scmp.ne.s32.totalorder %s372, %s374
    %p381 = scmp.eq.s32.totalorder %s28, 1
    %p382 = por %p380, %p381
    %p383 = scmp.ne.s32.totalorder %s374, %s375
    %p384 = scmp.eq.s32.totalorder %s28, 0
    %p385 = por %p383, %p384
    %p386 = scmp.ne.s32.totalorder %s374, %s375
    %p387 = scmp.eq.s32.totalorder %s29, 1
    %p388 = por %p386, %p387
    %p390 = scmp.ne.s32.totalorder %s375, %s389
    %p391 = scmp.eq.s32.totalorder %s29, 0
    %p392 = por %p390, %p391
    %s393 = ssub.s32 %s23, %s30
    %p394 = scmp.eq.s32.totalorder %s393, 0
    %s396 = sadd.s32 %s395, 1
    %s397 = scalar_select %p394, %s395, %s396
    %p400 = pneg %p394
    %p401 = scmp.eq.s32.totalorder %s23, 1
    %p402 = por %p400, %p401
    %p403 = scmp.ne.s32.totalorder %s395, %s398
    %p404 = scmp.eq.s32.totalorder %s23, 0
    %p405 = por %p403, %p404
    %p406 = scmp.ne.s32.totalorder %s395, %s398
    %p407 = scmp.eq.s32.totalorder %s28, 1
    %p408 = por %p406, %p407
    %p409 = scmp.ne.s32.totalorder %s398, %s399
    %p410 = scmp.eq.s32.totalorder %s28, 0
    %p411 = por %p409, %p410
    %p412 = scmp.ne.s32.totalorder %s398, %s399
    %p413 = scmp.eq.s32.totalorder %s29, 1
    %p414 = por %p412, %p413
    %p416 = scmp.ne.s32.totalorder %s399, %s415
    %p417 = scmp.eq.s32.totalorder %s29, 0
    %p418 = por %p416, %p417
    %p419 = scmp.le.s32.totalorder 1, %s23
    %p420 = scmp.lt.s32.totalorder %s23, 3
    %p421 = pnand %p419, %p420
    %p422 = pneg %p421
    // Predicated region
    $region9: #{masked_predictor_forward.6} parent=5 // pred_check
      _
    $region10: #{masked_predictor_forward.6} parent=5 // pred_check_branch
      %424 = sbr.rel (%p421) target = $region12
    $region11: #{masked_predictor_forward.6} parent=5 // pred_region
      %s425 = ssub.s32 %s23, 1
      // Predicated region
      $region13: #{masked_predictor_forward.6} parent=11 // pred_check
        %p426 = pneg %p70
      $region14: #{masked_predictor_forward.6} parent=11 // pred_check_branch
        %428 = sbr.rel (%p426) target = $region16
      $region15: #{masked_predictor_forward.6} parent=11 // pred_region
        _
      $region16: #{masked_predictor_forward.6} parent=11 // pred_fallthru
        _
      // Predicated region
      $region17: #{masked_predictor_forward.6} parent=11 // pred_check
        %p429 = pneg %p91
      $region18: #{masked_predictor_forward.6} parent=11 // pred_check_branch
        %431 = sbr.rel (%p429) target = $region20
      $region19: #{masked_predictor_forward.6} parent=11 // pred_region
        _
      $region20: #{masked_predictor_forward.6} parent=11 // pred_fallthru
        _
      // Predicated region
      $region21: #{masked_predictor_forward.6} parent=11 // pred_check
        %p432 = pneg %p112
      $region22: #{masked_predictor_forward.6} parent=11 // pred_check_branch
        %434 = sbr.rel (%p432) target = $region24
      $region23: #{masked_predictor_forward.6} parent=11 // pred_region
        _
      $region24: #{masked_predictor_forward.6} parent=11 // pred_fallthru
        _
      // Predicated region
      $region25: #{masked_predictor_forward.6} parent=11 // pred_check
        %p435 = pneg %p133
      $region26: #{masked_predictor_forward.6} parent=11 // pred_check_branch
        %437 = sbr.rel (%p435) target = $region28
      $region27: #{masked_predictor_forward.6} parent=11 // pred_region
        _
      $region28: #{masked_predictor_forward.6} parent=11 // pred_fallthru
        _
      // Predicated region
      $region29: #{masked_predictor_forward.6} parent=11 // pred_check
        %p438 = pneg %p154
      $region30: #{masked_predictor_forward.6} parent=11 // pred_check_branch
        %440 = sbr.rel (%p438) target = $region32
      $region31: #{masked_predictor_forward.6} parent=11 // pred_region
        _
      $region32: #{masked_predictor_forward.6} parent=11 // pred_fallthru
        _
      // Predicated region
      $region33: #{masked_predictor_forward.6} parent=11 // pred_check
        %p441 = pneg %p175
      $region34: #{masked_predictor_forward.6} parent=11 // pred_check_branch
        %443 = sbr.rel (%p441) target = $region36
      $region35: #{masked_predictor_forward.6} parent=11 // pred_region
        _
      $region36: #{masked_predictor_forward.6} parent=11 // pred_fallthru
        _
      // Predicated region
      $region37: #{masked_predictor_forward.6} parent=11 // pred_check
        %p444 = pneg %p196
      $region38: #{masked_predictor_forward.6} parent=11 // pred_check_branch
        %446 = sbr.rel (%p444) target = $region40
      $region39: #{masked_predictor_forward.6} parent=11 // pred_region
        _
      $region40: #{masked_predictor_forward.6} parent=11 // pred_fallthru
        _
      // Predicated region
      $region41: #{masked_predictor_forward.6} parent=11 // pred_check
        %p447 = pneg %p217
      $region42: #{masked_predictor_forward.6} parent=11 // pred_check_branch
        %449 = sbr.rel (%p447) target = $region44
      $region43: #{masked_predictor_forward.6} parent=11 // pred_region
        _
      $region44: #{masked_predictor_forward.6} parent=11 // pred_fallthru
        _
      // Predicated region
      $region45: #{masked_predictor_forward.6} parent=11 // pred_check
        %p450 = pneg %p238
      $region46: #{masked_predictor_forward.6} parent=11 // pred_check_branch
        %452 = sbr.rel (%p450) target = $region48
      $region47: #{masked_predictor_forward.6} parent=11 // pred_region
        _
      $region48: #{masked_predictor_forward.6} parent=11 // pred_fallthru
        _
      // Predicated region
      $region49: #{masked_predictor_forward.6} parent=11 // pred_check
        %p453 = pneg %p259
      $region50: #{masked_predictor_forward.6} parent=11 // pred_check_branch
        %455 = sbr.rel (%p453) target = $region52
      $region51: #{masked_predictor_forward.6} parent=11 // pred_region
        _
      $region52: #{masked_predictor_forward.6} parent=11 // pred_fallthru
        _
      // Predicated region
      $region53: #{masked_predictor_forward.6} parent=11 // pred_check
        %p456 = pneg %p280
      $region54: #{masked_predictor_forward.6} parent=11 // pred_check_branch
        %458 = sbr.rel (%p456) target = $region56
      $region55: #{masked_predictor_forward.6} parent=11 // pred_region
        _
      $region56: #{masked_predictor_forward.6} parent=11 // pred_fallthru
        _
      // Predicated region
      $region57: #{masked_predictor_forward.6} parent=11 // pred_check
        %p459 = pneg %p301
      $region58: #{masked_predictor_forward.6} parent=11 // pred_check_branch
        %461 = sbr.rel (%p459) target = $region60
      $region59: #{masked_predictor_forward.6} parent=11 // pred_region
        _
      $region60: #{masked_predictor_forward.6} parent=11 // pred_fallthru
        _
      // Predicated region
      $region61: #{masked_predictor_forward.6} parent=11 // pred_check
        %p462 = pneg %p322
      $region62: #{masked_predictor_forward.6} parent=11 // pred_check_branch
        %464 = sbr.rel (%p462) target = $region64
      $region63: #{masked_predictor_forward.6} parent=11 // pred_region
        _
      $region64: #{masked_predictor_forward.6} parent=11 // pred_fallthru
        _
      // Predicated region
      $region65: #{masked_predictor_forward.6} parent=11 // pred_check
        %p465 = pneg %p343
      $region66: #{masked_predictor_forward.6} parent=11 // pred_check_branch
        %467 = sbr.rel (%p465) target = $region68
      $region67: #{masked_predictor_forward.6} parent=11 // pred_region
        _
      $region68: #{masked_predictor_forward.6} parent=11 // pred_fallthru
        _
      // Predicated region
      $region69: #{masked_predictor_forward.6} parent=11 // pred_check
        %p468 = pneg %p364
      $region70: #{masked_predictor_forward.6} parent=11 // pred_check_branch
        %470 = sbr.rel (%p468) target = $region72
      $region71: #{masked_predictor_forward.6} parent=11 // pred_region
        _
      $region72: #{masked_predictor_forward.6} parent=11 // pred_fallthru
        _
      // Predicated region
      $region73: #{masked_predictor_forward.6} parent=11 // pred_check
        %p471 = pneg %p385
      $region74: #{masked_predictor_forward.6} parent=11 // pred_check_branch
        %473 = sbr.rel (%p471) target = $region76
      $region75: #{masked_predictor_forward.6} parent=11 // pred_region
        _
      $region76: #{masked_predictor_forward.6} parent=11 // pred_fallthru
        _
    $region12: #{masked_predictor_forward.6} parent=5 // pred_fallthru
      _
    %p474 = scmp.lt.s32.totalorder %s23, 2
    // Predicated region
    $region77: #{masked_predictor_forward.6} parent=5 // pred_check
      %p475 = pneg %p474
    $region78: #{masked_predictor_forward.6} parent=5 // pred_check_branch
      %477 = sbr.rel (%p475) target = $region80
    $region79: #{masked_predictor_forward.6} parent=5 // pred_region
      // Predicated region
      $region81: #{masked_predictor_forward.6} parent=79 // pred_check
        %p478 = pneg %p43
      $region82: #{masked_predictor_forward.6} parent=79 // pred_check_branch
        %480 = sbr.rel (%p478) target = $region84
      $region83: #{masked_predictor_forward.6} parent=79 // pred_region
        %p481 = scmp.lt.s32.totalorder %s23, 1
        %s482 = scalar_select %p481, %s23, 1
        %s483 = smul.addr %s482, 2
        %s484 = smul.addr %s483, 4
        %s485 = scalar_lea.vmem %s0, %s484
      $region84: #{masked_predictor_forward.6} parent=79 // pred_fallthru
        _
    $region80: #{masked_predictor_forward.6} parent=5 // pred_fallthru
      _
    %p486 = scmp.le.s32.totalorder 1, %s23
    %p487 = scmp.lt.s32.totalorder %s23, 3
    %p488 = pnand %p486, %p487
    %p489 = pneg %p488
    // Predicated region
    $region85: #{masked_predictor_forward.6} parent=5 // pred_check
      _
    $region86: #{masked_predictor_forward.6} parent=5 // pred_check_branch
      %491 = sbr.rel (%p488) target = $region88
    $region87: #{masked_predictor_forward.6} parent=5 // pred_region
      %s492 = ssub.s32 %s23, 1
      %p493 = scmp.lt.s32.totalorder %s28, 1
      %s494 = scalar_select %p493, %s28, 1
      %s495 = smul.addr %s494, 2
      %s496 = smul.addr %s495, 4
      %s497 = scalar_lea.vmem %s0, %s496
      %p498 = pneg %p49
      %p499 = pneg %p46
      %p500 = pneg %p70
      %p501 = pneg %p67
      %p502 = pneg %p91
      %p503 = pneg %p88
      %p504 = pneg %p112
      %p505 = pneg %p109
      %p506 = pneg %p133
      %p507 = pneg %p130
      %p508 = pneg %p154
      %p509 = pneg %p151
      %p510 = pneg %p175
      %p511 = pneg %p172
      %p512 = pneg %p196
      %p513 = pneg %p193
      %p514 = pneg %p217
      %p515 = pneg %p214
      %p516 = pneg %p238
      %p517 = pneg %p235
      %p518 = pneg %p259
      %p519 = pneg %p256
      %p520 = pneg %p280
      %p521 = pneg %p277
      %p522 = pneg %p301
      %p523 = pneg %p298
      %p524 = pneg %p322
      %p525 = pneg %p319
      %p526 = pneg %p343
      %p527 = pneg %p340
      %p528 = pneg %p364
      %p529 = pneg %p361
      %p530 = pneg %p385
      %p531 = pneg %p382
      %p532 = pneg %p411
      %p533 = pneg %p408
      %p534 = scmp.lt.s32.totalorder %s28, 1
      %s535 = scalar_select %p534, %s28, 1
      %s536 = smul.addr %s535, 2
      %s537 = smul.addr %s536, 4
      %s538 = scalar_lea.vmem %s17, %s537
      %p539 = scmp.lt.s32.totalorder %s28, 1
      %s540 = scalar_select %p539, %s28, 1
      %s541 = smul.addr %s540, 2
      %s542 = smul.addr %s541, 4
      %s543 = scalar_lea.vmem %s0, %s542
      %p544 = scmp.lt.s32.totalorder %s28, 1
      %s545 = scalar_select %p544, %s28, 1
      %s546 = smul.addr %s545, 2
      %s547 = smul.addr %s546, 4
      %s548 = scalar_lea.vmem %s17, %s547
      %v550 = vld [vmem:[%s543] sm:$0xf]
      %v551 = vld [vmem:[%s543 + $0x4] sm:$0xf]
      %v552 = vunpack.c.l.bf16 %v550
      %v553 = vunpack.c.l.bf16 %v551
      %v554 = vld [vmem:[%s1] sm:$0x1]
      %v555 = vmul.f32 %v552, %v552
      %v556 = vmul.f32 %v553, %v553
      %vm557 = vcmask 523264
      %v558 = vsel %vm557, %v555, 0.0
      %559 = vadd.xlane.f32.xlu0 %v558
      %v560 = vpop.xlane.xlu0 %559
      %v561 = vsel %vm557, %v556, 0.0
      %562 = vadd.xlane.f32.xlu0 %v561
      %v563 = vpop.xlane.xlu0 %562
      %v564 = vrcp.pop 64.0
      %v565 = vmul.f32 %v560, %v564
      %v566 = vmul.f32 %v563, %v564
      %v567 = vadd.f32 %v565, 1e-05
      %v568 = vadd.f32 %v566, 1e-05
      %v569 = vrsqrt.pop %v567
      %v570 = vrsqrt.pop %v568
      %v571 = vmul.f32 %v552, %v569
      %v572 = vmul.f32 %v553, %v570
      %v574 = vlaneseq
      %v575 = vshrl.u32 %v574, 7
      %v576 = vsub.s32 0, %v575
      %v577 = vrot.slane %v554, %v576
      %v579 = vmul.f32 %v571, %v577
      %v580 = vmul.f32 %v572, %v577
      %v581 = vpack.c.bf16 %v580, %v579
      %v582 = vld [vmem:[%s2] sm:$0xf]
      %v583 = vld [vmem:[%s2 + $0x4] sm:$0xf]
      %v584 = vld [vmem:[%s2 + $0x8] sm:$0xf]
      %v585 = vld [vmem:[%s2 + $0xc] sm:$0xf]
      %v586 = vld [vmem:[%s2 + $0x10] sm:$0xf]
      %v587 = vld [vmem:[%s2 + $0x14] sm:$0xf]
      %v588 = vld [vmem:[%s2 + $0x18] sm:$0xf]
      %v589 = vld [vmem:[%s2 + $0x1c] sm:$0xf]
      %v590 = vld [vmem:[%s5] sm:$0x1]
      %v592 = vlaneseq
      %v593 = vshrl.u32 %v592, 7
      %v594 = vsub.s32 0, %v593
      %v595 = vrot.slane %v590, %v594
      %v605 = vunpack.c.l.b16 %v582
      %v606 = vunpack.c.l.b16 %v583
      %v607 = vunpack.c.l.b16 %v584
      %v608 = vunpack.c.l.b16 %v585
      %v609 = vunpack.c.l.b16 %v586
      %v610 = vunpack.c.l.b16 %v587
      %v611 = vunpack.c.l.b16 %v588
      %v612 = vunpack.c.l.b16 %v589
      %v613 = vpack.c.b16 %v606, %v605
      %v614 = vpack.c.b16 %v608, %v607
      %v615 = vpack.c.b16 %v610, %v609
      %v616 = vpack.c.b16 %v612, %v611
      %v622 = vsel %vm557, %v581, 0
      %624 = vmatprep.subr.bf16.mxu0 0
      %625 = vmatpush1.bf16.msra.mxu0 0
      %626 = vmatprep.subr.bf16.mxu0 0
      %627 = vmatpush1.bf16.msra.mxu0 0
      %628 = vmatprep.subr.bf16.mxu0 0
      %629 = vmatpush1.bf16.msra.mxu0 0
      %630 = vmatprep.subr.bf16.mxu0 0
      %631 = vmatpush1.bf16.msra.mxu0 0
      %632 = vmatprep.subr.bf16.mxu0 0
      %633 = vmatpush1.bf16.msra.mxu0 %v616
      %634 = vmatprep.subr.bf16.mxu0 0
      %635 = vmatpush1.bf16.msra.mxu0 %v615
      %636 = vmatprep.subr.bf16.mxu0 0
      %637 = vmatpush1.bf16.msra.mxu0 %v614
      %638 = vmatprep.subr.bf16.mxu0 0
      %639 = vmatpush1.bf16.msra.mxu0 %v613
      %640 = vmatprep.subr.bf16.mxu0 0
      %641 = vmatpush2.bf16.msra.mxu0 0
      %642 = vmatprep.subr.bf16.mxu0 0
      %643 = vmatpush2.bf16.msra.mxu0 0
      %644 = vmatprep.subr.bf16.mxu0 0
      %645 = vmatpush2.bf16.msra.mxu0 0
      %646 = vmatprep.subr.bf16.mxu0 0
      %647 = vmatpush2.bf16.msra.mxu0 0
      %648 = vmatprep.subr.bf16.mxu0 0
      %649 = vmatpush2.bf16.msra.mxu0 0
      %650 = vmatprep.subr.bf16.mxu0 0
      %651 = vmatpush2.bf16.msra.mxu0 0
      %652 = vmatprep.subr.bf16.mxu0 0
      %653 = vmatpush2.bf16.msra.mxu0 0
      %654 = vmatprep.subr.bf16.mxu0 0
      %655 = vmatpush2.bf16.msra.mxu0 0
      %656 = vmatprep.mubr.bf16.mxu0 0
      %657 = vmatmul.mubr.bf16.gmra.mxu0 %v622
      %v658 = vpop.f32.mrf.mxu0
      %v659 = vadd.f32 %v595, %v658
      %v660 = vpop.f32.mrf.mxu0
      %v661 = vpop.f32.mrf.mxu0
      %v662 = vadd.f32 %v595, %v661
      %v663 = vpop.f32.mrf.mxu0
      %664 = vdwg.mxu0
      %v665 = vld [vmem:[%s3] sm:$0xf]
      %v666 = vld [vmem:[%s3 + $0x4] sm:$0xf]
      %v667 = vld [vmem:[%s3 + $0x8] sm:$0xf]
      %v668 = vld [vmem:[%s3 + $0xc] sm:$0xf]
      %v669 = vld [vmem:[%s3 + $0x10] sm:$0xf]
      %v670 = vld [vmem:[%s3 + $0x14] sm:$0xf]
      %v671 = vld [vmem:[%s3 + $0x18] sm:$0xf]
      %v672 = vld [vmem:[%s3 + $0x1c] sm:$0xf]
      %v673 = vld [vmem:[%s6] sm:$0x1]
      %v675 = vlaneseq
      %v676 = vshrl.u32 %v675, 7
      %v677 = vsub.s32 0, %v676
      %v678 = vrot.slane %v673, %v677
      %v688 = vunpack.c.l.b16 %v665
      %v689 = vunpack.c.l.b16 %v666
      %v690 = vunpack.c.l.b16 %v667
      %v691 = vunpack.c.l.b16 %v668
      %v692 = vunpack.c.l.b16 %v669
      %v693 = vunpack.c.l.b16 %v670
      %v694 = vunpack.c.l.b16 %v671
      %v695 = vunpack.c.l.b16 %v672
      %v696 = vpack.c.b16 %v689, %v688
      %v697 = vpack.c.b16 %v691, %v690
      %v698 = vpack.c.b16 %v693, %v692
      %v699 = vpack.c.b16 %v695, %v694
      %704 = vmatprep.subr.bf16.mxu0 0
      %705 = vmatpush1.bf16.msra.mxu0 0
      %706 = vmatprep.subr.bf16.mxu0 0
      %707 = vmatpush1.bf16.msra.mxu0 0
      %708 = vmatprep.subr.bf16.mxu0 0
      %709 = vmatpush1.bf16.msra.mxu0 0
      %710 = vmatprep.subr.bf16.mxu0 0
      %711 = vmatpush1.bf16.msra.mxu0 0
      %712 = vmatprep.subr.bf16.mxu0 0
      %713 = vmatpush1.bf16.msra.mxu0 %v699
      %714 = vmatprep.subr.bf16.mxu0 0
      %715 = vmatpush1.bf16.msra.mxu0 %v698
      %716 = vmatprep.subr.bf16.mxu0 0
      %717 = vmatpush1.bf16.msra.mxu0 %v697
      %718 = vmatprep.subr.bf16.mxu0 0
      %719 = vmatpush1.bf16.msra.mxu0 %v696
      %720 = vmatprep.subr.bf16.mxu0 0
      %721 = vmatpush2.bf16.msra.mxu0 0
      %722 = vmatprep.subr.bf16.mxu0 0
      %723 = vmatpush2.bf16.msra.mxu0 0
      %724 = vmatprep.subr.bf16.mxu0 0
      %725 = vmatpush2.bf16.msra.mxu0 0
      %726 = vmatprep.subr.bf16.mxu0 0
      %727 = vmatpush2.bf16.msra.mxu0 0
      %728 = vmatprep.subr.bf16.mxu0 0
      %729 = vmatpush2.bf16.msra.mxu0 0
      %730 = vmatprep.subr.bf16.mxu0 0
      %731 = vmatpush2.bf16.msra.mxu0 0
      %732 = vmatprep.subr.bf16.mxu0 0
      %733 = vmatpush2.bf16.msra.mxu0 0
      %734 = vmatprep.subr.bf16.mxu0 0
      %735 = vmatpush2.bf16.msra.mxu0 0
      %736 = vmatprep.mubr.bf16.mxu0 0
      %737 = vmatmul.mubr.bf16.gmra.mxu0 %v622
      %v738 = vpop.f32.mrf.mxu0
      %v739 = vadd.f32 %v678, %v738
      %v740 = vpop.f32.mrf.mxu0
      %v741 = vpop.f32.mrf.mxu0
      %v742 = vadd.f32 %v678, %v741
      %v743 = vpop.f32.mrf.mxu0
      %744 = vdwg.mxu0
      %v745 = vld [vmem:[%s4] sm:$0xf]
      %v746 = vld [vmem:[%s4 + $0x4] sm:$0xf]
      %v747 = vld [vmem:[%s4 + $0x8] sm:$0xf]
      %v748 = vld [vmem:[%s4 + $0xc] sm:$0xf]
      %v749 = vld [vmem:[%s4 + $0x10] sm:$0xf]
      %v750 = vld [vmem:[%s4 + $0x14] sm:$0xf]
      %v751 = vld [vmem:[%s4 + $0x18] sm:$0xf]
      %v752 = vld [vmem:[%s4 + $0x1c] sm:$0xf]
      %v753 = vld [vmem:[%s7] sm:$0x1]
      %v755 = vlaneseq
      %v756 = vshrl.u32 %v755, 7
      %v757 = vsub.s32 0, %v756
      %v758 = vrot.slane %v753, %v757
      %v768 = vunpack.c.l.b16 %v745
      %v769 = vunpack.c.l.b16 %v746
      %v770 = vunpack.c.l.b16 %v747
      %v771 = vunpack.c.l.b16 %v748
      %v772 = vunpack.c.l.b16 %v749
      %v773 = vunpack.c.l.b16 %v750
      %v774 = vunpack.c.l.b16 %v751
      %v775 = vunpack.c.l.b16 %v752
      %v776 = vpack.c.b16 %v769, %v768
      %v777 = vpack.c.b16 %v771, %v770
      %v778 = vpack.c.b16 %v773, %v772
      %v779 = vpack.c.b16 %v775, %v774
      %784 = vmatprep.subr.bf16.mxu0 0
      %785 = vmatpush1.bf16.msra.mxu0 0
      %786 = vmatprep.subr.bf16.mxu0 0
      %787 = vmatpush1.bf16.msra.mxu0 0
      %788 = vmatprep.subr.bf16.mxu0 0
      %789 = vmatpush1.bf16.msra.mxu0 0
      %790 = vmatprep.subr.bf16.mxu0 0
      %791 = vmatpush1.bf16.msra.mxu0 0
      %792 = vmatprep.subr.bf16.mxu0 0
      %793 = vmatpush1.bf16.msra.mxu0 %v779
      %794 = vmatprep.subr.bf16.mxu0 0
      %795 = vmatpush1.bf16.msra.mxu0 %v778
      %796 = vmatprep.subr.bf16.mxu0 0
      %797 = vmatpush1.bf16.msra.mxu0 %v777
      %798 = vmatprep.subr.bf16.mxu0 0
      %799 = vmatpush1.bf16.msra.mxu0 %v776
      %800 = vmatprep.subr.bf16.mxu0 0
      %801 = vmatpush2.bf16.msra.mxu0 0
      %802 = vmatprep.subr.bf16.mxu0 0
      %803 = vmatpush2.bf16.msra.mxu0 0
      %804 = vmatprep.subr.bf16.mxu0 0
      %805 = vmatpush2.bf16.msra.mxu0 0
      %806 = vmatprep.subr.bf16.mxu0 0
      %807 = vmatpush2.bf16.msra.mxu0 0
      %808 = vmatprep.subr.bf16.mxu0 0
      %809 = vmatpush2.bf16.msra.mxu0 0
      %810 = vmatprep.subr.bf16.mxu0 0
      %811 = vmatpush2.bf16.msra.mxu0 0
      %812 = vmatprep.subr.bf16.mxu0 0
      %813 = vmatpush2.bf16.msra.mxu0 0
      %814 = vmatprep.subr.bf16.mxu0 0
      %815 = vmatpush2.bf16.msra.mxu0 0
      %816 = vmatprep.mubr.bf16.mxu0 0
      %817 = vmatmul.mubr.bf16.gmra.mxu0 %v622
      %v818 = vpop.f32.mrf.mxu0
      %v819 = vadd.f32 %v758, %v818
      %v820 = vpop.f32.mrf.mxu0
      %v821 = vpop.f32.mrf.mxu0
      %v822 = vadd.f32 %v758, %v821
      %v823 = vpop.f32.mrf.mxu0
      %824 = vdwg.mxu0
      %827 = vrot.lane.b32.xlu0 %v659, 96
      %v828 = vpop.permute.xlu0 %827
      %829 = vrot.lane.b32.xlu0 %v662, 96
      %v830 = vpop.permute.xlu0 %829
      %v833 = vcombine.high %v659, 0.0
      %v835 = vunpack.c.l.s4 1983009808
      %v836 = vunpack.c.0.s8 %v835
      %v837 = vlaneseq
      %v838 = vshrl.u32 %v837, 7
      %v839 = vsub.s32 %v836, %v838
      %v840 = vrot.slane %v659, %v839
      %v842 = vunpack.c.l.s4 1983009808
      %v843 = vunpack.c.0.s8 %v842
      %v844 = vlaneseq
      %v845 = vshrl.u32 %v844, 7
      %v846 = vsub.s32 %v843, %v845
      %v847 = vrot.slane %v833, %v846
      %v848 = vcombine.high %v828, 0.0
      %v850 = vunpack.c.l.s4 1983009808
      %v851 = vunpack.c.0.s8 %v850
      %v852 = vlaneseq
      %v853 = vshrl.u32 %v852, 7
      %v854 = vsub.s32 %v851, %v853
      %v855 = vrot.slane %v828, %v854
      %v857 = vunpack.c.l.s4 1983009808
      %v858 = vunpack.c.0.s8 %v857
      %v859 = vlaneseq
      %v860 = vshrl.u32 %v859, 7
      %v861 = vsub.s32 %v858, %v860
      %v862 = vrot.slane %v848, %v861
      %v863 = vcombine.low %v840, %v855
      %v864 = vcombine.high %v840, %v855
      %v866 = vunpack.c.l.s4 1934713408
      %v867 = vunpack.c.0.s8 %v866
      %v868 = vlaneseq
      %v869 = vshrl.u32 %v868, 7
      %v870 = vsub.s32 %v867, %v869
      %v871 = vrot.slane %v863, %v870
      %v873 = vunpack.c.l.s4 1934713408
      %v874 = vunpack.c.0.s8 %v873
      %v875 = vlaneseq
      %v876 = vshrl.u32 %v875, 7
      %v877 = vsub.s32 %v874, %v876
      %v878 = vrot.slane %v864, %v877
      %v879 = vcombine.low %v847, %v862
      %v880 = vcombine.high %v847, %v862
      %v882 = vunpack.c.l.s4 1934713408
      %v883 = vunpack.c.0.s8 %v882
      %v884 = vlaneseq
      %v885 = vshrl.u32 %v884, 7
      %v886 = vsub.s32 %v883, %v885
      %v887 = vrot.slane %v879, %v886
      %v889 = vunpack.c.l.s4 1934713408
      %v890 = vunpack.c.0.s8 %v889
      %v891 = vlaneseq
      %v892 = vshrl.u32 %v891, 7
      %v893 = vsub.s32 %v890, %v892
      %v894 = vrot.slane %v880, %v893
      %v895 = vcombine.high %v871, 0.0
      %v896 = vcombine.high %v878, 0.0
      %v897 = vcombine.high %v887, 0.0
      %v898 = vcombine.high %v894, 0.0
      %v899 = vcombine.high %v662, 0.0
      %v901 = vunpack.c.l.s4 1983009808
      %v902 = vunpack.c.0.s8 %v901
      %v903 = vlaneseq
      %v904 = vshrl.u32 %v903, 7
      %v905 = vsub.s32 %v902, %v904
      %v906 = vrot.slane %v662, %v905
      %v908 = vunpack.c.l.s4 1983009808
      %v909 = vunpack.c.0.s8 %v908
      %v910 = vlaneseq
      %v911 = vshrl.u32 %v910, 7
      %v912 = vsub.s32 %v909, %v911
      %v913 = vrot.slane %v899, %v912
      %v914 = vcombine.high %v830, 0.0
      %v916 = vunpack.c.l.s4 1983009808
      %v917 = vunpack.c.0.s8 %v916
      %v918 = vlaneseq
      %v919 = vshrl.u32 %v918, 7
      %v920 = vsub.s32 %v917, %v919
      %v921 = vrot.slane %v830, %v920
      %v923 = vunpack.c.l.s4 1983009808
      %v924 = vunpack.c.0.s8 %v923
      %v925 = vlaneseq
      %v926 = vshrl.u32 %v925, 7
      %v927 = vsub.s32 %v924, %v926
      %v928 = vrot.slane %v914, %v927
      %v929 = vcombine.low %v906, %v921
      %v930 = vcombine.high %v906, %v921
      %v932 = vunpack.c.l.s4 1934713408
      %v933 = vunpack.c.0.s8 %v932
      %v934 = vlaneseq
      %v935 = vshrl.u32 %v934, 7
      %v936 = vsub.s32 %v933, %v935
      %v937 = vrot.slane %v929, %v936
      %v939 = vunpack.c.l.s4 1934713408
      %v940 = vunpack.c.0.s8 %v939
      %v941 = vlaneseq
      %v942 = vshrl.u32 %v941, 7
      %v943 = vsub.s32 %v940, %v942
      %v944 = vrot.slane %v930, %v943
      %v945 = vcombine.low %v913, %v928
      %v946 = vcombine.high %v913, %v928
      %v948 = vunpack.c.l.s4 1934713408
      %v949 = vunpack.c.0.s8 %v948
      %v950 = vlaneseq
      %v951 = vshrl.u32 %v950, 7
      %v952 = vsub.s32 %v949, %v951
      %v953 = vrot.slane %v945, %v952
      %v955 = vunpack.c.l.s4 1934713408
      %v956 = vunpack.c.0.s8 %v955
      %v957 = vlaneseq
      %v958 = vshrl.u32 %v957, 7
      %v959 = vsub.s32 %v956, %v958
      %v960 = vrot.slane %v946, %v959
      %v961 = vcombine.high %v937, 0.0
      %v962 = vcombine.high %v944, 0.0
      %v963 = vcombine.high %v953, 0.0
      %v964 = vcombine.high %v960, 0.0
      %v965 = vcombine.low %v871, %v878
      %v967 = vunpack.c.l.s4 1983009808
      %v968 = vunpack.c.0.s8 %v967
      %v969 = vlaneseq
      %v970 = vshrl.u32 %v969, 7
      %v971 = vsub.s32 %v968, %v970
      %v972 = vrot.slane %v965, %v971
      %v973 = vcombine.low %v895, %v896
      %v975 = vunpack.c.l.s4 1983009808
      %v976 = vunpack.c.0.s8 %v975
      %v977 = vlaneseq
      %v978 = vshrl.u32 %v977, 7
      %v979 = vsub.s32 %v976, %v978
      %v980 = vrot.slane %v973, %v979
      %v981 = vcombine.low %v887, %v894
      %v983 = vunpack.c.l.s4 1983009808
      %v984 = vunpack.c.0.s8 %v983
      %v985 = vlaneseq
      %v986 = vshrl.u32 %v985, 7
      %v987 = vsub.s32 %v984, %v986
      %v988 = vrot.slane %v981, %v987
      %v989 = vcombine.low %v897, %v898
      %v991 = vunpack.c.l.s4 1983009808
      %v992 = vunpack.c.0.s8 %v991
      %v993 = vlaneseq
      %v994 = vshrl.u32 %v993, 7
      %v995 = vsub.s32 %v992, %v994
      %v996 = vrot.slane %v989, %v995
      %v997 = vcombine.low %v972, %v980
      %v999 = vunpack.c.l.s4 1934713408
      %v1000 = vunpack.c.0.s8 %v999
      %v1001 = vlaneseq
      %v1002 = vshrl.u32 %v1001, 7
      %v1003 = vsub.s32 %v1000, %v1002
      %v1004 = vrot.slane %v997, %v1003
      %v1005 = vcombine.low %v988, %v996
      %v1007 = vunpack.c.l.s4 1934713408
      %v1008 = vunpack.c.0.s8 %v1007
      %v1009 = vlaneseq
      %v1010 = vshrl.u32 %v1009, 7
      %v1011 = vsub.s32 %v1008, %v1010
      %v1012 = vrot.slane %v1005, %v1011
      %v1013 = vcombine.low %v1004, %v1012
      %v1014 = vcombine.high %v1004, %v1012
      %v1015 = vcombine.low %v937, %v944
      %v1017 = vunpack.c.l.s4 1983009808
      %v1018 = vunpack.c.0.s8 %v1017
      %v1019 = vlaneseq
      %v1020 = vshrl.u32 %v1019, 7
      %v1021 = vsub.s32 %v1018, %v1020
      %v1022 = vrot.slane %v1015, %v1021
      %v1023 = vcombine.low %v961, %v962
      %v1025 = vunpack.c.l.s4 1983009808
      %v1026 = vunpack.c.0.s8 %v1025
      %v1027 = vlaneseq
      %v1028 = vshrl.u32 %v1027, 7
      %v1029 = vsub.s32 %v1026, %v1028
      %v1030 = vrot.slane %v1023, %v1029
      %v1031 = vcombine.low %v953, %v960
      %v1033 = vunpack.c.l.s4 1983009808
      %v1034 = vunpack.c.0.s8 %v1033
      %v1035 = vlaneseq
      %v1036 = vshrl.u32 %v1035, 7
      %v1037 = vsub.s32 %v1034, %v1036
      %v1038 = vrot.slane %v1031, %v1037
      %v1039 = vcombine.low %v963, %v964
      %v1041 = vunpack.c.l.s4 1983009808
      %v1042 = vunpack.c.0.s8 %v1041
      %v1043 = vlaneseq
      %v1044 = vshrl.u32 %v1043, 7
      %v1045 = vsub.s32 %v1042, %v1044
      %v1046 = vrot.slane %v1039, %v1045
      %v1047 = vcombine.low %v1022, %v1030
      %v1049 = vunpack.c.l.s4 1934713408
      %v1050 = vunpack.c.0.s8 %v1049
      %v1051 = vlaneseq
      %v1052 = vshrl.u32 %v1051, 7
      %v1053 = vsub.s32 %v1050, %v1052
      %v1054 = vrot.slane %v1047, %v1053
      %v1055 = vcombine.low %v1038, %v1046
      %v1057 = vunpack.c.l.s4 1934713408
      %v1058 = vunpack.c.0.s8 %v1057
      %v1059 = vlaneseq
      %v1060 = vshrl.u32 %v1059, 7
      %v1061 = vsub.s32 %v1058, %v1060
      %v1062 = vrot.slane %v1055, %v1061
      %v1063 = vcombine.low %v1054, %v1062
      %v1064 = vcombine.high %v1054, %v1062
      %v1065 = vpack.c.bf16 %v1063, %v1013
      %v1066 = vpack.c.bf16 %v1064, %v1014
      %1069 = vrot.lane.b32.xlu0 %v739, 96
      %v1070 = vpop.permute.xlu0 %1069
      %1071 = vrot.lane.b32.xlu0 %v742, 96
      %v1072 = vpop.permute.xlu0 %1071
      %v1075 = vcombine.high %v739, 0.0
      %v1077 = vunpack.c.l.s4 1983009808
      %v1078 = vunpack.c.0.s8 %v1077
      %v1079 = vlaneseq
      %v1080 = vshrl.u32 %v1079, 7
      %v1081 = vsub.s32 %v1078, %v1080
      %v1082 = vrot.slane %v739, %v1081
      %v1084 = vunpack.c.l.s4 1983009808
      %v1085 = vunpack.c.0.s8 %v1084
      %v1086 = vlaneseq
      %v1087 = vshrl.u32 %v1086, 7
      %v1088 = vsub.s32 %v1085, %v1087
      %v1089 = vrot.slane %v1075, %v1088
      %v1090 = vcombine.high %v1070, 0.0
      %v1092 = vunpack.c.l.s4 1983009808
      %v1093 = vunpack.c.0.s8 %v1092
      %v1094 = vlaneseq
      %v1095 = vshrl.u32 %v1094, 7
      %v1096 = vsub.s32 %v1093, %v1095
      %v1097 = vrot.slane %v1070, %v1096
      %v1099 = vunpack.c.l.s4 1983009808
      %v1100 = vunpack.c.0.s8 %v1099
      %v1101 = vlaneseq
      %v1102 = vshrl.u32 %v1101, 7
      %v1103 = vsub.s32 %v1100, %v1102
      %v1104 = vrot.slane %v1090, %v1103
      %v1105 = vcombine.low %v1082, %v1097
      %v1106 = vcombine.high %v1082, %v1097
      %v1108 = vunpack.c.l.s4 1934713408
      %v1109 = vunpack.c.0.s8 %v1108
      %v1110 = vlaneseq
      %v1111 = vshrl.u32 %v1110, 7
      %v1112 = vsub.s32 %v1109, %v1111
      %v1113 = vrot.slane %v1105, %v1112
      %v1115 = vunpack.c.l.s4 1934713408
      %v1116 = vunpack.c.0.s8 %v1115
      %v1117 = vlaneseq
      %v1118 = vshrl.u32 %v1117, 7
      %v1119 = vsub.s32 %v1116, %v1118
      %v1120 = vrot.slane %v1106, %v1119
      %v1121 = vcombine.low %v1089, %v1104
      %v1122 = vcombine.high %v1089, %v1104
      %v1124 = vunpack.c.l.s4 1934713408
      %v1125 = vunpack.c.0.s8 %v1124
      %v1126 = vlaneseq
      %v1127 = vshrl.u32 %v1126, 7
      %v1128 = vsub.s32 %v1125, %v1127
      %v1129 = vrot.slane %v1121, %v1128
      %v1131 = vunpack.c.l.s4 1934713408
      %v1132 = vunpack.c.0.s8 %v1131
      %v1133 = vlaneseq
      %v1134 = vshrl.u32 %v1133, 7
      %v1135 = vsub.s32 %v1132, %v1134
      %v1136 = vrot.slane %v1122, %v1135
      %v1137 = vcombine.high %v1113, 0.0
      %v1138 = vcombine.high %v1120, 0.0
      %v1139 = vcombine.high %v1129, 0.0
      %v1140 = vcombine.high %v1136, 0.0
      %v1141 = vcombine.high %v742, 0.0
      %v1143 = vunpack.c.l.s4 1983009808
      %v1144 = vunpack.c.0.s8 %v1143
      %v1145 = vlaneseq
      %v1146 = vshrl.u32 %v1145, 7
      %v1147 = vsub.s32 %v1144, %v1146
      %v1148 = vrot.slane %v742, %v1147
      %v1150 = vunpack.c.l.s4 1983009808
      %v1151 = vunpack.c.0.s8 %v1150
      %v1152 = vlaneseq
      %v1153 = vshrl.u32 %v1152, 7
      %v1154 = vsub.s32 %v1151, %v1153
      %v1155 = vrot.slane %v1141, %v1154
      %v1156 = vcombine.high %v1072, 0.0
      %v1158 = vunpack.c.l.s4 1983009808
      %v1159 = vunpack.c.0.s8 %v1158
      %v1160 = vlaneseq
      %v1161 = vshrl.u32 %v1160, 7
      %v1162 = vsub.s32 %v1159, %v1161
      %v1163 = vrot.slane %v1072, %v1162
      %v1165 = vunpack.c.l.s4 1983009808
      %v1166 = vunpack.c.0.s8 %v1165
      %v1167 = vlaneseq
      %v1168 = vshrl.u32 %v1167, 7
      %v1169 = vsub.s32 %v1166, %v1168
      %v1170 = vrot.slane %v1156, %v1169
      %v1171 = vcombine.low %v1148, %v1163
      %v1172 = vcombine.high %v1148, %v1163
      %v1174 = vunpack.c.l.s4 1934713408
      %v1175 = vunpack.c.0.s8 %v1174
      %v1176 = vlaneseq
      %v1177 = vshrl.u32 %v1176, 7
      %v1178 = vsub.s32 %v1175, %v1177
      %v1179 = vrot.slane %v1171, %v1178
      %v1181 = vunpack.c.l.s4 1934713408
      %v1182 = vunpack.c.0.s8 %v1181
      %v1183 = vlaneseq
      %v1184 = vshrl.u32 %v1183, 7
      %v1185 = vsub.s32 %v1182, %v1184
      %v1186 = vrot.slane %v1172, %v1185
      %v1187 = vcombine.low %v1155, %v1170
      %v1188 = vcombine.high %v1155, %v1170
      %v1190 = vunpack.c.l.s4 1934713408
      %v1191 = vunpack.c.0.s8 %v1190
      %v1192 = vlaneseq
      %v1193 = vshrl.u32 %v1192, 7
      %v1194 = vsub.s32 %v1191, %v1193
      %v1195 = vrot.slane %v1187, %v1194
      %v1197 = vunpack.c.l.s4 1934713408
      %v1198 = vunpack.c.0.s8 %v1197
      %v1199 = vlaneseq
      %v1200 = vshrl.u32 %v1199, 7
      %v1201 = vsub.s32 %v1198, %v1200
      %v1202 = vrot.slane %v1188, %v1201
      %v1203 = vcombine.high %v1179, 0.0
      %v1204 = vcombine.high %v1186, 0.0
      %v1205 = vcombine.high %v1195, 0.0
      %v1206 = vcombine.high %v1202, 0.0
      %v1207 = vcombine.low %v1113, %v1120
      %v1209 = vunpack.c.l.s4 1983009808
      %v1210 = vunpack.c.0.s8 %v1209
      %v1211 = vlaneseq
      %v1212 = vshrl.u32 %v1211, 7
      %v1213 = vsub.s32 %v1210, %v1212
      %v1214 = vrot.slane %v1207, %v1213
      %v1215 = vcombine.low %v1137, %v1138
      %v1217 = vunpack.c.l.s4 1983009808
      %v1218 = vunpack.c.0.s8 %v1217
      %v1219 = vlaneseq
      %v1220 = vshrl.u32 %v1219, 7
      %v1221 = vsub.s32 %v1218, %v1220
      %v1222 = vrot.slane %v1215, %v1221
      %v1223 = vcombine.low %v1129, %v1136
      %v1225 = vunpack.c.l.s4 1983009808
      %v1226 = vunpack.c.0.s8 %v1225
      %v1227 = vlaneseq
      %v1228 = vshrl.u32 %v1227, 7
      %v1229 = vsub.s32 %v1226, %v1228
      %v1230 = vrot.slane %v1223, %v1229
      %v1231 = vcombine.low %v1139, %v1140
      %v1233 = vunpack.c.l.s4 1983009808
      %v1234 = vunpack.c.0.s8 %v1233
      %v1235 = vlaneseq
      %v1236 = vshrl.u32 %v1235, 7
      %v1237 = vsub.s32 %v1234, %v1236
      %v1238 = vrot.slane %v1231, %v1237
      %v1239 = vcombine.low %v1214, %v1222
      %v1241 = vunpack.c.l.s4 1934713408
      %v1242 = vunpack.c.0.s8 %v1241
      %v1243 = vlaneseq
      %v1244 = vshrl.u32 %v1243, 7
      %v1245 = vsub.s32 %v1242, %v1244
      %v1246 = vrot.slane %v1239, %v1245
      %v1247 = vcombine.low %v1230, %v1238
      %v1249 = vunpack.c.l.s4 1934713408
      %v1250 = vunpack.c.0.s8 %v1249
      %v1251 = vlaneseq
      %v1252 = vshrl.u32 %v1251, 7
      %v1253 = vsub.s32 %v1250, %v1252
      %v1254 = vrot.slane %v1247, %v1253
      %v1255 = vcombine.low %v1246, %v1254
      %v1256 = vcombine.high %v1246, %v1254
      %v1257 = vcombine.low %v1179, %v1186
      %v1259 = vunpack.c.l.s4 1983009808
      %v1260 = vunpack.c.0.s8 %v1259
      %v1261 = vlaneseq
      %v1262 = vshrl.u32 %v1261, 7
      %v1263 = vsub.s32 %v1260, %v1262
      %v1264 = vrot.slane %v1257, %v1263
      %v1265 = vcombine.low %v1203, %v1204
      %v1267 = vunpack.c.l.s4 1983009808
      %v1268 = vunpack.c.0.s8 %v1267
      %v1269 = vlaneseq
      %v1270 = vshrl.u32 %v1269, 7
      %v1271 = vsub.s32 %v1268, %v1270
      %v1272 = vrot.slane %v1265, %v1271
      %v1273 = vcombine.low %v1195, %v1202
      %v1275 = vunpack.c.l.s4 1983009808
      %v1276 = vunpack.c.0.s8 %v1275
      %v1277 = vlaneseq
      %v1278 = vshrl.u32 %v1277, 7
      %v1279 = vsub.s32 %v1276, %v1278
      %v1280 = vrot.slane %v1273, %v1279
      %v1281 = vcombine.low %v1205, %v1206
      %v1283 = vunpack.c.l.s4 1983009808
      %v1284 = vunpack.c.0.s8 %v1283
      %v1285 = vlaneseq
      %v1286 = vshrl.u32 %v1285, 7
      %v1287 = vsub.s32 %v1284, %v1286
      %v1288 = vrot.slane %v1281, %v1287
      %v1289 = vcombine.low %v1264, %v1272
      %v1291 = vunpack.c.l.s4 1934713408
      %v1292 = vunpack.c.0.s8 %v1291
      %v1293 = vlaneseq
      %v1294 = vshrl.u32 %v1293, 7
      %v1295 = vsub.s32 %v1292, %v1294
      %v1296 = vrot.slane %v1289, %v1295
      %v1297 = vcombine.low %v1280, %v1288
      %v1299 = vunpack.c.l.s4 1934713408
      %v1300 = vunpack.c.0.s8 %v1299
      %v1301 = vlaneseq
      %v1302 = vshrl.u32 %v1301, 7
      %v1303 = vsub.s32 %v1300, %v1302
      %v1304 = vrot.slane %v1297, %v1303
      %v1305 = vcombine.low %v1296, %v1304
      %v1306 = vcombine.high %v1296, %v1304
      %v1307 = vpack.c.bf16 %v1305, %v1255
      %v1308 = vpack.c.bf16 %v1306, %v1256
      %1311 = vrot.lane.b32.xlu0 %v819, 96
      %v1312 = vpop.permute.xlu0 %1311
      %1313 = vrot.lane.b32.xlu0 %v822, 96
      %v1314 = vpop.permute.xlu0 %1313
      %v1317 = vcombine.high %v819, 0.0
      %v1319 = vunpack.c.l.s4 1983009808
      %v1320 = vunpack.c.0.s8 %v1319
      %v1321 = vlaneseq
      %v1322 = vshrl.u32 %v1321, 7
      %v1323 = vsub.s32 %v1320, %v1322
      %v1324 = vrot.slane %v819, %v1323
      %v1326 = vunpack.c.l.s4 1983009808
      %v1327 = vunpack.c.0.s8 %v1326
      %v1328 = vlaneseq
      %v1329 = vshrl.u32 %v1328, 7
      %v1330 = vsub.s32 %v1327, %v1329
      %v1331 = vrot.slane %v1317, %v1330
      %v1332 = vcombine.high %v1312, 0.0
      %v1334 = vunpack.c.l.s4 1983009808
      %v1335 = vunpack.c.0.s8 %v1334
      %v1336 = vlaneseq
      %v1337 = vshrl.u32 %v1336, 7
      %v1338 = vsub.s32 %v1335, %v1337
      %v1339 = vrot.slane %v1312, %v1338
      %v1341 = vunpack.c.l.s4 1983009808
      %v1342 = vunpack.c.0.s8 %v1341
      %v1343 = vlaneseq
      %v1344 = vshrl.u32 %v1343, 7
      %v1345 = vsub.s32 %v1342, %v1344
      %v1346 = vrot.slane %v1332, %v1345
      %v1347 = vcombine.low %v1324, %v1339
      %v1348 = vcombine.high %v1324, %v1339
      %v1350 = vunpack.c.l.s4 1934713408
      %v1351 = vunpack.c.0.s8 %v1350
      %v1352 = vlaneseq
      %v1353 = vshrl.u32 %v1352, 7
      %v1354 = vsub.s32 %v1351, %v1353
      %v1355 = vrot.slane %v1347, %v1354
      %v1357 = vunpack.c.l.s4 1934713408
      %v1358 = vunpack.c.0.s8 %v1357
      %v1359 = vlaneseq
      %v1360 = vshrl.u32 %v1359, 7
      %v1361 = vsub.s32 %v1358, %v1360
      %v1362 = vrot.slane %v1348, %v1361
      %v1363 = vcombine.low %v1331, %v1346
      %v1364 = vcombine.high %v1331, %v1346
      %v1366 = vunpack.c.l.s4 1934713408
      %v1367 = vunpack.c.0.s8 %v1366
      %v1368 = vlaneseq
      %v1369 = vshrl.u32 %v1368, 7
      %v1370 = vsub.s32 %v1367, %v1369
      %v1371 = vrot.slane %v1363, %v1370
      %v1373 = vunpack.c.l.s4 1934713408
      %v1374 = vunpack.c.0.s8 %v1373
      %v1375 = vlaneseq
      %v1376 = vshrl.u32 %v1375, 7
      %v1377 = vsub.s32 %v1374, %v1376
      %v1378 = vrot.slane %v1364, %v1377
      %v1379 = vcombine.high %v1355, 0.0
      %v1380 = vcombine.high %v1362, 0.0
      %v1381 = vcombine.high %v1371, 0.0
      %v1382 = vcombine.high %v1378, 0.0
      %v1383 = vcombine.high %v822, 0.0
      %v1385 = vunpack.c.l.s4 1983009808
      %v1386 = vunpack.c.0.s8 %v1385
      %v1387 = vlaneseq
      %v1388 = vshrl.u32 %v1387, 7
      %v1389 = vsub.s32 %v1386, %v1388
      %v1390 = vrot.slane %v822, %v1389
      %v1392 = vunpack.c.l.s4 1983009808
      %v1393 = vunpack.c.0.s8 %v1392
      %v1394 = vlaneseq
      %v1395 = vshrl.u32 %v1394, 7
      %v1396 = vsub.s32 %v1393, %v1395
      %v1397 = vrot.slane %v1383, %v1396
      %v1398 = vcombine.high %v1314, 0.0
      %v1400 = vunpack.c.l.s4 1983009808
      %v1401 = vunpack.c.0.s8 %v1400
      %v1402 = vlaneseq
      %v1403 = vshrl.u32 %v1402, 7
      %v1404 = vsub.s32 %v1401, %v1403
      %v1405 = vrot.slane %v1314, %v1404
      %v1407 = vunpack.c.l.s4 1983009808
      %v1408 = vunpack.c.0.s8 %v1407
      %v1409 = vlaneseq
      %v1410 = vshrl.u32 %v1409, 7
      %v1411 = vsub.s32 %v1408, %v1410
      %v1412 = vrot.slane %v1398, %v1411
      %v1413 = vcombine.low %v1390, %v1405
      %v1414 = vcombine.high %v1390, %v1405
      %v1416 = vunpack.c.l.s4 1934713408
      %v1417 = vunpack.c.0.s8 %v1416
      %v1418 = vlaneseq
      %v1419 = vshrl.u32 %v1418, 7
      %v1420 = vsub.s32 %v1417, %v1419
      %v1421 = vrot.slane %v1413, %v1420
      %v1423 = vunpack.c.l.s4 1934713408
      %v1424 = vunpack.c.0.s8 %v1423
      %v1425 = vlaneseq
      %v1426 = vshrl.u32 %v1425, 7
      %v1427 = vsub.s32 %v1424, %v1426
      %v1428 = vrot.slane %v1414, %v1427
      %v1429 = vcombine.low %v1397, %v1412
      %v1430 = vcombine.high %v1397, %v1412
      %v1432 = vunpack.c.l.s4 1934713408
      %v1433 = vunpack.c.0.s8 %v1432
      %v1434 = vlaneseq
      %v1435 = vshrl.u32 %v1434, 7
      %v1436 = vsub.s32 %v1433, %v1435
      %v1437 = vrot.slane %v1429, %v1436
      %v1439 = vunpack.c.l.s4 1934713408
      %v1440 = vunpack.c.0.s8 %v1439
      %v1441 = vlaneseq
      %v1442 = vshrl.u32 %v1441, 7
      %v1443 = vsub.s32 %v1440, %v1442
      %v1444 = vrot.slane %v1430, %v1443
      %v1445 = vcombine.high %v1421, 0.0
      %v1446 = vcombine.high %v1428, 0.0
      %v1447 = vcombine.high %v1437, 0.0
      %v1448 = vcombine.high %v1444, 0.0
      %v1449 = vcombine.low %v1355, %v1362
      %v1451 = vunpack.c.l.s4 1983009808
      %v1452 = vunpack.c.0.s8 %v1451
      %v1453 = vlaneseq
      %v1454 = vshrl.u32 %v1453, 7
      %v1455 = vsub.s32 %v1452, %v1454
      %v1456 = vrot.slane %v1449, %v1455
      %v1457 = vcombine.low %v1379, %v1380
      %v1459 = vunpack.c.l.s4 1983009808
      %v1460 = vunpack.c.0.s8 %v1459
      %v1461 = vlaneseq
      %v1462 = vshrl.u32 %v1461, 7
      %v1463 = vsub.s32 %v1460, %v1462
      %v1464 = vrot.slane %v1457, %v1463
      %v1465 = vcombine.low %v1371, %v1378
      %v1467 = vunpack.c.l.s4 1983009808
      %v1468 = vunpack.c.0.s8 %v1467
      %v1469 = vlaneseq
      %v1470 = vshrl.u32 %v1469, 7
      %v1471 = vsub.s32 %v1468, %v1470
      %v1472 = vrot.slane %v1465, %v1471
      %v1473 = vcombine.low %v1381, %v1382
      %v1475 = vunpack.c.l.s4 1983009808
      %v1476 = vunpack.c.0.s8 %v1475
      %v1477 = vlaneseq
      %v1478 = vshrl.u32 %v1477, 7
      %v1479 = vsub.s32 %v1476, %v1478
      %v1480 = vrot.slane %v1473, %v1479
      %v1481 = vcombine.low %v1456, %v1464
      %v1483 = vunpack.c.l.s4 1934713408
      %v1484 = vunpack.c.0.s8 %v1483
      %v1485 = vlaneseq
      %v1486 = vshrl.u32 %v1485, 7
      %v1487 = vsub.s32 %v1484, %v1486
      %v1488 = vrot.slane %v1481, %v1487
      %v1489 = vcombine.low %v1472, %v1480
      %v1491 = vunpack.c.l.s4 1934713408
      %v1492 = vunpack.c.0.s8 %v1491
      %v1493 = vlaneseq
      %v1494 = vshrl.u32 %v1493, 7
      %v1495 = vsub.s32 %v1492, %v1494
      %v1496 = vrot.slane %v1489, %v1495
      %v1497 = vcombine.low %v1488, %v1496
      %v1498 = vcombine.high %v1488, %v1496
      %v1499 = vcombine.low %v1421, %v1428
      %v1501 = vunpack.c.l.s4 1983009808
      %v1502 = vunpack.c.0.s8 %v1501
      %v1503 = vlaneseq
      %v1504 = vshrl.u32 %v1503, 7
      %v1505 = vsub.s32 %v1502, %v1504
      %v1506 = vrot.slane %v1499, %v1505
      %v1507 = vcombine.low %v1445, %v1446
      %v1509 = vunpack.c.l.s4 1983009808
      %v1510 = vunpack.c.0.s8 %v1509
      %v1511 = vlaneseq
      %v1512 = vshrl.u32 %v1511, 7
      %v1513 = vsub.s32 %v1510, %v1512
      %v1514 = vrot.slane %v1507, %v1513
      %v1515 = vcombine.low %v1437, %v1444
      %v1517 = vunpack.c.l.s4 1983009808
      %v1518 = vunpack.c.0.s8 %v1517
      %v1519 = vlaneseq
      %v1520 = vshrl.u32 %v1519, 7
      %v1521 = vsub.s32 %v1518, %v1520
      %v1522 = vrot.slane %v1515, %v1521
      %v1523 = vcombine.low %v1447, %v1448
      %v1525 = vunpack.c.l.s4 1983009808
      %v1526 = vunpack.c.0.s8 %v1525
      %v1527 = vlaneseq
      %v1528 = vshrl.u32 %v1527, 7
      %v1529 = vsub.s32 %v1526, %v1528
      %v1530 = vrot.slane %v1523, %v1529
      %v1531 = vcombine.low %v1506, %v1514
      %v1533 = vunpack.c.l.s4 1934713408
      %v1534 = vunpack.c.0.s8 %v1533
      %v1535 = vlaneseq
      %v1536 = vshrl.u32 %v1535, 7
      %v1537 = vsub.s32 %v1534, %v1536
      %v1538 = vrot.slane %v1531, %v1537
      %v1539 = vcombine.low %v1522, %v1530
      %v1541 = vunpack.c.l.s4 1934713408
      %v1542 = vunpack.c.0.s8 %v1541
      %v1543 = vlaneseq
      %v1544 = vshrl.u32 %v1543, 7
      %v1545 = vsub.s32 %v1542, %v1544
      %v1546 = vrot.slane %v1539, %v1545
      %v1547 = vcombine.low %v1538, %v1546
      %v1548 = vcombine.high %v1538, %v1546
      %v1549 = vpack.c.bf16 %v1547, %v1497
      %v1550 = vpack.c.bf16 %v1548, %v1498
      %vm1551 = vcmask 261120
      %v1553 = vsel %vm1551, %v1065, 0
      %v1556 = vsel %vm1551, %v1307, 0
      %1558 = vmatprep.subr.bf16.mxu0 0
      %1559 = vmatpush1.bf16.xpose.msra.mxu0 0
      %1560 = vmatprep.subr.bf16.mxu0 0
      %1561 = vmatpush1.bf16.xpose.msra.mxu0 0
      %1562 = vmatprep.subr.bf16.mxu0 0
      %1563 = vmatpush1.bf16.xpose.msra.mxu0 0
      %1564 = vmatprep.subr.bf16.mxu0 0
      %1565 = vmatpush1.bf16.xpose.msra.mxu0 0
      %1566 = vmatprep.subr.bf16.mxu0 0
      %1567 = vmatpush1.bf16.xpose.msra.mxu0 0
      %1568 = vmatprep.subr.bf16.mxu0 0
      %1569 = vmatpush1.bf16.xpose.msra.mxu0 0
      %1570 = vmatprep.subr.bf16.mxu0 0
      %1571 = vmatpush1.bf16.xpose.msra.mxu0 0
      %1572 = vmatprep.subr.bf16.mxu0 0
      %1573 = vmatpush1.bf16.xpose.msra.mxu0 %v1556
      %1574 = vmatprep.subr.bf16.mxu0 0
      %1575 = vmatpush2.bf16.xpose.msra.mxu0 0
      %1576 = vmatprep.subr.bf16.mxu0 0
      %1577 = vmatpush2.bf16.xpose.msra.mxu0 0
      %1578 = vmatprep.subr.bf16.mxu0 0
      %1579 = vmatpush2.bf16.xpose.msra.mxu0 0
      %1580 = vmatprep.subr.bf16.mxu0 0
      %1581 = vmatpush2.bf16.xpose.msra.mxu0 0
      %1582 = vmatprep.subr.bf16.mxu0 0
      %1583 = vmatpush2.bf16.xpose.msra.mxu0 0
      %1584 = vmatprep.subr.bf16.mxu0 0
      %1585 = vmatpush2.bf16.xpose.msra.mxu0 0
      %1586 = vmatprep.subr.bf16.mxu0 0
      %1587 = vmatpush2.bf16.xpose.msra.mxu0 0
      %1588 = vmatprep.subr.bf16.mxu0 0
      %1589 = vmatpush2.bf16.xpose.msra.mxu0 0
      %1590 = vmatprep.mubr.bf16.mxu0 0
      %1591 = vmatmul.mubr.bf16.gmra.mxu0 %v1553
      %v1592 = vpop.f32.mrf.mxu0
      %v1593 = vadd.f32 0.0, %v1592
      %v1594 = vpop.f32.mrf.mxu0
      %v1595 = vpop.f32.mrf.mxu0
      %v1596 = vadd.f32 0.0, %v1595
      %v1597 = vpop.f32.mrf.mxu0
      %1598 = vdwg.mxu0
      %v1600 = vsel %vm1551, %v1066, 0
      %v1603 = vsel %vm1551, %v1308, 0
      %1605 = vmatprep.subr.bf16.mxu0 0
      %1606 = vmatpush1.bf16.xpose.msra.mxu0 0
      %1607 = vmatprep.subr.bf16.mxu0 0
      %1608 = vmatpush1.bf16.xpose.msra.mxu0 0
      %1609 = vmatprep.subr.bf16.mxu0 0
      %1610 = vmatpush1.bf16.xpose.msra.mxu0 0
      %1611 = vmatprep.subr.bf16.mxu0 0
      %1612 = vmatpush1.bf16.xpose.msra.mxu0 0
      %1613 = vmatprep.subr.bf16.mxu0 0
      %1614 = vmatpush1.bf16.xpose.msra.mxu0 0
      %1615 = vmatprep.subr.bf16.mxu0 0
      %1616 = vmatpush1.bf16.xpose.msra.mxu0 0
      %1617 = vmatprep.subr.bf16.mxu0 0
      %1618 = vmatpush1.bf16.xpose.msra.mxu0 0
      %1619 = vmatprep.subr.bf16.mxu0 0
      %1620 = vmatpush1.bf16.xpose.msra.mxu0 %v1603
      %1621 = vmatprep.subr.bf16.mxu0 0
      %1622 = vmatpush2.bf16.xpose.msra.mxu0 0
      %1623 = vmatprep.subr.bf16.mxu0 0
      %1624 = vmatpush2.bf16.xpose.msra.mxu0 0
      %1625 = vmatprep.subr.bf16.mxu0 0
      %1626 = vmatpush2.bf16.xpose.msra.mxu0 0
      %1627 = vmatprep.subr.bf16.mxu0 0
      %1628 = vmatpush2.bf16.xpose.msra.mxu0 0
      %1629 = vmatprep.subr.bf16.mxu0 0
      %1630 = vmatpush2.bf16.xpose.msra.mxu0 0
      %1631 = vmatprep.subr.bf16.mxu0 0
      %1632 = vmatpush2.bf16.xpose.msra.mxu0 0
      %1633 = vmatprep.subr.bf16.mxu0 0
      %1634 = vmatpush2.bf16.xpose.msra.mxu0 0
      %1635 = vmatprep.subr.bf16.mxu0 0
      %1636 = vmatpush2.bf16.xpose.msra.mxu0 0
      %1637 = vmatprep.mubr.bf16.mxu0 0
      %1638 = vmatmul.mubr.bf16.gmra.mxu0 %v1600
      %v1639 = vpop.f32.mrf.mxu0
      %v1640 = vadd.f32 0.0, %v1639
      %v1641 = vpop.f32.mrf.mxu0
      %v1642 = vpop.f32.mrf.mxu0
      %v1643 = vadd.f32 0.0, %v1642
      %v1644 = vpop.f32.mrf.mxu0
      %1645 = vdwg.mxu0
      %v1646 = vmul.f32 %v1593, 0.17677669
      %v1647 = vmul.f32 %v1596, 0.17677669
      %v1648 = vmul.f32 %v1640, 0.17677669
      %v1649 = vmul.f32 %v1643, 0.17677669
      %vm1650 = vcmask 130048
      %v1651 = vsel %vm1650, %v1646, -inf
      %1652 = vmax.xlane.f32.xlu0 %v1651
      %v1653 = vpop.xlane.xlu0 %1652
      %v1654 = vsel %vm1650, %v1647, -inf
      %1655 = vmax.xlane.f32.xlu0 %v1654
      %v1656 = vpop.xlane.xlu0 %1655
      %v1657 = vsel %vm1650, %v1648, -inf
      %1658 = vmax.xlane.f32.xlu0 %v1657
      %v1659 = vpop.xlane.xlu0 %1658
      %v1660 = vsel %vm1650, %v1649, -inf
      %1661 = vmax.xlane.f32.xlu0 %v1660
      %v1662 = vpop.xlane.xlu0 %1661
      %v1663 = vsub.f32 %v1646, %v1653
      %v1664 = vsub.f32 %v1647, %v1656
      %v1665 = vsub.f32 %v1648, %v1659
      %v1666 = vsub.f32 %v1649, %v1662
      %v1667 = vmul.f32 %v1663, 1.442695
      %v1668 = vpow.pop %v1667
      %v1669 = vmul.f32 %v1664, 1.442695
      %v1670 = vpow.pop %v1669
      %v1671 = vmul.f32 %v1665, 1.442695
      %v1672 = vpow.pop %v1671
      %v1673 = vmul.f32 %v1666, 1.442695
      %v1674 = vpow.pop %v1673
      %v1675 = vsel %vm1650, %v1668, 0.0
      %1676 = vadd.xlane.f32.xlu0 %v1675
      %v1677 = vpop.xlane.xlu0 %1676
      %v1678 = vsel %vm1650, %v1670, 0.0
      %1679 = vadd.xlane.f32.xlu0 %v1678
      %v1680 = vpop.xlane.xlu0 %1679
      %v1681 = vsel %vm1650, %v1672, 0.0
      %1682 = vadd.xlane.f32.xlu0 %v1681
      %v1683 = vpop.xlane.xlu0 %1682
      %v1684 = vsel %vm1650, %v1674, 0.0
      %1685 = vadd.xlane.f32.xlu0 %v1684
      %v1686 = vpop.xlane.xlu0 %1685
      %v1687 = vrcp.pop %v1677
      %v1688 = vrcp.pop %v1680
      %v1689 = vrcp.pop %v1683
      %v1690 = vrcp.pop %v1686
      %v1691 = vmul.f32 %v1668, %v1687
      %v1692 = vmul.f32 %v1670, %v1688
      %v1693 = vmul.f32 %v1672, %v1689
      %v1694 = vmul.f32 %v1674, %v1690
      %v1695 = vpack.c.bf16 %v1692, %v1691
      %v1696 = vpack.c.bf16 %v1694, %v1693
      %v1698 = vsel %vm1650, %v1695, 0
      %1700 = vmatprep.subr.bf16.mxu0 0
      %1701 = vmatpush1.bf16.msra.mxu0 0
      %1702 = vmatprep.subr.bf16.mxu0 0
      %1703 = vmatpush1.bf16.msra.mxu0 0
      %1704 = vmatprep.subr.bf16.mxu0 0
      %1705 = vmatpush1.bf16.msra.mxu0 0
      %1706 = vmatprep.subr.bf16.mxu0 0
      %1707 = vmatpush1.bf16.msra.mxu0 0
      %1708 = vmatprep.subr.bf16.mxu0 0
      %1709 = vmatpush1.bf16.msra.mxu0 0
      %1710 = vmatprep.subr.bf16.mxu0 0
      %1711 = vmatpush1.bf16.msra.mxu0 0
      %1712 = vmatprep.subr.bf16.mxu0 0
      %1713 = vmatpush1.bf16.msra.mxu0 0
      %1714 = vmatprep.subr.bf16.mxu0 0
      %1715 = vmatpush1.bf16.msra.mxu0 %v1549
      %1716 = vmatprep.subr.bf16.mxu0 0
      %1717 = vmatpush2.bf16.msra.mxu0 0
      %1718 = vmatprep.subr.bf16.mxu0 0
      %1719 = vmatpush2.bf16.msra.mxu0 0
      %1720 = vmatprep.subr.bf16.mxu0 0
      %1721 = vmatpush2.bf16.msra.mxu0 0
      %1722 = vmatprep.subr.bf16.mxu0 0
      %1723 = vmatpush2.bf16.msra.mxu0 0
      %1724 = vmatprep.subr.bf16.mxu0 0
      %1725 = vmatpush2.bf16.msra.mxu0 0
      %1726 = vmatprep.subr.bf16.mxu0 0
      %1727 = vmatpush2.bf16.msra.mxu0 0
      %1728 = vmatprep.subr.bf16.mxu0 0
      %1729 = vmatpush2.bf16.msra.mxu0 0
      %1730 = vmatprep.subr.bf16.mxu0 0
      %1731 = vmatpush2.bf16.msra.mxu0 0
      %1732 = vmatprep.mubr.bf16.mxu0 0
      %1733 = vmatmul.mubr.bf16.gmra.mxu0 %v1698
      %v1734 = vpop.f32.mrf.mxu0
      %v1735 = vadd.f32 0.0, %v1734
      %v1736 = vpop.f32.mrf.mxu0
      %v1737 = vpop.f32.mrf.mxu0
      %v1738 = vadd.f32 0.0, %v1737
      %v1739 = vpop.f32.mrf.mxu0
      %1740 = vdwg.mxu0
      %v1742 = vsel %vm1650, %v1696, 0
      %1744 = vmatprep.subr.bf16.mxu0 0
      %1745 = vmatpush1.bf16.msra.mxu0 0
      %1746 = vmatprep.subr.bf16.mxu0 0
      %1747 = vmatpush1.bf16.msra.mxu0 0
      %1748 = vmatprep.subr.bf16.mxu0 0
      %1749 = vmatpush1.bf16.msra.mxu0 0
      %1750 = vmatprep.subr.bf16.mxu0 0
      %1751 = vmatpush1.bf16.msra.mxu0 0
      %1752 = vmatprep.subr.bf16.mxu0 0
      %1753 = vmatpush1.bf16.msra.mxu0 0
      %1754 = vmatprep.subr.bf16.mxu0 0
      %1755 = vmatpush1.bf16.msra.mxu0 0
      %1756 = vmatprep.subr.bf16.mxu0 0
      %1757 = vmatpush1.bf16.msra.mxu0 0
      %1758 = vmatprep.subr.bf16.mxu0 0
      %1759 = vmatpush1.bf16.msra.mxu0 %v1550
      %1760 = vmatprep.subr.bf16.mxu0 0
      %1761 = vmatpush2.bf16.msra.mxu0 0
      %1762 = vmatprep.subr.bf16.mxu0 0
      %1763 = vmatpush2.bf16.msra.mxu0 0
      %1764 = vmatprep.subr.bf16.mxu0 0
      %1765 = vmatpush2.bf16.msra.mxu0 0
      %1766 = vmatprep.subr.bf16.mxu0 0
      %1767 = vmatpush2.bf16.msra.mxu0 0
      %1768 = vmatprep.subr.bf16.mxu0 0
      %1769 = vmatpush2.bf16.msra.mxu0 0
      %1770 = vmatprep.subr.bf16.mxu0 0
      %1771 = vmatpush2.bf16.msra.mxu0 0
      %1772 = vmatprep.subr.bf16.mxu0 0
      %1773 = vmatpush2.bf16.msra.mxu0 0
      %1774 = vmatprep.subr.bf16.mxu0 0
      %1775 = vmatpush2.bf16.msra.mxu0 0
      %1776 = vmatprep.mubr.bf16.mxu0 0
      %1777 = vmatmul.mubr.bf16.gmra.mxu0 %v1742
      %v1778 = vpop.f32.mrf.mxu0
      %v1779 = vadd.f32 0.0, %v1778
      %v1780 = vpop.f32.mrf.mxu0
      %v1781 = vpop.f32.mrf.mxu0
      %v1782 = vadd.f32 0.0, %v1781
      %v1783 = vpop.f32.mrf.mxu0
      %1784 = vdwg.mxu0
      %v1785 = vcombine.high %v1735, 0.0
      %v1787 = vunpack.c.l.s4 1983009808
      %v1788 = vunpack.c.0.s8 %v1787
      %v1789 = vlaneseq
      %v1790 = vshrl.u32 %v1789, 7
      %v1791 = vsub.s32 %v1788, %v1790
      %v1792 = vrot.slane %v1735, %v1791
      %v1794 = vunpack.c.l.s4 1983009808
      %v1795 = vunpack.c.0.s8 %v1794
      %v1796 = vlaneseq
      %v1797 = vshrl.u32 %v1796, 7
      %v1798 = vsub.s32 %v1795, %v1797
      %v1799 = vrot.slane %v1785, %v1798
      %v1800 = vcombine.high %v1779, 0.0
      %v1802 = vunpack.c.l.s4 1983009808
      %v1803 = vunpack.c.0.s8 %v1802
      %v1804 = vlaneseq
      %v1805 = vshrl.u32 %v1804, 7
      %v1806 = vsub.s32 %v1803, %v1805
      %v1807 = vrot.slane %v1779, %v1806
      %v1809 = vunpack.c.l.s4 1983009808
      %v1810 = vunpack.c.0.s8 %v1809
      %v1811 = vlaneseq
      %v1812 = vshrl.u32 %v1811, 7
      %v1813 = vsub.s32 %v1810, %v1812
      %v1814 = vrot.slane %v1800, %v1813
      %v1815 = vcombine.low %v1792, %v1807
      %v1816 = vcombine.high %v1792, %v1807
      %v1818 = vunpack.c.l.s4 1934713408
      %v1819 = vunpack.c.0.s8 %v1818
      %v1820 = vlaneseq
      %v1821 = vshrl.u32 %v1820, 7
      %v1822 = vsub.s32 %v1819, %v1821
      %v1823 = vrot.slane %v1815, %v1822
      %v1825 = vunpack.c.l.s4 1934713408
      %v1826 = vunpack.c.0.s8 %v1825
      %v1827 = vlaneseq
      %v1828 = vshrl.u32 %v1827, 7
      %v1829 = vsub.s32 %v1826, %v1828
      %v1830 = vrot.slane %v1816, %v1829
      %v1831 = vcombine.low %v1799, %v1814
      %v1832 = vcombine.high %v1799, %v1814
      %v1834 = vunpack.c.l.s4 1934713408
      %v1835 = vunpack.c.0.s8 %v1834
      %v1836 = vlaneseq
      %v1837 = vshrl.u32 %v1836, 7
      %v1838 = vsub.s32 %v1835, %v1837
      %v1839 = vrot.slane %v1831, %v1838
      %v1841 = vunpack.c.l.s4 1934713408
      %v1842 = vunpack.c.0.s8 %v1841
      %v1843 = vlaneseq
      %v1844 = vshrl.u32 %v1843, 7
      %v1845 = vsub.s32 %v1842, %v1844
      %v1846 = vrot.slane %v1832, %v1845
      %v1847 = vcombine.high %v1823, 0.0
      %v1848 = vcombine.high %v1830, 0.0
      %v1849 = vcombine.high %v1839, 0.0
      %v1850 = vcombine.high %v1846, 0.0
      %v1851 = vcombine.high %v1738, 0.0
      %v1853 = vunpack.c.l.s4 1983009808
      %v1854 = vunpack.c.0.s8 %v1853
      %v1855 = vlaneseq
      %v1856 = vshrl.u32 %v1855, 7
      %v1857 = vsub.s32 %v1854, %v1856
      %v1858 = vrot.slane %v1738, %v1857
      %v1860 = vunpack.c.l.s4 1983009808
      %v1861 = vunpack.c.0.s8 %v1860
      %v1862 = vlaneseq
      %v1863 = vshrl.u32 %v1862, 7
      %v1864 = vsub.s32 %v1861, %v1863
      %v1865 = vrot.slane %v1851, %v1864
      %v1866 = vcombine.high %v1782, 0.0
      %v1868 = vunpack.c.l.s4 1983009808
      %v1869 = vunpack.c.0.s8 %v1868
      %v1870 = vlaneseq
      %v1871 = vshrl.u32 %v1870, 7
      %v1872 = vsub.s32 %v1869, %v1871
      %v1873 = vrot.slane %v1782, %v1872
      %v1875 = vunpack.c.l.s4 1983009808
      %v1876 = vunpack.c.0.s8 %v1875
      %v1877 = vlaneseq
      %v1878 = vshrl.u32 %v1877, 7
      %v1879 = vsub.s32 %v1876, %v1878
      %v1880 = vrot.slane %v1866, %v1879
      %v1881 = vcombine.low %v1858, %v1873
      %v1882 = vcombine.high %v1858, %v1873
      %v1884 = vunpack.c.l.s4 1934713408
      %v1885 = vunpack.c.0.s8 %v1884
      %v1886 = vlaneseq
      %v1887 = vshrl.u32 %v1886, 7
      %v1888 = vsub.s32 %v1885, %v1887
      %v1889 = vrot.slane %v1881, %v1888
      %v1891 = vunpack.c.l.s4 1934713408
      %v1892 = vunpack.c.0.s8 %v1891
      %v1893 = vlaneseq
      %v1894 = vshrl.u32 %v1893, 7
      %v1895 = vsub.s32 %v1892, %v1894
      %v1896 = vrot.slane %v1882, %v1895
      %v1897 = vcombine.low %v1865, %v1880
      %v1898 = vcombine.high %v1865, %v1880
      %v1900 = vunpack.c.l.s4 1934713408
      %v1901 = vunpack.c.0.s8 %v1900
      %v1902 = vlaneseq
      %v1903 = vshrl.u32 %v1902, 7
      %v1904 = vsub.s32 %v1901, %v1903
      %v1905 = vrot.slane %v1897, %v1904
      %v1907 = vunpack.c.l.s4 1934713408
      %v1908 = vunpack.c.0.s8 %v1907
      %v1909 = vlaneseq
      %v1910 = vshrl.u32 %v1909, 7
      %v1911 = vsub.s32 %v1908, %v1910
      %v1912 = vrot.slane %v1898, %v1911
      %v1913 = vcombine.high %v1889, 0.0
      %v1914 = vcombine.high %v1896, 0.0
      %v1915 = vcombine.high %v1905, 0.0
      %v1916 = vcombine.high %v1912, 0.0
      %v1917 = vcombine.low %v1823, %v1830
      %v1919 = vunpack.c.l.s4 1983009808
      %v1920 = vunpack.c.0.s8 %v1919
      %v1921 = vlaneseq
      %v1922 = vshrl.u32 %v1921, 7
      %v1923 = vsub.s32 %v1920, %v1922
      %v1924 = vrot.slane %v1917, %v1923
      %v1925 = vcombine.low %v1847, %v1848
      %v1927 = vunpack.c.l.s4 1983009808
      %v1928 = vunpack.c.0.s8 %v1927
      %v1929 = vlaneseq
      %v1930 = vshrl.u32 %v1929, 7
      %v1931 = vsub.s32 %v1928, %v1930
      %v1932 = vrot.slane %v1925, %v1931
      %v1933 = vcombine.low %v1839, %v1846
      %v1935 = vunpack.c.l.s4 1983009808
      %v1936 = vunpack.c.0.s8 %v1935
      %v1937 = vlaneseq
      %v1938 = vshrl.u32 %v1937, 7
      %v1939 = vsub.s32 %v1936, %v1938
      %v1940 = vrot.slane %v1933, %v1939
      %v1941 = vcombine.low %v1849, %v1850
      %v1943 = vunpack.c.l.s4 1983009808
      %v1944 = vunpack.c.0.s8 %v1943
      %v1945 = vlaneseq
      %v1946 = vshrl.u32 %v1945, 7
      %v1947 = vsub.s32 %v1944, %v1946
      %v1948 = vrot.slane %v1941, %v1947
      %v1949 = vcombine.low %v1924, %v1932
      %v1951 = vunpack.c.l.s4 1934713408
      %v1952 = vunpack.c.0.s8 %v1951
      %v1953 = vlaneseq
      %v1954 = vshrl.u32 %v1953, 7
      %v1955 = vsub.s32 %v1952, %v1954
      %v1956 = vrot.slane %v1949, %v1955
      %v1957 = vcombine.low %v1940, %v1948
      %v1959 = vunpack.c.l.s4 1934713408
      %v1960 = vunpack.c.0.s8 %v1959
      %v1961 = vlaneseq
      %v1962 = vshrl.u32 %v1961, 7
      %v1963 = vsub.s32 %v1960, %v1962
      %v1964 = vrot.slane %v1957, %v1963
      %v1965 = vcombine.low %v1956, %v1964
      %v1966 = vcombine.high %v1956, %v1964
      %v1967 = vcombine.low %v1889, %v1896
      %v1969 = vunpack.c.l.s4 1983009808
      %v1970 = vunpack.c.0.s8 %v1969
      %v1971 = vlaneseq
      %v1972 = vshrl.u32 %v1971, 7
      %v1973 = vsub.s32 %v1970, %v1972
      %v1974 = vrot.slane %v1967, %v1973
      %v1975 = vcombine.low %v1913, %v1914
      %v1977 = vunpack.c.l.s4 1983009808
      %v1978 = vunpack.c.0.s8 %v1977
      %v1979 = vlaneseq
      %v1980 = vshrl.u32 %v1979, 7
      %v1981 = vsub.s32 %v1978, %v1980
      %v1982 = vrot.slane %v1975, %v1981
      %v1983 = vcombine.low %v1905, %v1912
      %v1985 = vunpack.c.l.s4 1983009808
      %v1986 = vunpack.c.0.s8 %v1985
      %v1987 = vlaneseq
      %v1988 = vshrl.u32 %v1987, 7
      %v1989 = vsub.s32 %v1986, %v1988
      %v1990 = vrot.slane %v1983, %v1989
      %v1991 = vcombine.low %v1915, %v1916
      %v1993 = vunpack.c.l.s4 1983009808
      %v1994 = vunpack.c.0.s8 %v1993
      %v1995 = vlaneseq
      %v1996 = vshrl.u32 %v1995, 7
      %v1997 = vsub.s32 %v1994, %v1996
      %v1998 = vrot.slane %v1991, %v1997
      %v1999 = vcombine.low %v1974, %v1982
      %v2001 = vunpack.c.l.s4 1934713408
      %v2002 = vunpack.c.0.s8 %v2001
      %v2003 = vlaneseq
      %v2004 = vshrl.u32 %v2003, 7
      %v2005 = vsub.s32 %v2002, %v2004
      %v2006 = vrot.slane %v1999, %v2005
      %v2007 = vcombine.low %v1990, %v1998
      %v2009 = vunpack.c.l.s4 1934713408
      %v2010 = vunpack.c.0.s8 %v2009
      %v2011 = vlaneseq
      %v2012 = vshrl.u32 %v2011, 7
      %v2013 = vsub.s32 %v2010, %v2012
      %v2014 = vrot.slane %v2007, %v2013
      %v2015 = vcombine.low %v2006, %v2014
      %v2016 = vcombine.high %v2006, %v2014
      %2019 = vrot.lane.b32.xlu0 %v1966, 32
      %v2020 = vpop.permute.xlu0 %2019
      %2021 = vrot.lane.b32.xlu0 %v2016, 32
      %v2022 = vpop.permute.xlu0 %2021
      %v2025 = vsel %vm1551, %v1965, %v2020
      %v2026 = vsel %vm1551, %v2015, %v2022
      %v2027 = vpack.c.bf16 %v2026, %v2025
      %v2028 = vld [vmem:[%s8] sm:$0xf]
      %v2029 = vld [vmem:[%s8 + $0x4] sm:$0xf]
      %v2030 = vld [vmem:[%s8 + $0x8] sm:$0xf]
      %v2031 = vld [vmem:[%s8 + $0xc] sm:$0xf]
      %v2032 = vld [vmem:[%s8 + $0x10] sm:$0xf]
      %v2033 = vld [vmem:[%s8 + $0x14] sm:$0xf]
      %v2034 = vld [vmem:[%s8 + $0x18] sm:$0xf]
      %v2035 = vld [vmem:[%s8 + $0x1c] sm:$0xf]
      %v2036 = vld [vmem:[%s9] sm:$0x1]
      %v2038 = vlaneseq
      %v2039 = vshrl.u32 %v2038, 7
      %v2040 = vsub.s32 0, %v2039
      %v2041 = vrot.slane %v2036, %v2040
      %v2051 = vunpack.c.l.b16 %v2028
      %v2052 = vunpack.c.l.b16 %v2029
      %v2053 = vunpack.c.l.b16 %v2030
      %v2054 = vunpack.c.l.b16 %v2031
      %v2055 = vunpack.c.l.b16 %v2032
      %v2056 = vunpack.c.l.b16 %v2033
      %v2057 = vunpack.c.l.b16 %v2034
      %v2058 = vunpack.c.l.b16 %v2035
      %v2059 = vpack.c.b16 %v2052, %v2051
      %v2060 = vpack.c.b16 %v2054, %v2053
      %v2061 = vpack.c.b16 %v2056, %v2055
      %v2062 = vpack.c.b16 %v2058, %v2057
      %v2068 = vsel %vm557, %v2027, 0
      %2070 = vmatprep.subr.bf16.mxu0 0
      %2071 = vmatpush1.bf16.msra.mxu0 0
      %2072 = vmatprep.subr.bf16.mxu0 0
      %2073 = vmatpush1.bf16.msra.mxu0 0
      %2074 = vmatprep.subr.bf16.mxu0 0
      %2075 = vmatpush1.bf16.msra.mxu0 0
      %2076 = vmatprep.subr.bf16.mxu0 0
      %2077 = vmatpush1.bf16.msra.mxu0 0
      %2078 = vmatprep.subr.bf16.mxu0 0
      %2079 = vmatpush1.bf16.msra.mxu0 %v2062
      %2080 = vmatprep.subr.bf16.mxu0 0
      %2081 = vmatpush1.bf16.msra.mxu0 %v2061
      %2082 = vmatprep.subr.bf16.mxu0 0
      %2083 = vmatpush1.bf16.msra.mxu0 %v2060
      %2084 = vmatprep.subr.bf16.mxu0 0
      %2085 = vmatpush1.bf16.msra.mxu0 %v2059
      %2086 = vmatprep.subr.bf16.mxu0 0
      %2087 = vmatpush2.bf16.msra.mxu0 0
      %2088 = vmatprep.subr.bf16.mxu0 0
      %2089 = vmatpush2.bf16.msra.mxu0 0
      %2090 = vmatprep.subr.bf16.mxu0 0
      %2091 = vmatpush2.bf16.msra.mxu0 0
      %2092 = vmatprep.subr.bf16.mxu0 0
      %2093 = vmatpush2.bf16.msra.mxu0 0
      %2094 = vmatprep.subr.bf16.mxu0 0
      %2095 = vmatpush2.bf16.msra.mxu0 0
      %2096 = vmatprep.subr.bf16.mxu0 0
      %2097 = vmatpush2.bf16.msra.mxu0 0
      %2098 = vmatprep.subr.bf16.mxu0 0
      %2099 = vmatpush2.bf16.msra.mxu0 0
      %2100 = vmatprep.subr.bf16.mxu0 0
      %2101 = vmatpush2.bf16.msra.mxu0 0
      %2102 = vmatprep.mubr.bf16.mxu0 0
      %2103 = vmatmul.mubr.bf16.gmra.mxu0 %v2068
      %v2104 = vpop.f32.mrf.mxu0
      %v2105 = vadd.f32 %v2041, %v2104
      %v2106 = vpop.f32.mrf.mxu0
      %v2107 = vpop.f32.mrf.mxu0
      %v2108 = vadd.f32 %v2041, %v2107
      %v2109 = vpop.f32.mrf.mxu0
      %2110 = vdwg.mxu0
      %v2111 = vadd.f32 %v552, %v2105
      %v2112 = vadd.f32 %v553, %v2108
      %v2113 = vld [vmem:[%s10] sm:$0x1]
      %v2114 = vmul.f32 %v2111, %v2111
      %v2115 = vmul.f32 %v2112, %v2112
      %v2116 = vsel %vm557, %v2114, 0.0
      %2117 = vadd.xlane.f32.xlu0 %v2116
      %v2118 = vpop.xlane.xlu0 %2117
      %v2119 = vsel %vm557, %v2115, 0.0
      %2120 = vadd.xlane.f32.xlu0 %v2119
      %v2121 = vpop.xlane.xlu0 %2120
      %v2122 = vmul.f32 %v2118, %v564
      %v2123 = vmul.f32 %v2121, %v564
      %v2124 = vadd.f32 %v2122, 1e-05
      %v2125 = vadd.f32 %v2123, 1e-05
      %v2126 = vrsqrt.pop %v2124
      %v2127 = vrsqrt.pop %v2125
      %v2128 = vmul.f32 %v2111, %v2126
      %v2129 = vmul.f32 %v2112, %v2127
      %v2131 = vlaneseq
      %v2132 = vshrl.u32 %v2131, 7
      %v2133 = vsub.s32 0, %v2132
      %v2134 = vrot.slane %v2113, %v2133
      %v2136 = vmul.f32 %v2128, %v2134
      %v2137 = vmul.f32 %v2129, %v2134
      %v2138 = vpack.c.bf16 %v2137, %v2136
      %v2139 = vld [vmem:[%s11] sm:$0xff]
      %v2140 = vld [vmem:[%s11 + $0x8] sm:$0xff]
      %v2141 = vld [vmem:[%s11 + $0x10] sm:$0xff]
      %v2142 = vld [vmem:[%s11 + $0x18] sm:$0xff]
      %v2143 = vld [vmem:[%s11 + $0x20] sm:$0xff]
      %v2144 = vld [vmem:[%s11 + $0x28] sm:$0xff]
      %v2145 = vld [vmem:[%s11 + $0x30] sm:$0xff]
      %v2146 = vld [vmem:[%s11 + $0x38] sm:$0xff]
      %v2147 = vld [vmem:[%s12] sm:$0x3]
      %v2149 = vlaneseq
      %v2150 = vshrl.u32 %v2149, 7
      %v2151 = vsub.s32 0, %v2150
      %v2152 = vrot.slane %v2147, %v2151
      %v2153 = vlaneseq
      %v2154 = vshrl.u32 %v2153, 7
      %v2155 = vsub.s32 1, %v2154
      %v2156 = vrot.slane %v2147, %v2155
      %v2167 = vunpack.c.l.b16 %v2139
      %v2168 = vunpack.c.h.b16 %v2139
      %v2169 = vunpack.c.l.b16 %v2140
      %v2170 = vunpack.c.h.b16 %v2140
      %v2171 = vunpack.c.l.b16 %v2141
      %v2172 = vunpack.c.h.b16 %v2141
      %v2173 = vunpack.c.l.b16 %v2142
      %v2174 = vunpack.c.h.b16 %v2142
      %v2175 = vunpack.c.l.b16 %v2143
      %v2176 = vunpack.c.h.b16 %v2143
      %v2177 = vunpack.c.l.b16 %v2144
      %v2178 = vunpack.c.h.b16 %v2144
      %v2179 = vunpack.c.l.b16 %v2145
      %v2180 = vunpack.c.h.b16 %v2145
      %v2181 = vunpack.c.l.b16 %v2146
      %v2182 = vunpack.c.h.b16 %v2146
      %v2183 = vpack.c.b16 %v2169, %v2167
      %v2184 = vpack.c.b16 %v2170, %v2168
      %v2185 = vpack.c.b16 %v2173, %v2171
      %v2186 = vpack.c.b16 %v2174, %v2172
      %v2187 = vpack.c.b16 %v2177, %v2175
      %v2188 = vpack.c.b16 %v2178, %v2176
      %v2189 = vpack.c.b16 %v2181, %v2179
      %v2190 = vpack.c.b16 %v2182, %v2180
      %v2200 = vsel %vm557, %v2138, 0
      %2202 = vmatprep.subr.bf16.mxu0 0
      %2203 = vmatpush1.bf16.msra.mxu0 0
      %2204 = vmatprep.subr.bf16.mxu0 0
      %2205 = vmatpush1.bf16.msra.mxu0 0
      %2206 = vmatprep.subr.bf16.mxu0 0
      %2207 = vmatpush1.bf16.msra.mxu0 0
      %2208 = vmatprep.subr.bf16.mxu0 0
      %2209 = vmatpush1.bf16.msra.mxu0 0
      %2210 = vmatprep.subr.bf16.mxu0 %v2190
      %2211 = vmatpush1.bf16.msra.mxu0 %v2189
      %2212 = vmatprep.subr.bf16.mxu0 %v2188
      %2213 = vmatpush1.bf16.msra.mxu0 %v2187
      %2214 = vmatprep.subr.bf16.mxu0 %v2186
      %2215 = vmatpush1.bf16.msra.mxu0 %v2185
      %2216 = vmatprep.subr.bf16.mxu0 %v2184
      %2217 = vmatpush1.bf16.msra.mxu0 %v2183
      %2218 = vmatprep.subr.bf16.mxu0 0
      %2219 = vmatpush2.bf16.msra.mxu0 0
      %2220 = vmatprep.subr.bf16.mxu0 0
      %2221 = vmatpush2.bf16.msra.mxu0 0
      %2222 = vmatprep.subr.bf16.mxu0 0
      %2223 = vmatpush2.bf16.msra.mxu0 0
      %2224 = vmatprep.subr.bf16.mxu0 0
      %2225 = vmatpush2.bf16.msra.mxu0 0
      %2226 = vmatprep.subr.bf16.mxu0 0
      %2227 = vmatpush2.bf16.msra.mxu0 0
      %2228 = vmatprep.subr.bf16.mxu0 0
      %2229 = vmatpush2.bf16.msra.mxu0 0
      %2230 = vmatprep.subr.bf16.mxu0 0
      %2231 = vmatpush2.bf16.msra.mxu0 0
      %2232 = vmatprep.subr.bf16.mxu0 0
      %2233 = vmatpush2.bf16.msra.mxu0 0
      %2234 = vmatprep.mubr.bf16.mxu0 0
      %2235 = vmatmul.mubr.bf16.gmra.mxu0 %v2200
      %v2236 = vpop.f32.mrf.mxu0
      %v2237 = vadd.f32 %v2152, %v2236
      %v2238 = vpop.f32.mrf.mxu0
      %v2239 = vadd.f32 %v2156, %v2238
      %v2240 = vpop.f32.mrf.mxu0
      %v2241 = vadd.f32 %v2152, %v2240
      %v2242 = vpop.f32.mrf.mxu0
      %v2243 = vadd.f32 %v2156, %v2242
      %2244 = vdwg.mxu0
      %v2245 = vld [vmem:[%s13] sm:$0xff]
      %v2246 = vld [vmem:[%s13 + $0x8] sm:$0xff]
      %v2247 = vld [vmem:[%s13 + $0x10] sm:$0xff]
      %v2248 = vld [vmem:[%s13 + $0x18] sm:$0xff]
      %v2249 = vld [vmem:[%s13 + $0x20] sm:$0xff]
      %v2250 = vld [vmem:[%s13 + $0x28] sm:$0xff]
      %v2251 = vld [vmem:[%s13 + $0x30] sm:$0xff]
      %v2252 = vld [vmem:[%s13 + $0x38] sm:$0xff]
      %v2253 = vld [vmem:[%s14] sm:$0x3]
      %v2255 = vlaneseq
      %v2256 = vshrl.u32 %v2255, 7
      %v2257 = vsub.s32 0, %v2256
      %v2258 = vrot.slane %v2253, %v2257
      %v2259 = vlaneseq
      %v2260 = vshrl.u32 %v2259, 7
      %v2261 = vsub.s32 1, %v2260
      %v2262 = vrot.slane %v2253, %v2261
      %v2273 = vunpack.c.l.b16 %v2245
      %v2274 = vunpack.c.h.b16 %v2245
      %v2275 = vunpack.c.l.b16 %v2246
      %v2276 = vunpack.c.h.b16 %v2246
      %v2277 = vunpack.c.l.b16 %v2247
      %v2278 = vunpack.c.h.b16 %v2247
      %v2279 = vunpack.c.l.b16 %v2248
      %v2280 = vunpack.c.h.b16 %v2248
      %v2281 = vunpack.c.l.b16 %v2249
      %v2282 = vunpack.c.h.b16 %v2249
      %v2283 = vunpack.c.l.b16 %v2250
      %v2284 = vunpack.c.h.b16 %v2250
      %v2285 = vunpack.c.l.b16 %v2251
      %v2286 = vunpack.c.h.b16 %v2251
      %v2287 = vunpack.c.l.b16 %v2252
      %v2288 = vunpack.c.h.b16 %v2252
      %v2289 = vpack.c.b16 %v2275, %v2273
      %v2290 = vpack.c.b16 %v2276, %v2274
      %v2291 = vpack.c.b16 %v2279, %v2277
      %v2292 = vpack.c.b16 %v2280, %v2278
      %v2293 = vpack.c.b16 %v2283, %v2281
      %v2294 = vpack.c.b16 %v2284, %v2282
      %v2295 = vpack.c.b16 %v2287, %v2285
      %v2296 = vpack.c.b16 %v2288, %v2286
      %2305 = vmatprep.subr.bf16.mxu0 0
      %2306 = vmatpush1.bf16.msra.mxu0 0
      %2307 = vmatprep.subr.bf16.mxu0 0
      %2308 = vmatpush1.bf16.msra.mxu0 0
      %2309 = vmatprep.subr.bf16.mxu0 0
      %2310 = vmatpush1.bf16.msra.mxu0 0
      %2311 = vmatprep.subr.bf16.mxu0 0
      %2312 = vmatpush1.bf16.msra.mxu0 0
      %2313 = vmatprep.subr.bf16.mxu0 %v2296
      %2314 = vmatpush1.bf16.msra.mxu0 %v2295
      %2315 = vmatprep.subr.bf16.mxu0 %v2294
      %2316 = vmatpush1.bf16.msra.mxu0 %v2293
      %2317 = vmatprep.subr.bf16.mxu0 %v2292
      %2318 = vmatpush1.bf16.msra.mxu0 %v2291
      %2319 = vmatprep.subr.bf16.mxu0 %v2290
      %2320 = vmatpush1.bf16.msra.mxu0 %v2289
      %2321 = vmatprep.subr.bf16.mxu0 0
      %2322 = vmatpush2.bf16.msra.mxu0 0
      %2323 = vmatprep.subr.bf16.mxu0 0
      %2324 = vmatpush2.bf16.msra.mxu0 0
      %2325 = vmatprep.subr.bf16.mxu0 0
      %2326 = vmatpush2.bf16.msra.mxu0 0
      %2327 = vmatprep.subr.bf16.mxu0 0
      %2328 = vmatpush2.bf16.msra.mxu0 0
      %2329 = vmatprep.subr.bf16.mxu0 0
      %2330 = vmatpush2.bf16.msra.mxu0 0
      %2331 = vmatprep.subr.bf16.mxu0 0
      %2332 = vmatpush2.bf16.msra.mxu0 0
      %2333 = vmatprep.subr.bf16.mxu0 0
      %2334 = vmatpush2.bf16.msra.mxu0 0
      %2335 = vmatprep.subr.bf16.mxu0 0
      %2336 = vmatpush2.bf16.msra.mxu0 0
      %2337 = vmatprep.mubr.bf16.mxu0 0
      %2338 = vmatmul.mubr.bf16.gmra.mxu0 %v2200
      %v2339 = vpop.f32.mrf.mxu0
      %v2340 = vadd.f32 %v2258, %v2339
      %v2341 = vpop.f32.mrf.mxu0
      %v2342 = vadd.f32 %v2262, %v2341
      %v2343 = vpop.f32.mrf.mxu0
      %v2344 = vadd.f32 %v2258, %v2343
      %v2345 = vpop.f32.mrf.mxu0
      %v2346 = vadd.f32 %v2262, %v2345
      %2347 = vdwg.mxu0
      %v2348 = vxor.u32 %v2237, 2147483648
      %v2349 = vxor.u32 %v2239, 2147483648
      %v2350 = vxor.u32 %v2241, 2147483648
      %v2351 = vxor.u32 %v2243, 2147483648
      %v2352 = vmul.f32 %v2348, 1.442695
      %v2353 = vpow.pop %v2352
      %v2354 = vmul.f32 %v2349, 1.442695
      %v2355 = vpow.pop %v2354
      %v2356 = vmul.f32 %v2350, 1.442695
      %v2357 = vpow.pop %v2356
      %v2358 = vmul.f32 %v2351, 1.442695
      %v2359 = vpow.pop %v2358
      %v2360 = vadd.f32 %v2353, 1.0
      %v2361 = vadd.f32 %v2355, 1.0
      %v2362 = vadd.f32 %v2357, 1.0
      %v2363 = vadd.f32 %v2359, 1.0
      %v2364 = vrcp.pop %v2360
      %v2365 = vmul.f32 1.0, %v2364
      %v2366 = vrcp.pop %v2361
      %v2367 = vmul.f32 1.0, %v2366
      %v2368 = vrcp.pop %v2362
      %v2369 = vmul.f32 1.0, %v2368
      %v2370 = vrcp.pop %v2363
      %v2371 = vmul.f32 1.0, %v2370
      %v2372 = vmul.f32 %v2237, %v2365
      %v2373 = vmul.f32 %v2239, %v2367
      %v2374 = vmul.f32 %v2241, %v2369
      %v2375 = vmul.f32 %v2243, %v2371
      %v2376 = vmul.f32 %v2372, %v2340
      %v2377 = vmul.f32 %v2373, %v2342
      %v2378 = vmul.f32 %v2374, %v2344
      %v2379 = vmul.f32 %v2375, %v2346
      %v2380 = vpack.c.bf16 %v2378, %v2376
      %v2381 = vpack.c.bf16 %v2379, %v2377
      %v2382 = vld [vmem:[%s15] sm:$0xf]
      %v2383 = vld [vmem:[%s15 + $0x4] sm:$0xf]
      %v2384 = vld [vmem:[%s15 + $0x8] sm:$0xf]
      %v2385 = vld [vmem:[%s15 + $0xc] sm:$0xf]
      %v2386 = vld [vmem:[%s15 + $0x10] sm:$0xf]
      %v2387 = vld [vmem:[%s15 + $0x14] sm:$0xf]
      %v2388 = vld [vmem:[%s15 + $0x18] sm:$0xf]
      %v2389 = vld [vmem:[%s15 + $0x1c] sm:$0xf]
      %v2390 = vld [vmem:[%s15 + $0x20] sm:$0xf]
      %v2391 = vld [vmem:[%s15 + $0x24] sm:$0xf]
      %v2392 = vld [vmem:[%s15 + $0x28] sm:$0xf]
      %v2393 = vld [vmem:[%s15 + $0x2c] sm:$0xf]
      %v2394 = vld [vmem:[%s15 + $0x30] sm:$0xf]
      %v2395 = vld [vmem:[%s15 + $0x34] sm:$0xf]
      %v2396 = vld [vmem:[%s15 + $0x38] sm:$0xf]
      %v2397 = vld [vmem:[%s15 + $0x3c] sm:$0xf]
      %v2398 = vld [vmem:[%s15 + $0x40] sm:$0xf]
      %v2399 = vld [vmem:[%s15 + $0x44] sm:$0xf]
      %v2400 = vld [vmem:[%s15 + $0x48] sm:$0xf]
      %v2401 = vld [vmem:[%s15 + $0x4c] sm:$0xf]
      %v2402 = vld [vmem:[%s15 + $0x50] sm:$0xf]
      %v2403 = vld [vmem:[%s15 + $0x54] sm:$0xf]
      %v2404 = vld [vmem:[%s15 + $0x58] sm:$0xf]
      %v2405 = vld [vmem:[%s15 + $0x5c] sm:$0xf]
      %v2406 = vld [vmem:[%s15 + $0x60] sm:$0xf]
      %v2407 = vld [vmem:[%s15 + $0x64] sm:$0xf]
      %v2408 = vld [vmem:[%s15 + $0x68] sm:$0xf]
      %v2409 = vld [vmem:[%s15 + $0x6c] sm:$0xf]
      %v2410 = vld [vmem:[%s15 + $0x70] sm:$0xf]
      %v2411 = vld [vmem:[%s15 + $0x74] sm:$0xf]
      %v2412 = vld [vmem:[%s15 + $0x78] sm:$0xf]
      %v2413 = vld [vmem:[%s15 + $0x7c] sm:$0xf]
      %v2414 = vld [vmem:[%s16] sm:$0x1]
      %v2416 = vlaneseq
      %v2417 = vshrl.u32 %v2416, 7
      %v2418 = vsub.s32 0, %v2417
      %v2419 = vrot.slane %v2414, %v2418
      %v2453 = vunpack.c.l.b16 %v2382
      %v2454 = vunpack.c.l.b16 %v2383
      %v2455 = vunpack.c.l.b16 %v2384
      %v2456 = vunpack.c.l.b16 %v2385
      %v2457 = vunpack.c.l.b16 %v2386
      %v2458 = vunpack.c.l.b16 %v2387
      %v2459 = vunpack.c.l.b16 %v2388
      %v2460 = vunpack.c.l.b16 %v2389
      %v2461 = vunpack.c.l.b16 %v2390
      %v2462 = vunpack.c.l.b16 %v2391
      %v2463 = vunpack.c.l.b16 %v2392
      %v2464 = vunpack.c.l.b16 %v2393
      %v2465 = vunpack.c.l.b16 %v2394
      %v2466 = vunpack.c.l.b16 %v2395
      %v2467 = vunpack.c.l.b16 %v2396
      %v2468 = vunpack.c.l.b16 %v2397
      %v2469 = vunpack.c.l.b16 %v2398
      %v2470 = vunpack.c.l.b16 %v2399
      %v2471 = vunpack.c.l.b16 %v2400
      %v2472 = vunpack.c.l.b16 %v2401
      %v2473 = vunpack.c.l.b16 %v2402
      %v2474 = vunpack.c.l.b16 %v2403
      %v2475 = vunpack.c.l.b16 %v2404
      %v2476 = vunpack.c.l.b16 %v2405
      %v2477 = vunpack.c.l.b16 %v2406
      %v2478 = vunpack.c.l.b16 %v2407
      %v2479 = vunpack.c.l.b16 %v2408
      %v2480 = vunpack.c.l.b16 %v2409
      %v2481 = vunpack.c.l.b16 %v2410
      %v2482 = vunpack.c.l.b16 %v2411
      %v2483 = vunpack.c.l.b16 %v2412
      %v2484 = vunpack.c.l.b16 %v2413
      %v2485 = vpack.c.b16 %v2454, %v2453
      %v2486 = vpack.c.b16 %v2456, %v2455
      %v2487 = vpack.c.b16 %v2458, %v2457
      %v2488 = vpack.c.b16 %v2460, %v2459
      %v2489 = vpack.c.b16 %v2462, %v2461
      %v2490 = vpack.c.b16 %v2464, %v2463
      %v2491 = vpack.c.b16 %v2466, %v2465
      %v2492 = vpack.c.b16 %v2468, %v2467
      %v2493 = vpack.c.b16 %v2470, %v2469
      %v2494 = vpack.c.b16 %v2472, %v2471
      %v2495 = vpack.c.b16 %v2474, %v2473
      %v2496 = vpack.c.b16 %v2476, %v2475
      %v2497 = vpack.c.b16 %v2478, %v2477
      %v2498 = vpack.c.b16 %v2480, %v2479
      %v2499 = vpack.c.b16 %v2482, %v2481
      %v2500 = vpack.c.b16 %v2484, %v2483
      %2517 = vmatprep.subr.bf16.mxu0 0
      %2518 = vmatpush1.bf16.msra.mxu0 %v2492
      %2519 = vmatprep.subr.bf16.mxu0 0
      %2520 = vmatpush1.bf16.msra.mxu0 %v2491
      %2521 = vmatprep.subr.bf16.mxu0 0
      %2522 = vmatpush1.bf16.msra.mxu0 %v2490
      %2523 = vmatprep.subr.bf16.mxu0 0
      %2524 = vmatpush1.bf16.msra.mxu0 %v2489
      %2525 = vmatprep.subr.bf16.mxu0 0
      %2526 = vmatpush1.bf16.msra.mxu0 %v2488
      %2527 = vmatprep.subr.bf16.mxu0 0
      %2528 = vmatpush1.bf16.msra.mxu0 %v2487
      %2529 = vmatprep.subr.bf16.mxu0 0
      %2530 = vmatpush1.bf16.msra.mxu0 %v2486
      %2531 = vmatprep.subr.bf16.mxu0 0
      %2532 = vmatpush1.bf16.msra.mxu0 %v2485
      %2533 = vmatprep.subr.bf16.mxu0 0
      %2534 = vmatpush2.bf16.msra.mxu0 %v2500
      %2535 = vmatprep.subr.bf16.mxu0 0
      %2536 = vmatpush2.bf16.msra.mxu0 %v2499
      %2537 = vmatprep.subr.bf16.mxu0 0
      %2538 = vmatpush2.bf16.msra.mxu0 %v2498
      %2539 = vmatprep.subr.bf16.mxu0 0
      %2540 = vmatpush2.bf16.msra.mxu0 %v2497
      %2541 = vmatprep.subr.bf16.mxu0 0
      %2542 = vmatpush2.bf16.msra.mxu0 %v2496
      %2543 = vmatprep.subr.bf16.mxu0 0
      %2544 = vmatpush2.bf16.msra.mxu0 %v2495
      %2545 = vmatprep.subr.bf16.mxu0 0
      %2546 = vmatpush2.bf16.msra.mxu0 %v2494
      %2547 = vmatprep.subr.bf16.mxu0 0
      %2548 = vmatpush2.bf16.msra.mxu0 %v2493
      %2549 = vmatprep.mubr.bf16.mxu0 %v2381
      %2550 = vmatmul.mubr.bf16.gmra.mxu0 %v2380
      %v2551 = vpop.f32.mrf.mxu0
      %v2552 = vadd.f32 %v2419, %v2551
      %v2553 = vpop.f32.mrf.mxu0
      %v2554 = vpop.f32.mrf.mxu0
      %v2555 = vadd.f32 %v2419, %v2554
      %v2556 = vpop.f32.mrf.mxu0
      %2557 = vdwg.mxu0
      %v2558 = vadd.f32 %v2111, %v2552
      %v2559 = vadd.f32 %v2112, %v2555
      %v2560 = vpack.c.bf16 %v2559, %v2558
      %v2562 = vunpack.c.l.b16 %v2560
      %v2563 = vunpack.c.h.b16 %v2560
      %v2564 = vpack.c.b16 %v2562, %v2562
      %v2565 = vpack.c.b16 %v2563, %v2563
      %vm2568 = vcmask 519168
      %2569 = vst.msk [vmem:[%s548] sm:$0xf] %vm2568, %v2564
      %2570 = vst.msk [vmem:[%s548 + $0x4] sm:$0xf] %vm2568, %v2565
      %p2571 = scmp.lt.s32.totalorder %s28, 1
      %s2572 = scalar_select %p2571, %s28, 1
      %s2573 = smul.addr %s2572, 2
      %s2574 = smul.addr %s2573, 4
      %s2575 = scalar_lea.vmem %s17, %s2574
      // Predicated region
      $region89: #{masked_predictor_forward.6} parent=87 // pred_check
        %p2576 = pneg %p408
      $region90: #{masked_predictor_forward.6} parent=87 // pred_check_branch
        %2578 = sbr.rel (%p2576) target = $region92
      $region91: #{masked_predictor_forward.6} parent=87 // pred_region
        _
      $region92: #{masked_predictor_forward.6} parent=87 // pred_fallthru
        _
    $region88: #{masked_predictor_forward.6} parent=5 // pred_fallthru
      _
    %p2579 = scmp.le.s32.totalorder 2, %s23
    // Predicated region
    $region93: #{masked_predictor_forward.6} parent=5 // pred_check
      %p2580 = pneg %p2579
    $region94: #{masked_predictor_forward.6} parent=5 // pred_check_branch
      %2582 = sbr.rel (%p2580) target = $region96
    $region95: #{masked_predictor_forward.6} parent=5 // pred_region
      %s2583 = ssub.s32 %s23, 2
      // Predicated region
      $region97: #{masked_predictor_forward.6} parent=95 // pred_check
        %p2584 = pneg %p414
      $region98: #{masked_predictor_forward.6} parent=95 // pred_check_branch
        %2586 = sbr.rel (%p2584) target = $region100
      $region99: #{masked_predictor_forward.6} parent=95 // pred_region
        %p2587 = scmp.lt.s32.totalorder %s29, 1
        %s2588 = scalar_select %p2587, %s29, 1
        %s2589 = smul.addr %s2588, 2
        %s2590 = smul.addr %s2589, 4
        %s2591 = scalar_lea.vmem %s17, %s2590
      $region100: #{masked_predictor_forward.6} parent=95 // pred_fallthru
        _
    $region96: #{masked_predictor_forward.6} parent=5 // pred_fallthru
      _
  $region6: #{masked_predictor_forward.6} parent=0 // loop_footer
    %s27 = sadd.s32 1, %s23
  $region7: #{masked_predictor_forward.6} parent=0 // loop_footer_branch
    %22 = sbr.rel target = $region3
  $region8: #{masked_predictor_forward.6} parent=0 // loop_exit
    _

</llo_original>
